<compile_context>
chip_gen: v7x
topology: tpu7x:2x2x1
jax: 0.10.0
libtpu: 0.0.40
codegen_flags: <defaults>
</compile_context>

<pallas_src>
import functools

import jax
import jax.numpy as jnp
from jax.experimental import pallas as pl
from jax.experimental.pallas import tpu as pltpu

LANE = 128          # TPU lane width
C_CONV = 128        # conv output channels
HIDDEN = 1024       # fc1 output features
FEAT = 2048         # 128 channels * 16 pooled positions
POOL = 4            # AdaptiveAvgPool2d((4, 4))
NPOS = POOL * POOL  # 16 spatial positions


def _round_up(x, m):
    return ((x + m - 1) // m) * m


# ---------------------------------------------------------------------------
# Fused Pallas kernel
# ---------------------------------------------------------------------------
def _aux_head_kernel(cin_pad,
                     xm_ref, cw_ref, shift_ref, w1_ref, b1_ref, w2_ref, b2_ref,
                     o_ref, feat_ref):
    """Fused InceptionAux head.

    Grid = (class_split, HIDDEN // th).
      axis 0 ("parallel"):  1 or 2 class slabs (2-way split only to engage both v7x TCs).
      axis 1 ("arbitrary"): fc1 hidden-dim tiles; fc2 partial sums accumulate into the
                            resident, lane-dense output block.
    xm_ref:   (N, 16*cin_pad) bf16, columns ordered (position, in_channel).
    feat_ref: (N, 2048) bf16 scratch, columns ordered (position, conv_channel) — matches
              the row permutation applied to fc1_w at init, so fc1 is one long-K dot.
    """
    h = pl.program_id(1)

    @pl.when(h == 0)
    def _():
        # 1x1 conv == per-position matmul over channels (BN scale pre-folded into cw),
        # folded BN shift, ReLU.  16 tiny dots write lane-aligned slabs of feat once.
        for p in range(NPOS):
            y = jnp.dot(xm_ref[:, p * cin_pad:(p + 1) * cin_pad], cw_ref[...],
                        preferred_element_type=jnp.float32)          # (N, 128) f32
            feat_ref[:, p * C_CONV:(p + 1) * C_CONV] = (
                jnp.maximum(y + shift_ref[...], 0.0).astype(jnp.bfloat16))
        o_ref[...] = jnp.zeros_like(o_ref)

    # fc1 for the current block of hidden units: one (N, 2048) x (2048, th) MXU dot.
    h1 = jnp.dot(feat_ref[...], w1_ref[...], preferred_element_type=jnp.float32)
    h1 = jnp.maximum(h1 + b1_ref[...], 0.0)
    # Dropout(p=0.7): eval-mode identity.

    # fc2 partial sum for this hidden block -> accumulate into the resident output.
    o_ref[...] += jnp.dot(h1.astype(jnp.bfloat16), w2_ref[...],
                          preferred_element_type=jnp.float32)

    @pl.when(h == pl.num_programs(1) - 1)
    def _():
        o_ref[...] += b2_ref[...]


def aux_head(xm, conv_w, bn_shift, fc1_w, fc1_b, fc2_w, fc2_b, *, n_batch, th=512):
    assert HIDDEN % th == 0
    cin_pad = conv_w.shape[0]
    nc_pad = fc2_w.shape[1]                     # padded class count (multiple of 128)
    # 2-way class split only when the class dim is big enough to keep blocks lane-dense;
    # it lets both v7x TensorCores run for the 1000-class head (no-op on v5e/v6e).
    class_split = 2 if nc_pad % 256 == 0 else 1
    nc_blk = nc_pad // class_split
    grid = (class_split, HIDDEN // th)
    kernel = functools.partial(_aux_head_kernel, cin_pad)
    return pl.pallas_call(
        kernel,
        out_shape=jax.ShapeDtypeStruct((n_batch, nc_pad), jnp.float32),
        grid_spec=pltpu.PrefetchScalarGridSpec(
            num_scalar_prefetch=0,
            grid=grid,
            in_specs=[
                pl.BlockSpec((n_batch, NPOS * cin_pad), lambda j, h: (0, 0)),  # pooled acts (bf16)
                pl.BlockSpec((cin_pad, C_CONV), lambda j, h: (0, 0)),          # conv w (scale folded)
                pl.BlockSpec((1, C_CONV), lambda j, h: (0, 0)),                # bn shift
                pl.BlockSpec((FEAT, th), lambda j, h: (0, h)),                 # fc1 w tile (2 MiB bf16)
                pl.BlockSpec((1, th), lambda j, h: (0, h)),                    # fc1 b tile
                pl.BlockSpec((th, nc_blk), lambda j, h: (h, j)),               # fc2 w tile
                pl.BlockSpec((1, nc_blk), lambda j, h: (0, j)),                # fc2 b tile
            ],
            out_specs=pl.BlockSpec((n_batch, nc_blk), lambda j, h: (0, j)),
            scratch_shapes=[pltpu.VMEM((n_batch, FEAT), jnp.bfloat16)],        # conv activations
        ),
        compiler_params=pltpu.CompilerParams(
            dimension_semantics=("parallel", "arbitrary")),
    )(xm, conv_w, bn_shift, fc1_w, fc1_b, fc2_w, fc2_b)


# ---------------------------------------------------------------------------
# Parameter init: fold BN scale into conv_w, fold torch.flatten permutation into
# fc1_w rows, pad channels/classes to lane multiples, cast weights to bf16.
# ---------------------------------------------------------------------------
def init_params(key, in_channels, num_classes):
    ks = jax.random.split(key, 7)
    eps = 1e-3
    cin_pad = _round_up(max(in_channels, LANE), LANE)
    nc_pad = _round_up(max(num_classes, LANE), LANE)

    # BasicConv2d: 1x1 conv (no bias) + BatchNorm2d (eval, running stats) + ReLU.
    conv_w = jax.random.normal(ks[0], (in_channels, C_CONV), jnp.float32) * 0.05
    gamma = 1.0 + 0.1 * jax.random.normal(ks[1], (C_CONV,), jnp.float32)
    beta = 0.1 * jax.random.normal(ks[2], (C_CONV,), jnp.float32)
    running_mean = jnp.zeros((C_CONV,), jnp.float32)
    running_var = jnp.ones((C_CONV,), jnp.float32)
    scale = gamma / jnp.sqrt(running_var + eps)
    shift = beta - running_mean * scale
    conv_w_eff = conv_w * scale[None, :]                              # fold BN scale
    conv_w_eff = jnp.pad(conv_w_eff, ((0, cin_pad - in_channels), (0, 0)))

    # fc1: torch weight (1024, 2048); torch flatten index f = c*16 + ph*4 + pw.
    w1_torch = jax.random.normal(ks[3], (HIDDEN, FEAT), jnp.float32) * 0.02
    w1_t = w1_torch.T                                                 # (2048, 1024), row = c*16 + p
    # Permute rows to (p*128 + c) so the kernel's (position, channel) feature columns
    # line up with torch.flatten(out, 1) without any runtime transpose.
    w1_perm = w1_t.reshape(C_CONV, NPOS, HIDDEN).transpose(1, 0, 2).reshape(FEAT, HIDDEN)
    b1 = 0.01 * jax.random.normal(ks[4], (HIDDEN,), jnp.float32)

    # fc2: torch weight (num_classes, 1024); pad classes to a lane multiple.
    w2_torch = jax.random.normal(ks[5], (num_classes, HIDDEN), jnp.float32) * 0.02
    b2 = 0.01 * jax.random.normal(ks[6], (num_classes,), jnp.float32)
    w2_pad = jnp.pad(w2_torch.T, ((0, 0), (0, nc_pad - num_classes)))
    b2_pad = jnp.pad(b2, (0, nc_pad - num_classes))

    return {
        "conv_w": conv_w_eff.astype(jnp.bfloat16),      # (cin_pad, 128)
        "bn_shift": shift.reshape(1, C_CONV),           # (1, 128) f32
        "fc1_w": w1_perm.astype(jnp.bfloat16),          # (2048, 1024), rows (p, c)-ordered
        "fc1_b": b1.reshape(1, HIDDEN),                 # (1, 1024) f32
        "fc2_w": w2_pad.astype(jnp.bfloat16),           # (1024, nc_pad)
        "fc2_b": b2_pad.reshape(1, nc_pad),             # (1, nc_pad) f32
    }


# ---------------------------------------------------------------------------
# AdaptiveAvgPool2d((4, 4)) — exact PyTorch semantics (uneven bins supported).
# ---------------------------------------------------------------------------
def _adaptive_avg_pool_4x4(x):
    n, c, h, w = x.shape

    def edges(size):
        return [((i * size) // POOL, ((i + 1) * size + POOL - 1) // POOL)
                for i in range(POOL)]

    rows, cols = edges(h), edges(w)
    out = jnp.stack(
        [jnp.stack(
            [x[:, :, r0:r1, c0:c1].mean(axis=(2, 3)) for (c0, c1) in cols], axis=-1)
         for (r0, r1) in rows], axis=-2)
    return out                                                         # (N, C, 4, 4)


# ---------------------------------------------------------------------------
# InceptionAux forward
# ---------------------------------------------------------------------------
def inception_aux_forward(x, params, num_classes):
    n, c, _, _ = x.shape
    xp = _adaptive_avg_pool_4x4(x)                                     # (N, C, 4, 4)
    # Channels-last, columns ordered (position, in_channel); pad channels to a lane
    # multiple and pre-cast to bf16 so the kernel streams half the bytes.
    xm = xp.transpose(0, 2, 3, 1)                                      # (N, 4, 4, C)
    cin_pad = params["conv_w"].shape[0]
    if cin_pad != c:
        xm = jnp.pad(xm, ((0, 0), (0, 0), (0, 0), (0, cin_pad - c)))
    xm = xm.reshape(n, NPOS * cin_pad).astype(jnp.bfloat16)

    out = aux_head(xm, params["conv_w"], params["bn_shift"],
                   params["fc1_w"], params["fc1_b"],
                   params["fc2_w"], params["fc2_b"], n_batch=n)        # (N, nc_pad)
    return out[:, :num_classes]


# ---------------------------------------------------------------------------
# Pure-JAX reference (same folded params), for a cheap numerical sanity check.
# ---------------------------------------------------------------------------
def _reference(x, params, num_classes):
    n, c, _, _ = x.shape
    xp = _adaptive_avg_pool_4x4(x)                                     # (N, C, 4, 4)
    cw = params["conv_w"].astype(jnp.float32)[:c]                      # (C, 128)
    y = jnp.einsum("nchw,cd->ndhw", xp, cw) + params["bn_shift"].reshape(1, C_CONV, 1, 1)
    y = jnp.maximum(y, 0.0)
    t = y.reshape(n, C_CONV * NPOS)                                    # torch.flatten order
    w1_perm = params["fc1_w"].astype(jnp.float32)
    w1_t = w1_perm.reshape(NPOS, C_CONV, HIDDEN).transpose(1, 0, 2).reshape(FEAT, HIDDEN)
    h1 = jnp.maximum(t @ w1_t + params["fc1_b"], 0.0)
    out = h1 @ params["fc2_w"].astype(jnp.float32) + params["fc2_b"]
    return out[:, :num_classes]


if __name__ == "__main__":
    key = jax.random.PRNGKey(0)
    kx, kp = jax.random.split(key)

    N, C, H, W = 2, 4, 16, 16
    num_classes = 10

    x = jax.random.normal(kx, (N, C, H, W), jnp.float32)
    params = init_params(kp, C, num_classes)

    out = inception_aux_forward(x, params, num_classes)
    out = jax.block_until_ready(out)
    assert out.shape == (N, num_classes), out.shape

    ref = jax.block_until_ready(_reference(x, params, num_classes))
    assert jnp.allclose(out, ref, atol=1e-2, rtol=1e-2), float(jnp.abs(out - ref).max())

    print("KERNEL_OK")
</pallas_src>

<mosaic_0001>
module attributes {stable_mosaic.version = 11 : i64} {
  func.func @_aux_head_kernel(%arg0: i32, %arg1: i32, %arg2: memref<2x2048xbf16, #tpu.memory_space<vmem>>, %arg3: memref<128x128xbf16, #tpu.memory_space<vmem>>, %arg4: memref<1x128xf32, #tpu.memory_space<vmem>>, %arg5: memref<2048x512xbf16, #tpu.memory_space<vmem>>, %arg6: memref<1x512xf32, #tpu.memory_space<vmem>>, %arg7: memref<512x128xbf16, #tpu.memory_space<vmem>>, %arg8: memref<1x128xf32, #tpu.memory_space<vmem>>, %arg9: memref<2x128xf32, #tpu.memory_space<vmem>>, %arg10: memref<2x2048xbf16, #tpu.memory_space<vmem>>) attributes {dimension_semantics = [#tpu.dimension_semantics<parallel>, #tpu.dimension_semantics<arbitrary>], iteration_bounds = array<i64: 1, 2>, scalar_prefetch = 0 : i64, scratch_operands = 1 : i64, tpu.core_type = #tpu.core_type<tc>, window_params = [{pipeline_mode = #tpu.pipeline_mode<synchronous>, transform_indices = @transform_0, window_bounds = array<i64: 2, 2048>}, {pipeline_mode = #tpu.pipeline_mode<synchronous>, transform_indices = @transform_1, window_bounds = array<i64: 128, 128>}, {pipeline_mode = #tpu.pipeline_mode<synchronous>, transform_indices = @transform_2, window_bounds = array<i64: 1, 128>}, {transform_indices = @transform_3, window_bounds = array<i64: 2048, 512>}, {transform_indices = @transform_4, window_bounds = array<i64: 1, 512>}, {transform_indices = @transform_5, window_bounds = array<i64: 512, 128>}, {transform_indices = @transform_6, window_bounds = array<i64: 1, 128>}, {transform_indices = @transform_7, window_bounds = array<i64: 2, 128>}]} {
    %c0_i32 = arith.constant 0 : i32
    %0 = arith.cmpi eq, %arg1, %c0_i32 : i32
    %1 = arith.extui %0 : i1 to i32
    %c0_i32_0 = arith.constant 0 : i32
    %2 = arith.cmpi ne, %1, %c0_i32_0 : i32
    scf.if %2 {
      %c0_15 = arith.constant 0 : index
      %c0_16 = arith.constant 0 : index
      %20 = vector.load %arg2[%c0_15, %c0_16] : memref<2x2048xbf16, #tpu.memory_space<vmem>>, vector<2x128xbf16>
      %c0_17 = arith.constant 0 : index
      %c0_18 = arith.constant 0 : index
      %21 = vector.load %arg3[%c0_17, %c0_18] : memref<128x128xbf16, #tpu.memory_space<vmem>>, vector<128x128xbf16>
      %cst_19 = arith.constant dense<0.000000e+00> : vector<2x128xf32>
      %22 = tpu.matmul %20, %21, %cst_19 {dimension_numbers = #tpu.dot_dimension_numbers<[1], [0], [0], [1], [0, 0, 1, 1], [], []>} : vector<2x128xbf16>, vector<128x128xbf16>, vector<2x128xf32> -> vector<2x128xf32>
      %c0_20 = arith.constant 0 : index
      %c0_21 = arith.constant 0 : index
      %23 = vector.load %arg4[%c0_20, %c0_21] : memref<1x128xf32, #tpu.memory_space<vmem>>, vector<1x128xf32>
      %24 = vector.broadcast %23 : vector<1x128xf32> to vector<2x128xf32>
      %25 = arith.addf %22, %24 : vector<2x128xf32>
      %cst_22 = arith.constant 0.000000e+00 : f32
      %26 = vector.broadcast %cst_22 : f32 to vector<2x128xf32>
      %27 = arith.maximumf %25, %26 : vector<2x128xf32>
      %28 = arith.truncf %27 : vector<2x128xf32> to vector<2x128xbf16>
      %c0_23 = arith.constant 0 : index
      %c0_24 = arith.constant 0 : index
      %29 = vector.load %arg10[%c0_23, %c0_24] : memref<2x2048xbf16, #tpu.memory_space<vmem>>, vector<2x128xbf16>
      tpu.vector_store %arg10[%c0_23, %c0_24], %28 {strides = array<i32>} : memref<2x2048xbf16, #tpu.memory_space<vmem>>, vector<2x128xbf16>,
      %c0_25 = arith.constant 0 : index
      %c128 = arith.constant 128 : index
      %30 = vector.load %arg2[%c0_25, %c128] : memref<2x2048xbf16, #tpu.memory_space<vmem>>, vector<2x128xbf16>
      %c0_26 = arith.constant 0 : index
      %c0_27 = arith.constant 0 : index
      %31 = vector.load %arg3[%c0_26, %c0_27] : memref<128x128xbf16, #tpu.memory_space<vmem>>, vector<128x128xbf16>
      %cst_28 = arith.constant dense<0.000000e+00> : vector<2x128xf32>
      %32 = tpu.matmul %30, %31, %cst_28 {dimension_numbers = #tpu.dot_dimension_numbers<[1], [0], [0], [1], [0, 0, 1, 1], [], []>} : vector<2x128xbf16>, vector<128x128xbf16>, vector<2x128xf32> -> vector<2x128xf32>
      %c0_29 = arith.constant 0 : index
      %c0_30 = arith.constant 0 : index
      %33 = vector.load %arg4[%c0_29, %c0_30] : memref<1x128xf32, #tpu.memory_space<vmem>>, vector<1x128xf32>
      %34 = vector.broadcast %33 : vector<1x128xf32> to vector<2x128xf32>
      %35 = arith.addf %32, %34 : vector<2x128xf32>
      %cst_31 = arith.constant 0.000000e+00 : f32
      %36 = vector.broadcast %cst_31 : f32 to vector<2x128xf32>
      %37 = arith.maximumf %35, %36 : vector<2x128xf32>
      %38 = arith.truncf %37 : vector<2x128xf32> to vector<2x128xbf16>
      %c0_32 = arith.constant 0 : index
      %c128_33 = arith.constant 128 : index
      %39 = vector.load %arg10[%c0_32, %c128_33] : memref<2x2048xbf16, #tpu.memory_space<vmem>>, vector<2x128xbf16>
      tpu.vector_store %arg10[%c0_32, %c128_33], %38 {strides = array<i32>} : memref<2x2048xbf16, #tpu.memory_space<vmem>>, vector<2x128xbf16>,
      %c0_34 = arith.constant 0 : index
      %c256 = arith.constant 256 : index
      %40 = vector.load %arg2[%c0_34, %c256] : memref<2x2048xbf16, #tpu.memory_space<vmem>>, vector<2x128xbf16>
      %c0_35 = arith.constant 0 : index
      %c0_36 = arith.constant 0 : index
      %41 = vector.load %arg3[%c0_35, %c0_36] : memref<128x128xbf16, #tpu.memory_space<vmem>>, vector<128x128xbf16>
      %cst_37 = arith.constant dense<0.000000e+00> : vector<2x128xf32>
      %42 = tpu.matmul %40, %41, %cst_37 {dimension_numbers = #tpu.dot_dimension_numbers<[1], [0], [0], [1], [0, 0, 1, 1], [], []>} : vector<2x128xbf16>, vector<128x128xbf16>, vector<2x128xf32> -> vector<2x128xf32>
      %c0_38 = arith.constant 0 : index
      %c0_39 = arith.constant 0 : index
      %43 = vector.load %arg4[%c0_38, %c0_39] : memref<1x128xf32, #tpu.memory_space<vmem>>, vector<1x128xf32>
      %44 = vector.broadcast %43 : vector<1x128xf32> to vector<2x128xf32>
      %45 = arith.addf %42, %44 : vector<2x128xf32>
      %cst_40 = arith.constant 0.000000e+00 : f32
      %46 = vector.broadcast %cst_40 : f32 to vector<2x128xf32>
      %47 = arith.maximumf %45, %46 : vector<2x128xf32>
      %48 = arith.truncf %47 : vector<2x128xf32> to vector<2x128xbf16>
      %c0_41 = arith.constant 0 : index
      %c256_42 = arith.constant 256 : index
      %49 = vector.load %arg10[%c0_41, %c256_42] : memref<2x2048xbf16, #tpu.memory_space<vmem>>, vector<2x128xbf16>
      tpu.vector_store %arg10[%c0_41, %c256_42], %48 {strides = array<i32>} : memref<2x2048xbf16, #tpu.memory_space<vmem>>, vector<2x128xbf16>,
      %c0_43 = arith.constant 0 : index
      %c384 = arith.constant 384 : index
      %50 = vector.load %arg2[%c0_43, %c384] : memref<2x2048xbf16, #tpu.memory_space<vmem>>, vector<2x128xbf16>
      %c0_44 = arith.constant 0 : index
      %c0_45 = arith.constant 0 : index
      %51 = vector.load %arg3[%c0_44, %c0_45] : memref<128x128xbf16, #tpu.memory_space<vmem>>, vector<128x128xbf16>
      %cst_46 = arith.constant dense<0.000000e+00> : vector<2x128xf32>
      %52 = tpu.matmul %50, %51, %cst_46 {dimension_numbers = #tpu.dot_dimension_numbers<[1], [0], [0], [1], [0, 0, 1, 1], [], []>} : vector<2x128xbf16>, vector<128x128xbf16>, vector<2x128xf32> -> vector<2x128xf32>
      %c0_47 = arith.constant 0 : index
      %c0_48 = arith.constant 0 : index
      %53 = vector.load %arg4[%c0_47, %c0_48] : memref<1x128xf32, #tpu.memory_space<vmem>>, vector<1x128xf32>
      %54 = vector.broadcast %53 : vector<1x128xf32> to vector<2x128xf32>
      %55 = arith.addf %52, %54 : vector<2x128xf32>
      %cst_49 = arith.constant 0.000000e+00 : f32
      %56 = vector.broadcast %cst_49 : f32 to vector<2x128xf32>
      %57 = arith.maximumf %55, %56 : vector<2x128xf32>
      %58 = arith.truncf %57 : vector<2x128xf32> to vector<2x128xbf16>
      %c0_50 = arith.constant 0 : index
      %c384_51 = arith.constant 384 : index
      %59 = vector.load %arg10[%c0_50, %c384_51] : memref<2x2048xbf16, #tpu.memory_space<vmem>>, vector<2x128xbf16>
      tpu.vector_store %arg10[%c0_50, %c384_51], %58 {strides = array<i32>} : memref<2x2048xbf16, #tpu.memory_space<vmem>>, vector<2x128xbf16>,
      %c0_52 = arith.constant 0 : index
      %c512 = arith.constant 512 : index
      %60 = vector.load %arg2[%c0_52, %c512] : memref<2x2048xbf16, #tpu.memory_space<vmem>>, vector<2x128xbf16>
      %c0_53 = arith.constant 0 : index
      %c0_54 = arith.constant 0 : index
      %61 = vector.load %arg3[%c0_53, %c0_54] : memref<128x128xbf16, #tpu.memory_space<vmem>>, vector<128x128xbf16>
      %cst_55 = arith.constant dense<0.000000e+00> : vector<2x128xf32>
      %62 = tpu.matmul %60, %61, %cst_55 {dimension_numbers = #tpu.dot_dimension_numbers<[1], [0], [0], [1], [0, 0, 1, 1], [], []>} : vector<2x128xbf16>, vector<128x128xbf16>, vector<2x128xf32> -> vector<2x128xf32>
      %c0_56 = arith.constant 0 : index
      %c0_57 = arith.constant 0 : index
      %63 = vector.load %arg4[%c0_56, %c0_57] : memref<1x128xf32, #tpu.memory_space<vmem>>, vector<1x128xf32>
      %64 = vector.broadcast %63 : vector<1x128xf32> to vector<2x128xf32>
      %65 = arith.addf %62, %64 : vector<2x128xf32>
      %cst_58 = arith.constant 0.000000e+00 : f32
      %66 = vector.broadcast %cst_58 : f32 to vector<2x128xf32>
      %67 = arith.maximumf %65, %66 : vector<2x128xf32>
      %68 = arith.truncf %67 : vector<2x128xf32> to vector<2x128xbf16>
      %c0_59 = arith.constant 0 : index
      %c512_60 = arith.constant 512 : index
      %69 = vector.load %arg10[%c0_59, %c512_60] : memref<2x2048xbf16, #tpu.memory_space<vmem>>, vector<2x128xbf16>
      tpu.vector_store %arg10[%c0_59, %c512_60], %68 {strides = array<i32>} : memref<2x2048xbf16, #tpu.memory_space<vmem>>, vector<2x128xbf16>,
      %c0_61 = arith.constant 0 : index
      %c640 = arith.constant 640 : index
      %70 = vector.load %arg2[%c0_61, %c640] : memref<2x2048xbf16, #tpu.memory_space<vmem>>, vector<2x128xbf16>
      %c0_62 = arith.constant 0 : index
      %c0_63 = arith.constant 0 : index
      %71 = vector.load %arg3[%c0_62, %c0_63] : memref<128x128xbf16, #tpu.memory_space<vmem>>, vector<128x128xbf16>
      %cst_64 = arith.constant dense<0.000000e+00> : vector<2x128xf32>
      %72 = tpu.matmul %70, %71, %cst_64 {dimension_numbers = #tpu.dot_dimension_numbers<[1], [0], [0], [1], [0, 0, 1, 1], [], []>} : vector<2x128xbf16>, vector<128x128xbf16>, vector<2x128xf32> -> vector<2x128xf32>
      %c0_65 = arith.constant 0 : index
      %c0_66 = arith.constant 0 : index
      %73 = vector.load %arg4[%c0_65, %c0_66] : memref<1x128xf32, #tpu.memory_space<vmem>>, vector<1x128xf32>
      %74 = vector.broadcast %73 : vector<1x128xf32> to vector<2x128xf32>
      %75 = arith.addf %72, %74 : vector<2x128xf32>
      %cst_67 = arith.constant 0.000000e+00 : f32
      %76 = vector.broadcast %cst_67 : f32 to vector<2x128xf32>
      %77 = arith.maximumf %75, %76 : vector<2x128xf32>
      %78 = arith.truncf %77 : vector<2x128xf32> to vector<2x128xbf16>
      %c0_68 = arith.constant 0 : index
      %c640_69 = arith.constant 640 : index
      %79 = vector.load %arg10[%c0_68, %c640_69] : memref<2x2048xbf16, #tpu.memory_space<vmem>>, vector<2x128xbf16>
      tpu.vector_store %arg10[%c0_68, %c640_69], %78 {strides = array<i32>} : memref<2x2048xbf16, #tpu.memory_space<vmem>>, vector<2x128xbf16>,
      %c0_70 = arith.constant 0 : index
      %c768 = arith.constant 768 : index
      %80 = vector.load %arg2[%c0_70, %c768] : memref<2x2048xbf16, #tpu.memory_space<vmem>>, vector<2x128xbf16>
      %c0_71 = arith.constant 0 : index
      %c0_72 = arith.constant 0 : index
      %81 = vector.load %arg3[%c0_71, %c0_72] : memref<128x128xbf16, #tpu.memory_space<vmem>>, vector<128x128xbf16>
      %cst_73 = arith.constant dense<0.000000e+00> : vector<2x128xf32>
      %82 = tpu.matmul %80, %81, %cst_73 {dimension_numbers = #tpu.dot_dimension_numbers<[1], [0], [0], [1], [0, 0, 1, 1], [], []>} : vector<2x128xbf16>, vector<128x128xbf16>, vector<2x128xf32> -> vector<2x128xf32>
      %c0_74 = arith.constant 0 : index
      %c0_75 = arith.constant 0 : index
      %83 = vector.load %arg4[%c0_74, %c0_75] : memref<1x128xf32, #tpu.memory_space<vmem>>, vector<1x128xf32>
      %84 = vector.broadcast %83 : vector<1x128xf32> to vector<2x128xf32>
      %85 = arith.addf %82, %84 : vector<2x128xf32>
      %cst_76 = arith.constant 0.000000e+00 : f32
      %86 = vector.broadcast %cst_76 : f32 to vector<2x128xf32>
      %87 = arith.maximumf %85, %86 : vector<2x128xf32>
      %88 = arith.truncf %87 : vector<2x128xf32> to vector<2x128xbf16>
      %c0_77 = arith.constant 0 : index
      %c768_78 = arith.constant 768 : index
      %89 = vector.load %arg10[%c0_77, %c768_78] : memref<2x2048xbf16, #tpu.memory_space<vmem>>, vector<2x128xbf16>
      tpu.vector_store %arg10[%c0_77, %c768_78], %88 {strides = array<i32>} : memref<2x2048xbf16, #tpu.memory_space<vmem>>, vector<2x128xbf16>,
      %c0_79 = arith.constant 0 : index
      %c896 = arith.constant 896 : index
      %90 = vector.load %arg2[%c0_79, %c896] : memref<2x2048xbf16, #tpu.memory_space<vmem>>, vector<2x128xbf16>
      %c0_80 = arith.constant 0 : index
      %c0_81 = arith.constant 0 : index
      %91 = vector.load %arg3[%c0_80, %c0_81] : memref<128x128xbf16, #tpu.memory_space<vmem>>, vector<128x128xbf16>
      %cst_82 = arith.constant dense<0.000000e+00> : vector<2x128xf32>
      %92 = tpu.matmul %90, %91, %cst_82 {dimension_numbers = #tpu.dot_dimension_numbers<[1], [0], [0], [1], [0, 0, 1, 1], [], []>} : vector<2x128xbf16>, vector<128x128xbf16>, vector<2x128xf32> -> vector<2x128xf32>
      %c0_83 = arith.constant 0 : index
      %c0_84 = arith.constant 0 : index
      %93 = vector.load %arg4[%c0_83, %c0_84] : memref<1x128xf32, #tpu.memory_space<vmem>>, vector<1x128xf32>
      %94 = vector.broadcast %93 : vector<1x128xf32> to vector<2x128xf32>
      %95 = arith.addf %92, %94 : vector<2x128xf32>
      %cst_85 = arith.constant 0.000000e+00 : f32
      %96 = vector.broadcast %cst_85 : f32 to vector<2x128xf32>
      %97 = arith.maximumf %95, %96 : vector<2x128xf32>
      %98 = arith.truncf %97 : vector<2x128xf32> to vector<2x128xbf16>
      %c0_86 = arith.constant 0 : index
      %c896_87 = arith.constant 896 : index
      %99 = vector.load %arg10[%c0_86, %c896_87] : memref<2x2048xbf16, #tpu.memory_space<vmem>>, vector<2x128xbf16>
      tpu.vector_store %arg10[%c0_86, %c896_87], %98 {strides = array<i32>} : memref<2x2048xbf16, #tpu.memory_space<vmem>>, vector<2x128xbf16>,
      %c0_88 = arith.constant 0 : index
      %c1024 = arith.constant 1024 : index
      %100 = vector.load %arg2[%c0_88, %c1024] : memref<2x2048xbf16, #tpu.memory_space<vmem>>, vector<2x128xbf16>
      %c0_89 = arith.constant 0 : index
      %c0_90 = arith.constant 0 : index
      %101 = vector.load %arg3[%c0_89, %c0_90] : memref<128x128xbf16, #tpu.memory_space<vmem>>, vector<128x128xbf16>
      %cst_91 = arith.constant dense<0.000000e+00> : vector<2x128xf32>
      %102 = tpu.matmul %100, %101, %cst_91 {dimension_numbers = #tpu.dot_dimension_numbers<[1], [0], [0], [1], [0, 0, 1, 1], [], []>} : vector<2x128xbf16>, vector<128x128xbf16>, vector<2x128xf32> -> vector<2x128xf32>
      %c0_92 = arith.constant 0 : index
      %c0_93 = arith.constant 0 : index
      %103 = vector.load %arg4[%c0_92, %c0_93] : memref<1x128xf32, #tpu.memory_space<vmem>>, vector<1x128xf32>
      %104 = vector.broadcast %103 : vector<1x128xf32> to vector<2x128xf32>
      %105 = arith.addf %102, %104 : vector<2x128xf32>
      %cst_94 = arith.constant 0.000000e+00 : f32
      %106 = vector.broadcast %cst_94 : f32 to vector<2x128xf32>
      %107 = arith.maximumf %105, %106 : vector<2x128xf32>
      %108 = arith.truncf %107 : vector<2x128xf32> to vector<2x128xbf16>
      %c0_95 = arith.constant 0 : index
      %c1024_96 = arith.constant 1024 : index
      %109 = vector.load %arg10[%c0_95, %c1024_96] : memref<2x2048xbf16, #tpu.memory_space<vmem>>, vector<2x128xbf16>
      tpu.vector_store %arg10[%c0_95, %c1024_96], %108 {strides = array<i32>} : memref<2x2048xbf16, #tpu.memory_space<vmem>>, vector<2x128xbf16>,
      %c0_97 = arith.constant 0 : index
      %c1152 = arith.constant 1152 : index
      %110 = vector.load %arg2[%c0_97, %c1152] : memref<2x2048xbf16, #tpu.memory_space<vmem>>, vector<2x128xbf16>
      %c0_98 = arith.constant 0 : index
      %c0_99 = arith.constant 0 : index
      %111 = vector.load %arg3[%c0_98, %c0_99] : memref<128x128xbf16, #tpu.memory_space<vmem>>, vector<128x128xbf16>
      %cst_100 = arith.constant dense<0.000000e+00> : vector<2x128xf32>
      %112 = tpu.matmul %110, %111, %cst_100 {dimension_numbers = #tpu.dot_dimension_numbers<[1], [0], [0], [1], [0, 0, 1, 1], [], []>} : vector<2x128xbf16>, vector<128x128xbf16>, vector<2x128xf32> -> vector<2x128xf32>
      %c0_101 = arith.constant 0 : index
      %c0_102 = arith.constant 0 : index
      %113 = vector.load %arg4[%c0_101, %c0_102] : memref<1x128xf32, #tpu.memory_space<vmem>>, vector<1x128xf32>
      %114 = vector.broadcast %113 : vector<1x128xf32> to vector<2x128xf32>
      %115 = arith.addf %112, %114 : vector<2x128xf32>
      %cst_103 = arith.constant 0.000000e+00 : f32
      %116 = vector.broadcast %cst_103 : f32 to vector<2x128xf32>
      %117 = arith.maximumf %115, %116 : vector<2x128xf32>
      %118 = arith.truncf %117 : vector<2x128xf32> to vector<2x128xbf16>
      %c0_104 = arith.constant 0 : index
      %c1152_105 = arith.constant 1152 : index
      %119 = vector.load %arg10[%c0_104, %c1152_105] : memref<2x2048xbf16, #tpu.memory_space<vmem>>, vector<2x128xbf16>
      tpu.vector_store %arg10[%c0_104, %c1152_105], %118 {strides = array<i32>} : memref<2x2048xbf16, #tpu.memory_space<vmem>>, vector<2x128xbf16>,
      %c0_106 = arith.constant 0 : index
      %c1280 = arith.constant 1280 : index
      %120 = vector.load %arg2[%c0_106, %c1280] : memref<2x2048xbf16, #tpu.memory_space<vmem>>, vector<2x128xbf16>
      %c0_107 = arith.constant 0 : index
      %c0_108 = arith.constant 0 : index
      %121 = vector.load %arg3[%c0_107, %c0_108] : memref<128x128xbf16, #tpu.memory_space<vmem>>, vector<128x128xbf16>
      %cst_109 = arith.constant dense<0.000000e+00> : vector<2x128xf32>
      %122 = tpu.matmul %120, %121, %cst_109 {dimension_numbers = #tpu.dot_dimension_numbers<[1], [0], [0], [1], [0, 0, 1, 1], [], []>} : vector<2x128xbf16>, vector<128x128xbf16>, vector<2x128xf32> -> vector<2x128xf32>
      %c0_110 = arith.constant 0 : index
      %c0_111 = arith.constant 0 : index
      %123 = vector.load %arg4[%c0_110, %c0_111] : memref<1x128xf32, #tpu.memory_space<vmem>>, vector<1x128xf32>
      %124 = vector.broadcast %123 : vector<1x128xf32> to vector<2x128xf32>
      %125 = arith.addf %122, %124 : vector<2x128xf32>
      %cst_112 = arith.constant 0.000000e+00 : f32
      %126 = vector.broadcast %cst_112 : f32 to vector<2x128xf32>
      %127 = arith.maximumf %125, %126 : vector<2x128xf32>
      %128 = arith.truncf %127 : vector<2x128xf32> to vector<2x128xbf16>
      %c0_113 = arith.constant 0 : index
      %c1280_114 = arith.constant 1280 : index
      %129 = vector.load %arg10[%c0_113, %c1280_114] : memref<2x2048xbf16, #tpu.memory_space<vmem>>, vector<2x128xbf16>
      tpu.vector_store %arg10[%c0_113, %c1280_114], %128 {strides = array<i32>} : memref<2x2048xbf16, #tpu.memory_space<vmem>>, vector<2x128xbf16>,
      %c0_115 = arith.constant 0 : index
      %c1408 = arith.constant 1408 : index
      %130 = vector.load %arg2[%c0_115, %c1408] : memref<2x2048xbf16, #tpu.memory_space<vmem>>, vector<2x128xbf16>
      %c0_116 = arith.constant 0 : index
      %c0_117 = arith.constant 0 : index
      %131 = vector.load %arg3[%c0_116, %c0_117] : memref<128x128xbf16, #tpu.memory_space<vmem>>, vector<128x128xbf16>
      %cst_118 = arith.constant dense<0.000000e+00> : vector<2x128xf32>
      %132 = tpu.matmul %130, %131, %cst_118 {dimension_numbers = #tpu.dot_dimension_numbers<[1], [0], [0], [1], [0, 0, 1, 1], [], []>} : vector<2x128xbf16>, vector<128x128xbf16>, vector<2x128xf32> -> vector<2x128xf32>
      %c0_119 = arith.constant 0 : index
      %c0_120 = arith.constant 0 : index
      %133 = vector.load %arg4[%c0_119, %c0_120] : memref<1x128xf32, #tpu.memory_space<vmem>>, vector<1x128xf32>
      %134 = vector.broadcast %133 : vector<1x128xf32> to vector<2x128xf32>
      %135 = arith.addf %132, %134 : vector<2x128xf32>
      %cst_121 = arith.constant 0.000000e+00 : f32
      %136 = vector.broadcast %cst_121 : f32 to vector<2x128xf32>
      %137 = arith.maximumf %135, %136 : vector<2x128xf32>
      %138 = arith.truncf %137 : vector<2x128xf32> to vector<2x128xbf16>
      %c0_122 = arith.constant 0 : index
      %c1408_123 = arith.constant 1408 : index
      %139 = vector.load %arg10[%c0_122, %c1408_123] : memref<2x2048xbf16, #tpu.memory_space<vmem>>, vector<2x128xbf16>
      tpu.vector_store %arg10[%c0_122, %c1408_123], %138 {strides = array<i32>} : memref<2x2048xbf16, #tpu.memory_space<vmem>>, vector<2x128xbf16>,
      %c0_124 = arith.constant 0 : index
      %c1536 = arith.constant 1536 : index
      %140 = vector.load %arg2[%c0_124, %c1536] : memref<2x2048xbf16, #tpu.memory_space<vmem>>, vector<2x128xbf16>
      %c0_125 = arith.constant 0 : index
      %c0_126 = arith.constant 0 : index
      %141 = vector.load %arg3[%c0_125, %c0_126] : memref<128x128xbf16, #tpu.memory_space<vmem>>, vector<128x128xbf16>
      %cst_127 = arith.constant dense<0.000000e+00> : vector<2x128xf32>
      %142 = tpu.matmul %140, %141, %cst_127 {dimension_numbers = #tpu.dot_dimension_numbers<[1], [0], [0], [1], [0, 0, 1, 1], [], []>} : vector<2x128xbf16>, vector<128x128xbf16>, vector<2x128xf32> -> vector<2x128xf32>
      %c0_128 = arith.constant 0 : index
      %c0_129 = arith.constant 0 : index
      %143 = vector.load %arg4[%c0_128, %c0_129] : memref<1x128xf32, #tpu.memory_space<vmem>>, vector<1x128xf32>
      %144 = vector.broadcast %143 : vector<1x128xf32> to vector<2x128xf32>
      %145 = arith.addf %142, %144 : vector<2x128xf32>
      %cst_130 = arith.constant 0.000000e+00 : f32
      %146 = vector.broadcast %cst_130 : f32 to vector<2x128xf32>
      %147 = arith.maximumf %145, %146 : vector<2x128xf32>
      %148 = arith.truncf %147 : vector<2x128xf32> to vector<2x128xbf16>
      %c0_131 = arith.constant 0 : index
      %c1536_132 = arith.constant 1536 : index
      %149 = vector.load %arg10[%c0_131, %c1536_132] : memref<2x2048xbf16, #tpu.memory_space<vmem>>, vector<2x128xbf16>
      tpu.vector_store %arg10[%c0_131, %c1536_132], %148 {strides = array<i32>} : memref<2x2048xbf16, #tpu.memory_space<vmem>>, vector<2x128xbf16>,
      %c0_133 = arith.constant 0 : index
      %c1664 = arith.constant 1664 : index
      %150 = vector.load %arg2[%c0_133, %c1664] : memref<2x2048xbf16, #tpu.memory_space<vmem>>, vector<2x128xbf16>
      %c0_134 = arith.constant 0 : index
      %c0_135 = arith.constant 0 : index
      %151 = vector.load %arg3[%c0_134, %c0_135] : memref<128x128xbf16, #tpu.memory_space<vmem>>, vector<128x128xbf16>
      %cst_136 = arith.constant dense<0.000000e+00> : vector<2x128xf32>
      %152 = tpu.matmul %150, %151, %cst_136 {dimension_numbers = #tpu.dot_dimension_numbers<[1], [0], [0], [1], [0, 0, 1, 1], [], []>} : vector<2x128xbf16>, vector<128x128xbf16>, vector<2x128xf32> -> vector<2x128xf32>
      %c0_137 = arith.constant 0 : index
      %c0_138 = arith.constant 0 : index
      %153 = vector.load %arg4[%c0_137, %c0_138] : memref<1x128xf32, #tpu.memory_space<vmem>>, vector<1x128xf32>
      %154 = vector.broadcast %153 : vector<1x128xf32> to vector<2x128xf32>
      %155 = arith.addf %152, %154 : vector<2x128xf32>
      %cst_139 = arith.constant 0.000000e+00 : f32
      %156 = vector.broadcast %cst_139 : f32 to vector<2x128xf32>
      %157 = arith.maximumf %155, %156 : vector<2x128xf32>
      %158 = arith.truncf %157 : vector<2x128xf32> to vector<2x128xbf16>
      %c0_140 = arith.constant 0 : index
      %c1664_141 = arith.constant 1664 : index
      %159 = vector.load %arg10[%c0_140, %c1664_141] : memref<2x2048xbf16, #tpu.memory_space<vmem>>, vector<2x128xbf16>
      tpu.vector_store %arg10[%c0_140, %c1664_141], %158 {strides = array<i32>} : memref<2x2048xbf16, #tpu.memory_space<vmem>>, vector<2x128xbf16>,
      %c0_142 = arith.constant 0 : index
      %c1792 = arith.constant 1792 : index
      %160 = vector.load %arg2[%c0_142, %c1792] : memref<2x2048xbf16, #tpu.memory_space<vmem>>, vector<2x128xbf16>
      %c0_143 = arith.constant 0 : index
      %c0_144 = arith.constant 0 : index
      %161 = vector.load %arg3[%c0_143, %c0_144] : memref<128x128xbf16, #tpu.memory_space<vmem>>, vector<128x128xbf16>
      %cst_145 = arith.constant dense<0.000000e+00> : vector<2x128xf32>
      %162 = tpu.matmul %160, %161, %cst_145 {dimension_numbers = #tpu.dot_dimension_numbers<[1], [0], [0], [1], [0, 0, 1, 1], [], []>} : vector<2x128xbf16>, vector<128x128xbf16>, vector<2x128xf32> -> vector<2x128xf32>
      %c0_146 = arith.constant 0 : index
      %c0_147 = arith.constant 0 : index
      %163 = vector.load %arg4[%c0_146, %c0_147] : memref<1x128xf32, #tpu.memory_space<vmem>>, vector<1x128xf32>
      %164 = vector.broadcast %163 : vector<1x128xf32> to vector<2x128xf32>
      %165 = arith.addf %162, %164 : vector<2x128xf32>
      %cst_148 = arith.constant 0.000000e+00 : f32
      %166 = vector.broadcast %cst_148 : f32 to vector<2x128xf32>
      %167 = arith.maximumf %165, %166 : vector<2x128xf32>
      %168 = arith.truncf %167 : vector<2x128xf32> to vector<2x128xbf16>
      %c0_149 = arith.constant 0 : index
      %c1792_150 = arith.constant 1792 : index
      %169 = vector.load %arg10[%c0_149, %c1792_150] : memref<2x2048xbf16, #tpu.memory_space<vmem>>, vector<2x128xbf16>
      tpu.vector_store %arg10[%c0_149, %c1792_150], %168 {strides = array<i32>} : memref<2x2048xbf16, #tpu.memory_space<vmem>>, vector<2x128xbf16>,
      %c0_151 = arith.constant 0 : index
      %c1920 = arith.constant 1920 : index
      %170 = vector.load %arg2[%c0_151, %c1920] : memref<2x2048xbf16, #tpu.memory_space<vmem>>, vector<2x128xbf16>
      %c0_152 = arith.constant 0 : index
      %c0_153 = arith.constant 0 : index
      %171 = vector.load %arg3[%c0_152, %c0_153] : memref<128x128xbf16, #tpu.memory_space<vmem>>, vector<128x128xbf16>
      %cst_154 = arith.constant dense<0.000000e+00> : vector<2x128xf32>
      %172 = tpu.matmul %170, %171, %cst_154 {dimension_numbers = #tpu.dot_dimension_numbers<[1], [0], [0], [1], [0, 0, 1, 1], [], []>} : vector<2x128xbf16>, vector<128x128xbf16>, vector<2x128xf32> -> vector<2x128xf32>
      %c0_155 = arith.constant 0 : index
      %c0_156 = arith.constant 0 : index
      %173 = vector.load %arg4[%c0_155, %c0_156] : memref<1x128xf32, #tpu.memory_space<vmem>>, vector<1x128xf32>
      %174 = vector.broadcast %173 : vector<1x128xf32> to vector<2x128xf32>
      %175 = arith.addf %172, %174 : vector<2x128xf32>
      %cst_157 = arith.constant 0.000000e+00 : f32
      %176 = vector.broadcast %cst_157 : f32 to vector<2x128xf32>
      %177 = arith.maximumf %175, %176 : vector<2x128xf32>
      %178 = arith.truncf %177 : vector<2x128xf32> to vector<2x128xbf16>
      %c0_158 = arith.constant 0 : index
      %c1920_159 = arith.constant 1920 : index
      %179 = vector.load %arg10[%c0_158, %c1920_159] : memref<2x2048xbf16, #tpu.memory_space<vmem>>, vector<2x128xbf16>
      tpu.vector_store %arg10[%c0_158, %c1920_159], %178 {strides = array<i32>} : memref<2x2048xbf16, #tpu.memory_space<vmem>>, vector<2x128xbf16>,
      %cst_160 = arith.constant 0.000000e+00 : f32
      %180 = vector.broadcast %cst_160 : f32 to vector<2x128xf32>
      %c0_161 = arith.constant 0 : index
      %c0_162 = arith.constant 0 : index
      %181 = vector.load %arg9[%c0_161, %c0_162] : memref<2x128xf32, #tpu.memory_space<vmem>>, vector<2x128xf32>
      tpu.vector_store %arg9[%c0_161, %c0_162], %180 {strides = array<i32>} : memref<2x128xf32, #tpu.memory_space<vmem>>, vector<2x128xf32>,
    } else {
    }
    %c0 = arith.constant 0 : index
    %c0_1 = arith.constant 0 : index
    %3 = vector.load %arg10[%c0, %c0_1] : memref<2x2048xbf16, #tpu.memory_space<vmem>>, vector<2x2048xbf16>
    %c0_2 = arith.constant 0 : index
    %c0_3 = arith.constant 0 : index
    %4 = vector.load %arg5[%c0_2, %c0_3] : memref<2048x512xbf16, #tpu.memory_space<vmem>>, vector<2048x512xbf16>
    %cst = arith.constant dense<0.000000e+00> : vector<2x512xf32>
    %5 = tpu.matmul %3, %4, %cst {dimension_numbers = #tpu.dot_dimension_numbers<[1], [0], [0], [1], [0, 0, 1, 1], [], []>} : vector<2x2048xbf16>, vector<2048x512xbf16>, vector<2x512xf32> -> vector<2x512xf32>
    %c0_4 = arith.constant 0 : index
    %c0_5 = arith.constant 0 : index
    %6 = vector.load %arg6[%c0_4, %c0_5] : memref<1x512xf32, #tpu.memory_space<vmem>>, vector<1x512xf32>
    %7 = vector.broadcast %6 : vector<1x512xf32> to vector<2x512xf32>
    %8 = arith.addf %5, %7 : vector<2x512xf32>
    %cst_6 = arith.constant 0.000000e+00 : f32
    %9 = vector.broadcast %cst_6 : f32 to vector<2x512xf32>
    %10 = arith.maximumf %8, %9 : vector<2x512xf32>
    %c0_7 = arith.constant 0 : index
    %c0_8 = arith.constant 0 : index
    %11 = vector.load %arg9[%c0_7, %c0_8] : memref<2x128xf32, #tpu.memory_space<vmem>>, vector<2x128xf32>
    %12 = arith.truncf %10 : vector<2x512xf32> to vector<2x512xbf16>
    %c0_9 = arith.constant 0 : index
    %c0_10 = arith.constant 0 : index
    %13 = vector.load %arg7[%c0_9, %c0_10] : memref<512x128xbf16, #tpu.memory_space<vmem>>, vector<512x128xbf16>
    %cst_11 = arith.constant dense<0.000000e+00> : vector<2x128xf32>
    %14 = tpu.matmul %12, %13, %cst_11 {dimension_numbers = #tpu.dot_dimension_numbers<[1], [0], [0], [1], [0, 0, 1, 1], [], []>} : vector<2x512xbf16>, vector<512x128xbf16>, vector<2x128xf32> -> vector<2x128xf32>
    %15 = arith.addf %11, %14 : vector<2x128xf32>
    %c0_12 = arith.constant 0 : index
    %c0_13 = arith.constant 0 : index
    %16 = vector.load %arg9[%c0_12, %c0_13] : memref<2x128xf32, #tpu.memory_space<vmem>>, vector<2x128xf32>
    tpu.vector_store %arg9[%c0_12, %c0_13], %15 {strides = array<i32>} : memref<2x128xf32, #tpu.memory_space<vmem>>, vector<2x128xf32>,
    %c1_i32 = arith.constant 1 : i32
    %17 = arith.cmpi eq, %arg1, %c1_i32 : i32
    %18 = arith.extui %17 : i1 to i32
    %c0_i32_14 = arith.constant 0 : i32
    %19 = arith.cmpi ne, %18, %c0_i32_14 : i32
    scf.if %19 {
      %c0_15 = arith.constant 0 : index
      %c0_16 = arith.constant 0 : index
      %20 = vector.load %arg9[%c0_15, %c0_16] : memref<2x128xf32, #tpu.memory_space<vmem>>, vector<2x128xf32>
      %c0_17 = arith.constant 0 : index
      %c0_18 = arith.constant 0 : index
      %21 = vector.load %arg8[%c0_17, %c0_18] : memref<1x128xf32, #tpu.memory_space<vmem>>, vector<1x128xf32>
      %22 = vector.broadcast %21 : vector<1x128xf32> to vector<2x128xf32>
      %23 = arith.addf %20, %22 : vector<2x128xf32>
      %c0_19 = arith.constant 0 : index
      %c0_20 = arith.constant 0 : index
      %24 = vector.load %arg9[%c0_19, %c0_20] : memref<2x128xf32, #tpu.memory_space<vmem>>, vector<2x128xf32>
      tpu.vector_store %arg9[%c0_19, %c0_20], %23 {strides = array<i32>} : memref<2x128xf32, #tpu.memory_space<vmem>>, vector<2x128xf32>,
    } else {
    }
    return
  }
  func.func @transform_0(%arg0: i32, %arg1: i32) -> (i32, i32) {
    %c0_i32 = arith.constant 0 : i32
    %c0_i32_0 = arith.constant 0 : i32
    %c0_i32_1 = arith.constant 0 : i32
    return %c0_i32, %c0_i32_0 : i32, i32
  }
  func.func @transform_1(%arg0: i32, %arg1: i32) -> (i32, i32) {
    %c0_i32 = arith.constant 0 : i32
    %c0_i32_0 = arith.constant 0 : i32
    %c0_i32_1 = arith.constant 0 : i32
    return %c0_i32, %c0_i32_0 : i32, i32
  }
  func.func @transform_2(%arg0: i32, %arg1: i32) -> (i32, i32) {
    %c0_i32 = arith.constant 0 : i32
    %c0_i32_0 = arith.constant 0 : i32
    %c0_i32_1 = arith.constant 0 : i32
    return %c0_i32, %c0_i32_0 : i32, i32
  }
  func.func @transform_3(%arg0: i32, %arg1: i32) -> (i32, i32) {
    %c0_i32 = arith.constant 0 : i32
    %c0_i32_0 = arith.constant 0 : i32
    return %c0_i32, %arg1 : i32, i32
  }
  func.func @transform_4(%arg0: i32, %arg1: i32) -> (i32, i32) {
    %c0_i32 = arith.constant 0 : i32
    %c0_i32_0 = arith.constant 0 : i32
    return %c0_i32, %arg1 : i32, i32
  }
  func.func @transform_5(%arg0: i32, %arg1: i32) -> (i32, i32) {
    %c0_i32 = arith.constant 0 : i32
    return %arg1, %arg0 : i32, i32
  }
  func.func @transform_6(%arg0: i32, %arg1: i32) -> (i32, i32) {
    %c0_i32 = arith.constant 0 : i32
    %c0_i32_0 = arith.constant 0 : i32
    return %c0_i32, %arg0 : i32, i32
  }
  func.func @transform_7(%arg0: i32, %arg1: i32) -> (i32, i32) {
    %c0_i32 = arith.constant 0 : i32
    %c0_i32_0 = arith.constant 0 : i32
    return %c0_i32, %arg0 : i32, i32
  }
}

</mosaic_0001>

<llo_original>
// kernel: tpu_custom_call.1
$region0: #{tpu_custom_call.1}
  #allocation0 [shape = 'u32[]', space=smem, size = 0x4, offset = 0x4, fixed_abs, tag = 'smem constant byte address 0x4 - core index']
  #allocation1 [shape = 'u32[144,128]{1,0:T(1,128)}', space=vmem, size = 0x12000, scoped, tag = 'internal scratch']
  #allocation2 [shape = 'bf16[2,2048]{1,0:T(2,128)(2,1)}', space=vmem, size = 0x2000, scoped, tag = 'scratch operand']
  %s0 = inlined_call_operand.hbm [shape: bf16[2,2048], index: 0, kind: input, shape index: {}]
  %s1 = inlined_call_operand.hbm [shape: bf16[128,128], index: 1, kind: input, shape index: {}]
  %s2 = inlined_call_operand.hbm [shape: f32[1,128], index: 2, kind: input, shape index: {}]
  %s3 = inlined_call_operand.hbm [shape: bf16[2048,1024], index: 3, kind: input, shape index: {}]
  %s4 = inlined_call_operand.hbm [shape: f32[1,1024], index: 4, kind: input, shape index: {}]
  %s5 = inlined_call_operand.hbm [shape: bf16[1024,128], index: 5, kind: input, shape index: {}]
  %s6 = inlined_call_operand.hbm [shape: f32[1,128], index: 6, kind: input, shape index: {}]
  %s7 = inlined_call_operand.hbm [shape: f32[2,128], index: 7, kind: output, shape index: {}]
  %s8 = sld [smem:[#allocation0]]
  $region97: #{tpu_custom_call.1} parent=0
    _
  %s10 = ssub.s32 1, %s8
  %s11 = scalar_select 0, %s10, %s8
  $region1: #{tpu_custom_call.1} parent=0
    #allocation3 [shape = 'u8[8192]{0}', space=vmem, size = 0x2000, scoped, tag = 'input window, operand 0, single buffered']
    #allocation4 [shape = 's32[2]{0}', space=sflag, size = 0x8, scoped, tag = 'scoped memory for tpu_custom_call.1']
    #allocation5 [shape = 's32[2]{0}', space=sflag, size = 0x8, scoped, tag = 'scoped memory for tpu_custom_call.1']
    #allocation6 [shape = 'u8[32768]{0}', space=vmem, size = 0x8000, scoped, tag = 'input window, operand 1, single buffered']
    #allocation7 [shape = 's32[1]{0}', space=sflag, size = 0x4, scoped, tag = 'scoped memory for tpu_custom_call.1']
    #allocation8 [shape = 'u8[512]{0}', space=vmem, size = 0x400, scoped, tag = 'input window, operand 2, single buffered']
    #allocation9 [shape = 'u8[4194304]{0}', space=vmem, size = 0x400000, scoped, tag = 'input window, operand 3']
    #allocation10 [shape = 's32[2]{0}', space=sflag, size = 0x8, scoped, tag = 'scoped memory for tpu_custom_call.1']
    #allocation11 [shape = 'u8[4096]{0}', space=vmem, size = 0x1000, scoped, tag = 'input window, operand 4']
    #allocation12 [shape = 'u8[262144]{0}', space=vmem, size = 0x40000, scoped, tag = 'input window, operand 5']
    #allocation13 [shape = 's32[2]{0}', space=sflag, size = 0x8, scoped, tag = 'scoped memory for tpu_custom_call.1']
    #allocation14 [shape = 'u8[512]{0}', space=vmem, size = 0x400, scoped, tag = 'input window, operand 6, single buffered']
    #allocation15 [shape = 'u8[1024]{0}', space=vmem, size = 0x400, scoped, tag = 'output window, operand 0, single buffered']
    %12 = vsyncpa [#allocation4], 0
    %13 = vsyncpa [#allocation7], 0
    %14 = vsyncpa [#allocation10], 0
    %s15 = scalar_lea.sflag [#allocation10], 1
    %16 = vsyncpa %s15, 0
    %17 = vsyncpa [#allocation13], 0
    %s18 = scalar_lea.sflag [#allocation13], 1
    %19 = vsyncpa %s18, 0
    %20 = vsyncpa [#allocation5], 0
    loop: start=0, step=1, limit=4
    $region2: #{tpu_custom_call.1} parent=1 // loop_pre_header
      _
    $region3: #{tpu_custom_call.1} parent=1 // loop_header
      %s22 = sphi 0, %s26
      %p23 = scmp.ge.s32.totalorder %s22, 4
      %s29 = sphi 0, %s41
      %s30 = sphi 0, %s37
      %s31 = sphi 0, %s29
      %s32 = sphi 0, %s30
      %s33 = sphi 0, %s31
      %s34 = sphi 0, %s32
      %s42 = sphi 0, %s42
      %s44 = sphi 0, %s42
      %s45 = sphi 0, %s44
      %s59 = sphi 0, %s45
      %s63 = sphi 0, %s63
      %s65 = sphi 0, %s63
      %s66 = sphi 0, %s65
      %s80 = sphi 0, %s66
      %s84 = sphi 0, %s84
      %s86 = sphi 0, %s84
      %s87 = sphi 0, %s86
      %s101 = sphi 0, %s87
      %s107 = sphi 0, %s109
      %s110 = sphi 0, %s107
      %s111 = sphi 0, %s110
      %s127 = sphi 0, %s111
      %s133 = sphi 0, %s135
      %s136 = sphi 0, %s133
      %s137 = sphi 0, %s136
      %s153 = sphi 0, %s137
      %s161 = sphi 0, %s163
      %s164 = sphi 0, %s161
      %s165 = sphi 0, %s164
      %s181 = sphi 0, %s165
      %s187 = sphi 0, %s189
      %s190 = sphi 0, %s187
      %s191 = sphi 0, %s190
      %s207 = sphi 0, %s191
      %s213 = sphi 0, %s215
      %s216 = sphi 0, %s213
      %s217 = sphi 0, %s216
      %s233 = sphi 0, %s217
    $region4: #{tpu_custom_call.1} parent=1 // loop_header_branch
      %25 = sbr.rel (%p23) target = $region8
    $region5: #{tpu_custom_call.1} parent=1 // loop_body
      %s27 = ssub.s32 %s22, 1
      %s28 = ssub.s32 %s22, 2
      %s35 = sadd.s32 1, %s30
      %p36 = scmp.ge.s32.totalorder %s35, 2
      %s37 = scalar_select %p36, 0, %s35
      %s38 = sadd.s32 1, %s29
      %s39 = scalar_select %p36, %s38, %s29
      %p40 = scmp.ge.s32.totalorder %s39, 1
      %s41 = scalar_select %p40, 0, %s39
      %s43 = sadd.s32 %s42, 1
      %p46 = scmp.eq.s32.totalorder %s22, 1
      %p47 = scmp.ne.s32.totalorder %s42, %s44
      %p48 = scmp.eq.s32.totalorder %s22, 0
      %p49 = por %p47, %p48
      %p50 = scmp.ne.s32.totalorder %s42, %s44
      %p51 = scmp.eq.s32.totalorder %s27, 1
      %p52 = por %p50, %p51
      %p53 = scmp.ne.s32.totalorder %s44, %s45
      %p54 = scmp.eq.s32.totalorder %s27, 0
      %p55 = por %p53, %p54
      %p56 = scmp.ne.s32.totalorder %s44, %s45
      %p57 = scmp.eq.s32.totalorder %s28, 1
      %p58 = por %p56, %p57
      %p60 = scmp.ne.s32.totalorder %s45, %s59
      %p61 = scmp.eq.s32.totalorder %s28, 0
      %p62 = por %p60, %p61
      %s64 = sadd.s32 %s63, 1
      %p67 = scmp.eq.s32.totalorder %s22, 1
      %p68 = scmp.ne.s32.totalorder %s63, %s65
      %p69 = scmp.eq.s32.totalorder %s22, 0
      %p70 = por %p68, %p69
      %p71 = scmp.ne.s32.totalorder %s63, %s65
      %p72 = scmp.eq.s32.totalorder %s27, 1
      %p73 = por %p71, %p72
      %p74 = scmp.ne.s32.totalorder %s65, %s66
      %p75 = scmp.eq.s32.totalorder %s27, 0
      %p76 = por %p74, %p75
      %p77 = scmp.ne.s32.totalorder %s65, %s66
      %p78 = scmp.eq.s32.totalorder %s28, 1
      %p79 = por %p77, %p78
      %p81 = scmp.ne.s32.totalorder %s66, %s80
      %p82 = scmp.eq.s32.totalorder %s28, 0
      %p83 = por %p81, %p82
      %s85 = sadd.s32 %s84, 1
      %p88 = scmp.eq.s32.totalorder %s22, 1
      %p89 = scmp.ne.s32.totalorder %s84, %s86
      %p90 = scmp.eq.s32.totalorder %s22, 0
      %p91 = por %p89, %p90
      %p92 = scmp.ne.s32.totalorder %s84, %s86
      %p93 = scmp.eq.s32.totalorder %s27, 1
      %p94 = por %p92, %p93
      %p95 = scmp.ne.s32.totalorder %s86, %s87
      %p96 = scmp.eq.s32.totalorder %s27, 0
      %p97 = por %p95, %p96
      %p98 = scmp.ne.s32.totalorder %s86, %s87
      %p99 = scmp.eq.s32.totalorder %s28, 1
      %p100 = por %p98, %p99
      %p102 = scmp.ne.s32.totalorder %s87, %s101
      %p103 = scmp.eq.s32.totalorder %s28, 0
      %p104 = por %p102, %p103
      %s105 = ssub.s32 %s30, %s37
      %p106 = scmp.eq.s32.totalorder %s105, 0
      %s108 = sadd.s32 %s107, 1
      %s109 = scalar_select %p106, %s107, %s108
      %p112 = pneg %p106
      %p113 = scmp.eq.s32.totalorder %s22, 1
      %p114 = por %p112, %p113
      %p115 = scmp.ne.s32.totalorder %s107, %s110
      %p116 = scmp.eq.s32.totalorder %s22, 0
      %p117 = por %p115, %p116
      %p118 = scmp.ne.s32.totalorder %s107, %s110
      %p119 = scmp.eq.s32.totalorder %s27, 1
      %p120 = por %p118, %p119
      %p121 = scmp.ne.s32.totalorder %s110, %s111
      %p122 = scmp.eq.s32.totalorder %s27, 0
      %p123 = por %p121, %p122
      %p124 = scmp.ne.s32.totalorder %s110, %s111
      %p125 = scmp.eq.s32.totalorder %s28, 1
      %p126 = por %p124, %p125
      %p128 = scmp.ne.s32.totalorder %s111, %s127
      %p129 = scmp.eq.s32.totalorder %s28, 0
      %p130 = por %p128, %p129
      %s131 = ssub.s32 %s30, %s37
      %p132 = scmp.eq.s32.totalorder %s131, 0
      %s134 = sadd.s32 %s133, 1
      %s135 = scalar_select %p132, %s133, %s134
      %p138 = pneg %p132
      %p139 = scmp.eq.s32.totalorder %s22, 1
      %p140 = por %p138, %p139
      %p141 = scmp.ne.s32.totalorder %s133, %s136
      %p142 = scmp.eq.s32.totalorder %s22, 0
      %p143 = por %p141, %p142
      %p144 = scmp.ne.s32.totalorder %s133, %s136
      %p145 = scmp.eq.s32.totalorder %s27, 1
      %p146 = por %p144, %p145
      %p147 = scmp.ne.s32.totalorder %s136, %s137
      %p148 = scmp.eq.s32.totalorder %s27, 0
      %p149 = por %p147, %p148
      %p150 = scmp.ne.s32.totalorder %s136, %s137
      %p151 = scmp.eq.s32.totalorder %s28, 1
      %p152 = por %p150, %p151
      %p154 = scmp.ne.s32.totalorder %s137, %s153
      %p155 = scmp.eq.s32.totalorder %s28, 0
      %p156 = por %p154, %p155
      %s157 = ssub.s32 %s30, %s37
      %s158 = ssub.s32 %s29, %s41
      %s159 = sor.u32 %s157, %s158
      %p160 = scmp.eq.s32.totalorder %s159, 0
      %s162 = sadd.s32 %s161, 1
      %s163 = scalar_select %p160, %s161, %s162
      %p166 = pneg %p160
      %p167 = scmp.eq.s32.totalorder %s22, 1
      %p168 = por %p166, %p167
      %p169 = scmp.ne.s32.totalorder %s161, %s164
      %p170 = scmp.eq.s32.totalorder %s22, 0
      %p171 = por %p169, %p170
      %p172 = scmp.ne.s32.totalorder %s161, %s164
      %p173 = scmp.eq.s32.totalorder %s27, 1
      %p174 = por %p172, %p173
      %p175 = scmp.ne.s32.totalorder %s164, %s165
      %p176 = scmp.eq.s32.totalorder %s27, 0
      %p177 = por %p175, %p176
      %p178 = scmp.ne.s32.totalorder %s164, %s165
      %p179 = scmp.eq.s32.totalorder %s28, 1
      %p180 = por %p178, %p179
      %p182 = scmp.ne.s32.totalorder %s165, %s181
      %p183 = scmp.eq.s32.totalorder %s28, 0
      %p184 = por %p182, %p183
      %s185 = ssub.s32 %s29, %s41
      %p186 = scmp.eq.s32.totalorder %s185, 0
      %s188 = sadd.s32 %s187, 1
      %s189 = scalar_select %p186, %s187, %s188
      %p192 = pneg %p186
      %p193 = scmp.eq.s32.totalorder %s22, 1
      %p194 = por %p192, %p193
      %p195 = scmp.ne.s32.totalorder %s187, %s190
      %p196 = scmp.eq.s32.totalorder %s22, 0
      %p197 = por %p195, %p196
      %p198 = scmp.ne.s32.totalorder %s187, %s190
      %p199 = scmp.eq.s32.totalorder %s27, 1
      %p200 = por %p198, %p199
      %p201 = scmp.ne.s32.totalorder %s190, %s191
      %p202 = scmp.eq.s32.totalorder %s27, 0
      %p203 = por %p201, %p202
      %p204 = scmp.ne.s32.totalorder %s190, %s191
      %p205 = scmp.eq.s32.totalorder %s28, 1
      %p206 = por %p204, %p205
      %p208 = scmp.ne.s32.totalorder %s191, %s207
      %p209 = scmp.eq.s32.totalorder %s28, 0
      %p210 = por %p208, %p209
      %s211 = ssub.s32 %s29, %s41
      %p212 = scmp.eq.s32.totalorder %s211, 0
      %s214 = sadd.s32 %s213, 1
      %s215 = scalar_select %p212, %s213, %s214
      %p218 = pneg %p212
      %p219 = scmp.eq.s32.totalorder %s22, 1
      %p220 = por %p218, %p219
      %p221 = scmp.ne.s32.totalorder %s213, %s216
      %p222 = scmp.eq.s32.totalorder %s22, 0
      %p223 = por %p221, %p222
      %p224 = scmp.ne.s32.totalorder %s213, %s216
      %p225 = scmp.eq.s32.totalorder %s27, 1
      %p226 = por %p224, %p225
      %p227 = scmp.ne.s32.totalorder %s216, %s217
      %p228 = scmp.eq.s32.totalorder %s27, 0
      %p229 = por %p227, %p228
      %p230 = scmp.ne.s32.totalorder %s216, %s217
      %p231 = scmp.eq.s32.totalorder %s28, 1
      %p232 = por %p230, %p231
      %p234 = scmp.ne.s32.totalorder %s217, %s233
      %p235 = scmp.eq.s32.totalorder %s28, 0
      %p236 = por %p234, %p235
      %p237 = scmp.le.s32.totalorder 1, %s22
      %p238 = scmp.lt.s32.totalorder %s22, 3
      %p239 = pnand %p237, %p238
      %p240 = pneg %p239
      // Predicated region
      $region9: #{tpu_custom_call.1} parent=5 // pred_check
        _
      $region10: #{tpu_custom_call.1} parent=5 // pred_check_branch
        %242 = sbr.rel (%p239) target = $region12
      $region11: #{tpu_custom_call.1} parent=5 // pred_region
        %s243 = ssub.s32 %s22, 1
        // Predicated region
        $region13: #{tpu_custom_call.1} parent=11 // pred_check
          %p244 = pneg %p55
        $region14: #{tpu_custom_call.1} parent=11 // pred_check_branch
          %246 = sbr.rel (%p244) target = $region16
        $region15: #{tpu_custom_call.1} parent=11 // pred_region
          %s248 = ssub.s32 256, 256
          %249 = vsyncadd [#allocation4], %s248
          %s251 = sshll.u32 [#allocation3], 4
          %s252 = int_to_ptr.vmem [resolvable:$true] %s251
          %254 = dma.hbm_to_vmem [thread:$0]  %s0, 256, %s252, [#allocation4]
        $region16: #{tpu_custom_call.1} parent=11 // pred_fallthru
          _
        // Predicated region
        $region17: #{tpu_custom_call.1} parent=11 // pred_check
          %p255 = pneg %p76
        $region18: #{tpu_custom_call.1} parent=11 // pred_check_branch
          %257 = sbr.rel (%p255) target = $region20
        $region19: #{tpu_custom_call.1} parent=11 // pred_region
          %s259 = ssub.s32 1024, 1024
          %260 = vsyncadd [#allocation7], %s259
          %s261 = sshll.u32 [#allocation6], 4
          %s262 = int_to_ptr.vmem [resolvable:$true] %s261
          %267 = dma.hbm_to_vmem [thread:$0]  %s1, 1024, %s262, [#allocation7], 64, 64, 4
        $region20: #{tpu_custom_call.1} parent=11 // pred_fallthru
          _
        // Predicated region
        $region21: #{tpu_custom_call.1} parent=11 // pred_check
          %p268 = pneg %p97
        $region22: #{tpu_custom_call.1} parent=11 // pred_check_branch
          %270 = sbr.rel (%p268) target = $region24
        $region23: #{tpu_custom_call.1} parent=11 // pred_region
          %s272 = ssub.s32 16, 16
          %273 = vsyncadd [#allocation7], %s272
          %s275 = sshll.u32 [#allocation8], 4
          %s276 = int_to_ptr.vmem [resolvable:$true] %s275
          %278 = dma.hbm_to_vmem [thread:$0]  %s2, 16, %s276, [#allocation7]
        $region24: #{tpu_custom_call.1} parent=11 // pred_fallthru
          _
        // Predicated region
        $region25: #{tpu_custom_call.1} parent=11 // pred_check
          %p279 = pneg %p203
        $region26: #{tpu_custom_call.1} parent=11 // pred_check_branch
          %281 = sbr.rel (%p279) target = $region28
        $region27: #{tpu_custom_call.1} parent=11 // pred_region
          %s283 = ssub.s32 16, 16
          %284 = vsyncadd [#allocation13], %s283
          %s285 = smul.addr %s31, 16
          %s286 = scalar_lea.hbm %s6, %s285
          %s288 = sshll.u32 [#allocation14], 4
          %s289 = int_to_ptr.vmem [resolvable:$true] %s288
          %291 = dma.hbm_to_vmem [thread:$0]  %s286, 16, %s289, [#allocation13]
        $region28: #{tpu_custom_call.1} parent=11 // pred_fallthru
          _
      $region12: #{tpu_custom_call.1} parent=5 // pred_fallthru
        _
      %p292 = scmp.lt.s32.totalorder %s22, 2
      // Predicated region
      $region29: #{tpu_custom_call.1} parent=5 // pred_check
        %p293 = pneg %p292
      $region30: #{tpu_custom_call.1} parent=5 // pred_check_branch
        %295 = sbr.rel (%p293) target = $region32
      $region31: #{tpu_custom_call.1} parent=5 // pred_region
        // Predicated region
        $region33: #{tpu_custom_call.1} parent=31 // pred_check
          %p296 = pneg %p117
        $region34: #{tpu_custom_call.1} parent=31 // pred_check_branch
          %298 = sbr.rel (%p296) target = $region36
        $region35: #{tpu_custom_call.1} parent=31 // pred_region
          %s299 = sand.u32 %s22, 1
          %s300 = scalar_lea.sflag [#allocation10], %s299
          %s301 = sand.u32 %s107, 1
          %s302 = smul.addr %s301, 4096
          %s303 = scalar_lea.vmem [#allocation9], %s302
          %s304 = smul.u32 4, %s30
          %s306 = ssub.s32 65536, 65536
          %307 = vsyncadd %s300, %s306
          %s308 = smul.addr %s304, 64
          %s309 = scalar_lea.hbm %s3, %s308
          %s310 = sshll.u32 %s303, 4
          %s311 = int_to_ptr.vmem [resolvable:$true] %s310
          %316 = dma.hbm_to_vmem [thread:$0]  %s309, 65536, %s311, %s300, 512, 256, 16
        $region36: #{tpu_custom_call.1} parent=31 // pred_fallthru
          _
        // Predicated region
        $region37: #{tpu_custom_call.1} parent=31 // pred_check
          %p317 = pneg %p143
        $region38: #{tpu_custom_call.1} parent=31 // pred_check_branch
          %319 = sbr.rel (%p317) target = $region40
        $region39: #{tpu_custom_call.1} parent=31 // pred_region
          %s320 = sand.u32 %s22, 1
          %s321 = scalar_lea.sflag [#allocation10], %s320
          %s322 = sand.u32 %s133, 1
          %s323 = smul.addr %s322, 4
          %s324 = scalar_lea.vmem [#allocation11], %s323
          %s325 = smul.u32 4, %s30
          %s327 = ssub.s32 64, 64
          %328 = vsyncadd %s321, %s327
          %s329 = smul.addr %s325, 16
          %s330 = scalar_lea.hbm %s4, %s329
          %s332 = sshll.u32 %s324, 4
          %s333 = int_to_ptr.vmem [resolvable:$true] %s332
          %335 = dma.hbm_to_vmem [thread:$0]  %s330, 64, %s333, %s321
        $region40: #{tpu_custom_call.1} parent=31 // pred_fallthru
          _
        // Predicated region
        $region41: #{tpu_custom_call.1} parent=31 // pred_check
          %p336 = pneg %p171
        $region42: #{tpu_custom_call.1} parent=31 // pred_check_branch
          %338 = sbr.rel (%p336) target = $region44
        $region43: #{tpu_custom_call.1} parent=31 // pred_region
          %s339 = sand.u32 %s22, 1
          %s340 = scalar_lea.sflag [#allocation13], %s339
          %s341 = sand.u32 %s161, 1
          %s342 = smul.addr %s341, 256
          %s343 = scalar_lea.vmem [#allocation12], %s342
          %s344 = smul.u32 64, %s30
          %s346 = ssub.s32 4096, 4096
          %347 = vsyncadd %s340, %s346
          %s348 = sadd.s32 %s29, %s344
          %s349 = smul.addr %s348, 64
          %s350 = scalar_lea.hbm %s5, %s349
          %s351 = sshll.u32 %s343, 4
          %s352 = int_to_ptr.vmem [resolvable:$true] %s351
          %357 = dma.hbm_to_vmem [thread:$0]  %s350, 4096, %s352, %s340, 64, 64, 4
        $region44: #{tpu_custom_call.1} parent=31 // pred_fallthru
          _
      $region32: #{tpu_custom_call.1} parent=5 // pred_fallthru
        _
      %p358 = scmp.le.s32.totalorder 1, %s22
      %p359 = scmp.lt.s32.totalorder %s22, 3
      %p360 = pnand %p358, %p359
      %p361 = pneg %p360
      // Predicated region
      $region45: #{tpu_custom_call.1} parent=5 // pred_check
        _
      $region46: #{tpu_custom_call.1} parent=5 // pred_check_branch
        %363 = sbr.rel (%p360) target = $region48
      $region47: #{tpu_custom_call.1} parent=5 // pred_region
        %s364 = ssub.s32 %s22, 1
        // Predicated region
        $region49: #{tpu_custom_call.1} parent=47 // pred_check
          %p365 = pneg %p55
        $region50: #{tpu_custom_call.1} parent=47 // pred_check_branch
          %367 = sbr.rel (%p365) target = $region52
        $region51: #{tpu_custom_call.1} parent=47 // pred_region
          %368 = dma.done [#allocation4], 256
        $region52: #{tpu_custom_call.1} parent=47 // pred_fallthru
          _
        // Predicated region
        $region53: #{tpu_custom_call.1} parent=47 // pred_check
          %p369 = pneg %p76
        $region54: #{tpu_custom_call.1} parent=47 // pred_check_branch
          %371 = sbr.rel (%p369) target = $region56
        $region55: #{tpu_custom_call.1} parent=47 // pred_region
          %372 = dma.done [#allocation7], 1024
        $region56: #{tpu_custom_call.1} parent=47 // pred_fallthru
          _
        // Predicated region
        $region57: #{tpu_custom_call.1} parent=47 // pred_check
          %p373 = pneg %p97
        $region58: #{tpu_custom_call.1} parent=47 // pred_check_branch
          %375 = sbr.rel (%p373) target = $region60
        $region59: #{tpu_custom_call.1} parent=47 // pred_region
          %376 = dma.done [#allocation7], 16
        $region60: #{tpu_custom_call.1} parent=47 // pred_fallthru
          _
        %s377 = sand.u32 %s27, 1
        %s378 = scalar_lea.sflag [#allocation10], %s377
        %s379 = sand.u32 %s110, 1
        %s380 = smul.addr %s379, 4096
        %s381 = scalar_lea.vmem [#allocation9], %s380
        // Predicated region
        $region61: #{tpu_custom_call.1} parent=47 // pred_check
          %p382 = pneg %p123
        $region62: #{tpu_custom_call.1} parent=47 // pred_check_branch
          %384 = sbr.rel (%p382) target = $region64
        $region63: #{tpu_custom_call.1} parent=47 // pred_region
          %385 = dma.done %s378, 65536
        $region64: #{tpu_custom_call.1} parent=47 // pred_fallthru
          _
        %s386 = sand.u32 %s27, 1
        %s387 = scalar_lea.sflag [#allocation10], %s386
        %s388 = sand.u32 %s136, 1
        %s389 = smul.addr %s388, 4
        %s390 = scalar_lea.vmem [#allocation11], %s389
        // Predicated region
        $region65: #{tpu_custom_call.1} parent=47 // pred_check
          %p391 = pneg %p149
        $region66: #{tpu_custom_call.1} parent=47 // pred_check_branch
          %393 = sbr.rel (%p391) target = $region68
        $region67: #{tpu_custom_call.1} parent=47 // pred_region
          %394 = dma.done %s387, 64
        $region68: #{tpu_custom_call.1} parent=47 // pred_fallthru
          _
        %s395 = sand.u32 %s27, 1
        %s396 = scalar_lea.sflag [#allocation13], %s395
        %s397 = sand.u32 %s164, 1
        %s398 = smul.addr %s397, 256
        %s399 = scalar_lea.vmem [#allocation12], %s398
        // Predicated region
        $region69: #{tpu_custom_call.1} parent=47 // pred_check
          %p400 = pneg %p177
        $region70: #{tpu_custom_call.1} parent=47 // pred_check_branch
          %402 = sbr.rel (%p400) target = $region72
        $region71: #{tpu_custom_call.1} parent=47 // pred_region
          %403 = dma.done %s396, 4096
        $region72: #{tpu_custom_call.1} parent=47 // pred_fallthru
          _
        // Predicated region
        $region73: #{tpu_custom_call.1} parent=47 // pred_check
          %p404 = pneg %p203
        $region74: #{tpu_custom_call.1} parent=47 // pred_check_branch
          %406 = sbr.rel (%p404) target = $region76
        $region75: #{tpu_custom_call.1} parent=47 // pred_region
          %407 = dma.done [#allocation13], 16
        $region76: #{tpu_custom_call.1} parent=47 // pred_fallthru
          _
        %p408 = pneg %p55
        %p409 = pneg %p52
        %p410 = pneg %p76
        %p411 = pneg %p73
        %p412 = pneg %p97
        %p413 = pneg %p94
        %s414 = sand.u32 %s27, 1
        %s415 = scalar_lea.sflag [#allocation10], %s414
        %s416 = sand.u32 %s110, 1
        %s417 = smul.addr %s416, 4096
        %s418 = scalar_lea.vmem [#allocation9], %s417
        %p419 = pneg %p123
        %p420 = pneg %p120
        %s421 = sand.u32 %s27, 1
        %s422 = scalar_lea.sflag [#allocation10], %s421
        %s423 = sand.u32 %s136, 1
        %s424 = smul.addr %s423, 4
        %s425 = scalar_lea.vmem [#allocation11], %s424
        %p426 = pneg %p149
        %p427 = pneg %p146
        %s428 = sand.u32 %s27, 1
        %s429 = scalar_lea.sflag [#allocation13], %s428
        %s430 = sand.u32 %s164, 1
        %s431 = smul.addr %s430, 256
        %s432 = scalar_lea.vmem [#allocation12], %s431
        %p433 = pneg %p177
        %p434 = pneg %p174
        %p435 = pneg %p203
        %p436 = pneg %p200
        %p437 = pneg %p229
        %p438 = pneg %p226
        %s439 = smul.u32 4, %s32
        %s440 = smul.u32 4, %s32
        %s441 = smul.u32 64, %s32
        %p443 = scmp.eq.s32.totalorder %s32, 0
        // Predicated region
        $region77: #{tpu_custom_call.1} parent=47 // pred_check
          %p444 = pneg %p443
        $region78: #{tpu_custom_call.1} parent=47 // pred_check_branch
          %446 = sbr.rel (%p444) target = $region80
        $region79: #{tpu_custom_call.1} parent=47 // pred_region
          %v447 = vld [vmem:[#allocation3] sm:$0x1]
          %v448 = vld [vmem:[#allocation6] sm:$0xf]
          %v449 = vld [vmem:[#allocation6 + $0x4] sm:$0xf]
          %v450 = vld [vmem:[#allocation6 + $0x8] sm:$0xf]
          %v451 = vld [vmem:[#allocation6 + $0xc] sm:$0xf]
          %v452 = vld [vmem:[#allocation6 + $0x10] sm:$0xf]
          %v453 = vld [vmem:[#allocation6 + $0x14] sm:$0xf]
          %v454 = vld [vmem:[#allocation6 + $0x18] sm:$0xf]
          %v455 = vld [vmem:[#allocation6 + $0x1c] sm:$0xf]
          %v456 = vld [vmem:[#allocation6 + $0x20] sm:$0xf]
          %v457 = vld [vmem:[#allocation6 + $0x24] sm:$0xf]
          %v458 = vld [vmem:[#allocation6 + $0x28] sm:$0xf]
          %v459 = vld [vmem:[#allocation6 + $0x2c] sm:$0xf]
          %v460 = vld [vmem:[#allocation6 + $0x30] sm:$0xf]
          %v461 = vld [vmem:[#allocation6 + $0x34] sm:$0xf]
          %v462 = vld [vmem:[#allocation6 + $0x38] sm:$0xf]
          %v463 = vld [vmem:[#allocation6 + $0x3c] sm:$0xf]
          %v464 = vld [vmem:[#allocation8] sm:$0x1]
          %v466 = vlaneseq
          %v467 = vshrl.u32 %v466, 7
          %v468 = vsub.s32 0, %v467
          %v469 = vrot.slane %v464, %v468
          %v487 = vunpack.c.l.b16 %v448
          %v488 = vunpack.c.l.b16 %v449
          %v489 = vunpack.c.l.b16 %v450
          %v490 = vunpack.c.l.b16 %v451
          %v491 = vunpack.c.l.b16 %v452
          %v492 = vunpack.c.l.b16 %v453
          %v493 = vunpack.c.l.b16 %v454
          %v494 = vunpack.c.l.b16 %v455
          %v495 = vunpack.c.l.b16 %v456
          %v496 = vunpack.c.l.b16 %v457
          %v497 = vunpack.c.l.b16 %v458
          %v498 = vunpack.c.l.b16 %v459
          %v499 = vunpack.c.l.b16 %v460
          %v500 = vunpack.c.l.b16 %v461
          %v501 = vunpack.c.l.b16 %v462
          %v502 = vunpack.c.l.b16 %v463
          %v503 = vpack.c.b16 %v488, %v487
          %v504 = vpack.c.b16 %v490, %v489
          %v505 = vpack.c.b16 %v492, %v491
          %v506 = vpack.c.b16 %v494, %v493
          %v507 = vpack.c.b16 %v496, %v495
          %v508 = vpack.c.b16 %v498, %v497
          %v509 = vpack.c.b16 %v500, %v499
          %v510 = vpack.c.b16 %v502, %v501
          %519 = vmatprep.subr.bf16.mxu0 0
          %520 = vmatpush1.bf16.msra.mxu0 %v503
          %521 = vmatprep.subr.bf16.mxu0 0
          %522 = vmatpush1.bf16.msra.mxu0 %v504
          %523 = vmatprep.subr.bf16.mxu0 0
          %524 = vmatpush1.bf16.msra.mxu0 %v505
          %525 = vmatprep.subr.bf16.mxu0 0
          %526 = vmatpush1.bf16.msra.mxu0 %v506
          %527 = vmatprep.subr.bf16.mxu0 0
          %528 = vmatpush1.bf16.msra.mxu0 %v507
          %529 = vmatprep.subr.bf16.mxu0 0
          %530 = vmatpush1.bf16.msra.mxu0 %v508
          %531 = vmatprep.subr.bf16.mxu0 0
          %532 = vmatpush1.bf16.msra.mxu0 %v509
          %533 = vmatprep.subr.bf16.mxu0 0
          %534 = vmatpush1.bf16.msra.mxu0 %v510
          %535 = vmatprep.subr.bf16.mxu0 0
          %536 = vmatpush1.bf16.msra.mxu0 0
          %537 = vmatprep.subr.bf16.mxu0 0
          %538 = vmatpush1.bf16.msra.mxu0 0
          %539 = vmatprep.subr.bf16.mxu0 0
          %540 = vmatpush1.bf16.msra.mxu0 0
          %541 = vmatprep.subr.bf16.mxu0 0
          %542 = vmatpush1.bf16.msra.mxu0 0
          %543 = vmatprep.subr.bf16.mxu0 0
          %544 = vmatpush1.bf16.msra.mxu0 0
          %545 = vmatprep.subr.bf16.mxu0 0
          %546 = vmatpush1.bf16.msra.mxu0 0
          %547 = vmatprep.subr.bf16.mxu0 0
          %548 = vmatpush1.bf16.msra.mxu0 0
          %549 = vmatprep.subr.bf16.mxu0 0
          %550 = vmatpush1.bf16.msra.mxu0 0
          %551 = vmatprep.mubr.bf16.mxu0 0
          %552 = vmatmul.mubr.bf16.gmra.mrb[0].mxu0 %v447
          %v553 = vpop.f32.mrb[0].mxu0
          %v554 = vadd.f32 %v469, %v553
          %v555 = vpop.f32.mrb[0].mxu0
          %v556 = vpop.f32.mrb[0].mxu0
          %v557 = vpop.f32.mrb[0].mxu0
          %558 = vdwg.mxu0
          %v559 = vmax.f32 %v554, 0.0
          %v560 = vpack.c.bf16 %v559, %v559
          %561 = vst [vmem:[#allocation2] sm:$0x1] %v560
          %v562 = vld [vmem:[#allocation3 + $0x1] sm:$0x1]
          %v563 = vld [vmem:[#allocation6] sm:$0xf]
          %v564 = vld [vmem:[#allocation6 + $0x4] sm:$0xf]
          %v565 = vld [vmem:[#allocation6 + $0x8] sm:$0xf]
          %v566 = vld [vmem:[#allocation6 + $0xc] sm:$0xf]
          %v567 = vld [vmem:[#allocation6 + $0x10] sm:$0xf]
          %v568 = vld [vmem:[#allocation6 + $0x14] sm:$0xf]
          %v569 = vld [vmem:[#allocation6 + $0x18] sm:$0xf]
          %v570 = vld [vmem:[#allocation6 + $0x1c] sm:$0xf]
          %v571 = vld [vmem:[#allocation6 + $0x20] sm:$0xf]
          %v572 = vld [vmem:[#allocation6 + $0x24] sm:$0xf]
          %v573 = vld [vmem:[#allocation6 + $0x28] sm:$0xf]
          %v574 = vld [vmem:[#allocation6 + $0x2c] sm:$0xf]
          %v575 = vld [vmem:[#allocation6 + $0x30] sm:$0xf]
          %v576 = vld [vmem:[#allocation6 + $0x34] sm:$0xf]
          %v577 = vld [vmem:[#allocation6 + $0x38] sm:$0xf]
          %v578 = vld [vmem:[#allocation6 + $0x3c] sm:$0xf]
          %v579 = vld [vmem:[#allocation8] sm:$0x1]
          %v581 = vlaneseq
          %v582 = vshrl.u32 %v581, 7
          %v583 = vsub.s32 0, %v582
          %v584 = vrot.slane %v579, %v583
          %v602 = vunpack.c.l.b16 %v563
          %v603 = vunpack.c.l.b16 %v564
          %v604 = vunpack.c.l.b16 %v565
          %v605 = vunpack.c.l.b16 %v566
          %v606 = vunpack.c.l.b16 %v567
          %v607 = vunpack.c.l.b16 %v568
          %v608 = vunpack.c.l.b16 %v569
          %v609 = vunpack.c.l.b16 %v570
          %v610 = vunpack.c.l.b16 %v571
          %v611 = vunpack.c.l.b16 %v572
          %v612 = vunpack.c.l.b16 %v573
          %v613 = vunpack.c.l.b16 %v574
          %v614 = vunpack.c.l.b16 %v575
          %v615 = vunpack.c.l.b16 %v576
          %v616 = vunpack.c.l.b16 %v577
          %v617 = vunpack.c.l.b16 %v578
          %v618 = vpack.c.b16 %v603, %v602
          %v619 = vpack.c.b16 %v605, %v604
          %v620 = vpack.c.b16 %v607, %v606
          %v621 = vpack.c.b16 %v609, %v608
          %v622 = vpack.c.b16 %v611, %v610
          %v623 = vpack.c.b16 %v613, %v612
          %v624 = vpack.c.b16 %v615, %v614
          %v625 = vpack.c.b16 %v617, %v616
          %634 = vmatprep.subr.bf16.mxu0 0
          %635 = vmatpush1.bf16.msra.mxu0 %v618
          %636 = vmatprep.subr.bf16.mxu0 0
          %637 = vmatpush1.bf16.msra.mxu0 %v619
          %638 = vmatprep.subr.bf16.mxu0 0
          %639 = vmatpush1.bf16.msra.mxu0 %v620
          %640 = vmatprep.subr.bf16.mxu0 0
          %641 = vmatpush1.bf16.msra.mxu0 %v621
          %642 = vmatprep.subr.bf16.mxu0 0
          %643 = vmatpush1.bf16.msra.mxu0 %v622
          %644 = vmatprep.subr.bf16.mxu0 0
          %645 = vmatpush1.bf16.msra.mxu0 %v623
          %646 = vmatprep.subr.bf16.mxu0 0
          %647 = vmatpush1.bf16.msra.mxu0 %v624
          %648 = vmatprep.subr.bf16.mxu0 0
          %649 = vmatpush1.bf16.msra.mxu0 %v625
          %650 = vmatprep.subr.bf16.mxu0 0
          %651 = vmatpush1.bf16.msra.mxu0 0
          %652 = vmatprep.subr.bf16.mxu0 0
          %653 = vmatpush1.bf16.msra.mxu0 0
          %654 = vmatprep.subr.bf16.mxu0 0
          %655 = vmatpush1.bf16.msra.mxu0 0
          %656 = vmatprep.subr.bf16.mxu0 0
          %657 = vmatpush1.bf16.msra.mxu0 0
          %658 = vmatprep.subr.bf16.mxu0 0
          %659 = vmatpush1.bf16.msra.mxu0 0
          %660 = vmatprep.subr.bf16.mxu0 0
          %661 = vmatpush1.bf16.msra.mxu0 0
          %662 = vmatprep.subr.bf16.mxu0 0
          %663 = vmatpush1.bf16.msra.mxu0 0
          %664 = vmatprep.subr.bf16.mxu0 0
          %665 = vmatpush1.bf16.msra.mxu0 0
          %666 = vmatprep.mubr.bf16.mxu0 0
          %667 = vmatmul.mubr.bf16.gmra.mrb[0].mxu0 %v562
          %v668 = vpop.f32.mrb[0].mxu0
          %v669 = vadd.f32 %v584, %v668
          %v670 = vpop.f32.mrb[0].mxu0
          %v671 = vpop.f32.mrb[0].mxu0
          %v672 = vpop.f32.mrb[0].mxu0
          %673 = vdwg.mxu0
          %v674 = vmax.f32 %v669, 0.0
          %v675 = vpack.c.bf16 %v674, %v674
          %676 = vst [vmem:[#allocation2 + $0x1] sm:$0x1] %v675
          %v677 = vld [vmem:[#allocation3 + $0x2] sm:$0x1]
          %v678 = vld [vmem:[#allocation6] sm:$0xf]
          %v679 = vld [vmem:[#allocation6 + $0x4] sm:$0xf]
          %v680 = vld [vmem:[#allocation6 + $0x8] sm:$0xf]
          %v681 = vld [vmem:[#allocation6 + $0xc] sm:$0xf]
          %v682 = vld [vmem:[#allocation6 + $0x10] sm:$0xf]
          %v683 = vld [vmem:[#allocation6 + $0x14] sm:$0xf]
          %v684 = vld [vmem:[#allocation6 + $0x18] sm:$0xf]
          %v685 = vld [vmem:[#allocation6 + $0x1c] sm:$0xf]
          %v686 = vld [vmem:[#allocation6 + $0x20] sm:$0xf]
          %v687 = vld [vmem:[#allocation6 + $0x24] sm:$0xf]
          %v688 = vld [vmem:[#allocation6 + $0x28] sm:$0xf]
          %v689 = vld [vmem:[#allocation6 + $0x2c] sm:$0xf]
          %v690 = vld [vmem:[#allocation6 + $0x30] sm:$0xf]
          %v691 = vld [vmem:[#allocation6 + $0x34] sm:$0xf]
          %v692 = vld [vmem:[#allocation6 + $0x38] sm:$0xf]
          %v693 = vld [vmem:[#allocation6 + $0x3c] sm:$0xf]
          %v694 = vld [vmem:[#allocation8] sm:$0x1]
          %v696 = vlaneseq
          %v697 = vshrl.u32 %v696, 7
          %v698 = vsub.s32 0, %v697
          %v699 = vrot.slane %v694, %v698
          %v717 = vunpack.c.l.b16 %v678
          %v718 = vunpack.c.l.b16 %v679
          %v719 = vunpack.c.l.b16 %v680
          %v720 = vunpack.c.l.b16 %v681
          %v721 = vunpack.c.l.b16 %v682
          %v722 = vunpack.c.l.b16 %v683
          %v723 = vunpack.c.l.b16 %v684
          %v724 = vunpack.c.l.b16 %v685
          %v725 = vunpack.c.l.b16 %v686
          %v726 = vunpack.c.l.b16 %v687
          %v727 = vunpack.c.l.b16 %v688
          %v728 = vunpack.c.l.b16 %v689
          %v729 = vunpack.c.l.b16 %v690
          %v730 = vunpack.c.l.b16 %v691
          %v731 = vunpack.c.l.b16 %v692
          %v732 = vunpack.c.l.b16 %v693
          %v733 = vpack.c.b16 %v718, %v717
          %v734 = vpack.c.b16 %v720, %v719
          %v735 = vpack.c.b16 %v722, %v721
          %v736 = vpack.c.b16 %v724, %v723
          %v737 = vpack.c.b16 %v726, %v725
          %v738 = vpack.c.b16 %v728, %v727
          %v739 = vpack.c.b16 %v730, %v729
          %v740 = vpack.c.b16 %v732, %v731
          %749 = vmatprep.subr.bf16.mxu0 0
          %750 = vmatpush1.bf16.msra.mxu0 %v733
          %751 = vmatprep.subr.bf16.mxu0 0
          %752 = vmatpush1.bf16.msra.mxu0 %v734
          %753 = vmatprep.subr.bf16.mxu0 0
          %754 = vmatpush1.bf16.msra.mxu0 %v735
          %755 = vmatprep.subr.bf16.mxu0 0
          %756 = vmatpush1.bf16.msra.mxu0 %v736
          %757 = vmatprep.subr.bf16.mxu0 0
          %758 = vmatpush1.bf16.msra.mxu0 %v737
          %759 = vmatprep.subr.bf16.mxu0 0
          %760 = vmatpush1.bf16.msra.mxu0 %v738
          %761 = vmatprep.subr.bf16.mxu0 0
          %762 = vmatpush1.bf16.msra.mxu0 %v739
          %763 = vmatprep.subr.bf16.mxu0 0
          %764 = vmatpush1.bf16.msra.mxu0 %v740
          %765 = vmatprep.subr.bf16.mxu0 0
          %766 = vmatpush1.bf16.msra.mxu0 0
          %767 = vmatprep.subr.bf16.mxu0 0
          %768 = vmatpush1.bf16.msra.mxu0 0
          %769 = vmatprep.subr.bf16.mxu0 0
          %770 = vmatpush1.bf16.msra.mxu0 0
          %771 = vmatprep.subr.bf16.mxu0 0
          %772 = vmatpush1.bf16.msra.mxu0 0
          %773 = vmatprep.subr.bf16.mxu0 0
          %774 = vmatpush1.bf16.msra.mxu0 0
          %775 = vmatprep.subr.bf16.mxu0 0
          %776 = vmatpush1.bf16.msra.mxu0 0
          %777 = vmatprep.subr.bf16.mxu0 0
          %778 = vmatpush1.bf16.msra.mxu0 0
          %779 = vmatprep.subr.bf16.mxu0 0
          %780 = vmatpush1.bf16.msra.mxu0 0
          %781 = vmatprep.mubr.bf16.mxu0 0
          %782 = vmatmul.mubr.bf16.gmra.mrb[0].mxu0 %v677
          %v783 = vpop.f32.mrb[0].mxu0
          %v784 = vadd.f32 %v699, %v783
          %v785 = vpop.f32.mrb[0].mxu0
          %v786 = vpop.f32.mrb[0].mxu0
          %v787 = vpop.f32.mrb[0].mxu0
          %788 = vdwg.mxu0
          %v789 = vmax.f32 %v784, 0.0
          %v790 = vpack.c.bf16 %v789, %v789
          %791 = vst [vmem:[#allocation2 + $0x2] sm:$0x1] %v790
          %v792 = vld [vmem:[#allocation3 + $0x3] sm:$0x1]
          %v793 = vld [vmem:[#allocation6] sm:$0xf]
          %v794 = vld [vmem:[#allocation6 + $0x4] sm:$0xf]
          %v795 = vld [vmem:[#allocation6 + $0x8] sm:$0xf]
          %v796 = vld [vmem:[#allocation6 + $0xc] sm:$0xf]
          %v797 = vld [vmem:[#allocation6 + $0x10] sm:$0xf]
          %v798 = vld [vmem:[#allocation6 + $0x14] sm:$0xf]
          %v799 = vld [vmem:[#allocation6 + $0x18] sm:$0xf]
          %v800 = vld [vmem:[#allocation6 + $0x1c] sm:$0xf]
          %v801 = vld [vmem:[#allocation6 + $0x20] sm:$0xf]
          %v802 = vld [vmem:[#allocation6 + $0x24] sm:$0xf]
          %v803 = vld [vmem:[#allocation6 + $0x28] sm:$0xf]
          %v804 = vld [vmem:[#allocation6 + $0x2c] sm:$0xf]
          %v805 = vld [vmem:[#allocation6 + $0x30] sm:$0xf]
          %v806 = vld [vmem:[#allocation6 + $0x34] sm:$0xf]
          %v807 = vld [vmem:[#allocation6 + $0x38] sm:$0xf]
          %v808 = vld [vmem:[#allocation6 + $0x3c] sm:$0xf]
          %v809 = vld [vmem:[#allocation8] sm:$0x1]
          %v811 = vlaneseq
          %v812 = vshrl.u32 %v811, 7
          %v813 = vsub.s32 0, %v812
          %v814 = vrot.slane %v809, %v813
          %v832 = vunpack.c.l.b16 %v793
          %v833 = vunpack.c.l.b16 %v794
          %v834 = vunpack.c.l.b16 %v795
          %v835 = vunpack.c.l.b16 %v796
          %v836 = vunpack.c.l.b16 %v797
          %v837 = vunpack.c.l.b16 %v798
          %v838 = vunpack.c.l.b16 %v799
          %v839 = vunpack.c.l.b16 %v800
          %v840 = vunpack.c.l.b16 %v801
          %v841 = vunpack.c.l.b16 %v802
          %v842 = vunpack.c.l.b16 %v803
          %v843 = vunpack.c.l.b16 %v804
          %v844 = vunpack.c.l.b16 %v805
          %v845 = vunpack.c.l.b16 %v806
          %v846 = vunpack.c.l.b16 %v807
          %v847 = vunpack.c.l.b16 %v808
          %v848 = vpack.c.b16 %v833, %v832
          %v849 = vpack.c.b16 %v835, %v834
          %v850 = vpack.c.b16 %v837, %v836
          %v851 = vpack.c.b16 %v839, %v838
          %v852 = vpack.c.b16 %v841, %v840
          %v853 = vpack.c.b16 %v843, %v842
          %v854 = vpack.c.b16 %v845, %v844
          %v855 = vpack.c.b16 %v847, %v846
          %864 = vmatprep.subr.bf16.mxu0 0
          %865 = vmatpush1.bf16.msra.mxu0 %v848
          %866 = vmatprep.subr.bf16.mxu0 0
          %867 = vmatpush1.bf16.msra.mxu0 %v849
          %868 = vmatprep.subr.bf16.mxu0 0
          %869 = vmatpush1.bf16.msra.mxu0 %v850
          %870 = vmatprep.subr.bf16.mxu0 0
          %871 = vmatpush1.bf16.msra.mxu0 %v851
          %872 = vmatprep.subr.bf16.mxu0 0
          %873 = vmatpush1.bf16.msra.mxu0 %v852
          %874 = vmatprep.subr.bf16.mxu0 0
          %875 = vmatpush1.bf16.msra.mxu0 %v853
          %876 = vmatprep.subr.bf16.mxu0 0
          %877 = vmatpush1.bf16.msra.mxu0 %v854
          %878 = vmatprep.subr.bf16.mxu0 0
          %879 = vmatpush1.bf16.msra.mxu0 %v855
          %880 = vmatprep.subr.bf16.mxu0 0
          %881 = vmatpush1.bf16.msra.mxu0 0
          %882 = vmatprep.subr.bf16.mxu0 0
          %883 = vmatpush1.bf16.msra.mxu0 0
          %884 = vmatprep.subr.bf16.mxu0 0
          %885 = vmatpush1.bf16.msra.mxu0 0
          %886 = vmatprep.subr.bf16.mxu0 0
          %887 = vmatpush1.bf16.msra.mxu0 0
          %888 = vmatprep.subr.bf16.mxu0 0
          %889 = vmatpush1.bf16.msra.mxu0 0
          %890 = vmatprep.subr.bf16.mxu0 0
          %891 = vmatpush1.bf16.msra.mxu0 0
          %892 = vmatprep.subr.bf16.mxu0 0
          %893 = vmatpush1.bf16.msra.mxu0 0
          %894 = vmatprep.subr.bf16.mxu0 0
          %895 = vmatpush1.bf16.msra.mxu0 0
          %896 = vmatprep.mubr.bf16.mxu0 0
          %897 = vmatmul.mubr.bf16.gmra.mrb[0].mxu0 %v792
          %v898 = vpop.f32.mrb[0].mxu0
          %v899 = vadd.f32 %v814, %v898
          %v900 = vpop.f32.mrb[0].mxu0
          %v901 = vpop.f32.mrb[0].mxu0
          %v902 = vpop.f32.mrb[0].mxu0
          %903 = vdwg.mxu0
          %v904 = vmax.f32 %v899, 0.0
          %v905 = vpack.c.bf16 %v904, %v904
          %906 = vst [vmem:[#allocation2 + $0x3] sm:$0x1] %v905
          %v907 = vld [vmem:[#allocation3 + $0x4] sm:$0x1]
          %v908 = vld [vmem:[#allocation6] sm:$0xf]
          %v909 = vld [vmem:[#allocation6 + $0x4] sm:$0xf]
          %v910 = vld [vmem:[#allocation6 + $0x8] sm:$0xf]
          %v911 = vld [vmem:[#allocation6 + $0xc] sm:$0xf]
          %v912 = vld [vmem:[#allocation6 + $0x10] sm:$0xf]
          %v913 = vld [vmem:[#allocation6 + $0x14] sm:$0xf]
          %v914 = vld [vmem:[#allocation6 + $0x18] sm:$0xf]
          %v915 = vld [vmem:[#allocation6 + $0x1c] sm:$0xf]
          %v916 = vld [vmem:[#allocation6 + $0x20] sm:$0xf]
          %v917 = vld [vmem:[#allocation6 + $0x24] sm:$0xf]
          %v918 = vld [vmem:[#allocation6 + $0x28] sm:$0xf]
          %v919 = vld [vmem:[#allocation6 + $0x2c] sm:$0xf]
          %v920 = vld [vmem:[#allocation6 + $0x30] sm:$0xf]
          %v921 = vld [vmem:[#allocation6 + $0x34] sm:$0xf]
          %v922 = vld [vmem:[#allocation6 + $0x38] sm:$0xf]
          %v923 = vld [vmem:[#allocation6 + $0x3c] sm:$0xf]
          %v924 = vld [vmem:[#allocation8] sm:$0x1]
          %v926 = vlaneseq
          %v927 = vshrl.u32 %v926, 7
          %v928 = vsub.s32 0, %v927
          %v929 = vrot.slane %v924, %v928
          %v947 = vunpack.c.l.b16 %v908
          %v948 = vunpack.c.l.b16 %v909
          %v949 = vunpack.c.l.b16 %v910
          %v950 = vunpack.c.l.b16 %v911
          %v951 = vunpack.c.l.b16 %v912
          %v952 = vunpack.c.l.b16 %v913
          %v953 = vunpack.c.l.b16 %v914
          %v954 = vunpack.c.l.b16 %v915
          %v955 = vunpack.c.l.b16 %v916
          %v956 = vunpack.c.l.b16 %v917
          %v957 = vunpack.c.l.b16 %v918
          %v958 = vunpack.c.l.b16 %v919
          %v959 = vunpack.c.l.b16 %v920
          %v960 = vunpack.c.l.b16 %v921
          %v961 = vunpack.c.l.b16 %v922
          %v962 = vunpack.c.l.b16 %v923
          %v963 = vpack.c.b16 %v948, %v947
          %v964 = vpack.c.b16 %v950, %v949
          %v965 = vpack.c.b16 %v952, %v951
          %v966 = vpack.c.b16 %v954, %v953
          %v967 = vpack.c.b16 %v956, %v955
          %v968 = vpack.c.b16 %v958, %v957
          %v969 = vpack.c.b16 %v960, %v959
          %v970 = vpack.c.b16 %v962, %v961
          %979 = vmatprep.subr.bf16.mxu0 0
          %980 = vmatpush1.bf16.msra.mxu0 %v963
          %981 = vmatprep.subr.bf16.mxu0 0
          %982 = vmatpush1.bf16.msra.mxu0 %v964
          %983 = vmatprep.subr.bf16.mxu0 0
          %984 = vmatpush1.bf16.msra.mxu0 %v965
          %985 = vmatprep.subr.bf16.mxu0 0
          %986 = vmatpush1.bf16.msra.mxu0 %v966
          %987 = vmatprep.subr.bf16.mxu0 0
          %988 = vmatpush1.bf16.msra.mxu0 %v967
          %989 = vmatprep.subr.bf16.mxu0 0
          %990 = vmatpush1.bf16.msra.mxu0 %v968
          %991 = vmatprep.subr.bf16.mxu0 0
          %992 = vmatpush1.bf16.msra.mxu0 %v969
          %993 = vmatprep.subr.bf16.mxu0 0
          %994 = vmatpush1.bf16.msra.mxu0 %v970
          %995 = vmatprep.subr.bf16.mxu0 0
          %996 = vmatpush1.bf16.msra.mxu0 0
          %997 = vmatprep.subr.bf16.mxu0 0
          %998 = vmatpush1.bf16.msra.mxu0 0
          %999 = vmatprep.subr.bf16.mxu0 0
          %1000 = vmatpush1.bf16.msra.mxu0 0
          %1001 = vmatprep.subr.bf16.mxu0 0
          %1002 = vmatpush1.bf16.msra.mxu0 0
          %1003 = vmatprep.subr.bf16.mxu0 0
          %1004 = vmatpush1.bf16.msra.mxu0 0
          %1005 = vmatprep.subr.bf16.mxu0 0
          %1006 = vmatpush1.bf16.msra.mxu0 0
          %1007 = vmatprep.subr.bf16.mxu0 0
          %1008 = vmatpush1.bf16.msra.mxu0 0
          %1009 = vmatprep.subr.bf16.mxu0 0
          %1010 = vmatpush1.bf16.msra.mxu0 0
          %1011 = vmatprep.mubr.bf16.mxu0 0
          %1012 = vmatmul.mubr.bf16.gmra.mrb[0].mxu0 %v907
          %v1013 = vpop.f32.mrb[0].mxu0
          %v1014 = vadd.f32 %v929, %v1013
          %v1015 = vpop.f32.mrb[0].mxu0
          %v1016 = vpop.f32.mrb[0].mxu0
          %v1017 = vpop.f32.mrb[0].mxu0
          %1018 = vdwg.mxu0
          %v1019 = vmax.f32 %v1014, 0.0
          %v1020 = vpack.c.bf16 %v1019, %v1019
          %1021 = vst [vmem:[#allocation2 + $0x4] sm:$0x1] %v1020
          %v1022 = vld [vmem:[#allocation3 + $0x5] sm:$0x1]
          %v1023 = vld [vmem:[#allocation6] sm:$0xf]
          %v1024 = vld [vmem:[#allocation6 + $0x4] sm:$0xf]
          %v1025 = vld [vmem:[#allocation6 + $0x8] sm:$0xf]
          %v1026 = vld [vmem:[#allocation6 + $0xc] sm:$0xf]
          %v1027 = vld [vmem:[#allocation6 + $0x10] sm:$0xf]
          %v1028 = vld [vmem:[#allocation6 + $0x14] sm:$0xf]
          %v1029 = vld [vmem:[#allocation6 + $0x18] sm:$0xf]
          %v1030 = vld [vmem:[#allocation6 + $0x1c] sm:$0xf]
          %v1031 = vld [vmem:[#allocation6 + $0x20] sm:$0xf]
          %v1032 = vld [vmem:[#allocation6 + $0x24] sm:$0xf]
          %v1033 = vld [vmem:[#allocation6 + $0x28] sm:$0xf]
          %v1034 = vld [vmem:[#allocation6 + $0x2c] sm:$0xf]
          %v1035 = vld [vmem:[#allocation6 + $0x30] sm:$0xf]
          %v1036 = vld [vmem:[#allocation6 + $0x34] sm:$0xf]
          %v1037 = vld [vmem:[#allocation6 + $0x38] sm:$0xf]
          %v1038 = vld [vmem:[#allocation6 + $0x3c] sm:$0xf]
          %v1039 = vld [vmem:[#allocation8] sm:$0x1]
          %v1041 = vlaneseq
          %v1042 = vshrl.u32 %v1041, 7
          %v1043 = vsub.s32 0, %v1042
          %v1044 = vrot.slane %v1039, %v1043
          %v1062 = vunpack.c.l.b16 %v1023
          %v1063 = vunpack.c.l.b16 %v1024
          %v1064 = vunpack.c.l.b16 %v1025
          %v1065 = vunpack.c.l.b16 %v1026
          %v1066 = vunpack.c.l.b16 %v1027
          %v1067 = vunpack.c.l.b16 %v1028
          %v1068 = vunpack.c.l.b16 %v1029
          %v1069 = vunpack.c.l.b16 %v1030
          %v1070 = vunpack.c.l.b16 %v1031
          %v1071 = vunpack.c.l.b16 %v1032
          %v1072 = vunpack.c.l.b16 %v1033
          %v1073 = vunpack.c.l.b16 %v1034
          %v1074 = vunpack.c.l.b16 %v1035
          %v1075 = vunpack.c.l.b16 %v1036
          %v1076 = vunpack.c.l.b16 %v1037
          %v1077 = vunpack.c.l.b16 %v1038
          %v1078 = vpack.c.b16 %v1063, %v1062
          %v1079 = vpack.c.b16 %v1065, %v1064
          %v1080 = vpack.c.b16 %v1067, %v1066
          %v1081 = vpack.c.b16 %v1069, %v1068
          %v1082 = vpack.c.b16 %v1071, %v1070
          %v1083 = vpack.c.b16 %v1073, %v1072
          %v1084 = vpack.c.b16 %v1075, %v1074
          %v1085 = vpack.c.b16 %v1077, %v1076
          %1094 = vmatprep.subr.bf16.mxu0 0
          %1095 = vmatpush1.bf16.msra.mxu0 %v1078
          %1096 = vmatprep.subr.bf16.mxu0 0
          %1097 = vmatpush1.bf16.msra.mxu0 %v1079
          %1098 = vmatprep.subr.bf16.mxu0 0
          %1099 = vmatpush1.bf16.msra.mxu0 %v1080
          %1100 = vmatprep.subr.bf16.mxu0 0
          %1101 = vmatpush1.bf16.msra.mxu0 %v1081
          %1102 = vmatprep.subr.bf16.mxu0 0
          %1103 = vmatpush1.bf16.msra.mxu0 %v1082
          %1104 = vmatprep.subr.bf16.mxu0 0
          %1105 = vmatpush1.bf16.msra.mxu0 %v1083
          %1106 = vmatprep.subr.bf16.mxu0 0
          %1107 = vmatpush1.bf16.msra.mxu0 %v1084
          %1108 = vmatprep.subr.bf16.mxu0 0
          %1109 = vmatpush1.bf16.msra.mxu0 %v1085
          %1110 = vmatprep.subr.bf16.mxu0 0
          %1111 = vmatpush1.bf16.msra.mxu0 0
          %1112 = vmatprep.subr.bf16.mxu0 0
          %1113 = vmatpush1.bf16.msra.mxu0 0
          %1114 = vmatprep.subr.bf16.mxu0 0
          %1115 = vmatpush1.bf16.msra.mxu0 0
          %1116 = vmatprep.subr.bf16.mxu0 0
          %1117 = vmatpush1.bf16.msra.mxu0 0
          %1118 = vmatprep.subr.bf16.mxu0 0
          %1119 = vmatpush1.bf16.msra.mxu0 0
          %1120 = vmatprep.subr.bf16.mxu0 0
          %1121 = vmatpush1.bf16.msra.mxu0 0
          %1122 = vmatprep.subr.bf16.mxu0 0
          %1123 = vmatpush1.bf16.msra.mxu0 0
          %1124 = vmatprep.subr.bf16.mxu0 0
          %1125 = vmatpush1.bf16.msra.mxu0 0
          %1126 = vmatprep.mubr.bf16.mxu0 0
          %1127 = vmatmul.mubr.bf16.gmra.mrb[0].mxu0 %v1022
          %v1128 = vpop.f32.mrb[0].mxu0
          %v1129 = vadd.f32 %v1044, %v1128
          %v1130 = vpop.f32.mrb[0].mxu0
          %v1131 = vpop.f32.mrb[0].mxu0
          %v1132 = vpop.f32.mrb[0].mxu0
          %1133 = vdwg.mxu0
          %v1134 = vmax.f32 %v1129, 0.0
          %v1135 = vpack.c.bf16 %v1134, %v1134
          %1136 = vst [vmem:[#allocation2 + $0x5] sm:$0x1] %v1135
          %v1137 = vld [vmem:[#allocation3 + $0x6] sm:$0x1]
          %v1138 = vld [vmem:[#allocation6] sm:$0xf]
          %v1139 = vld [vmem:[#allocation6 + $0x4] sm:$0xf]
          %v1140 = vld [vmem:[#allocation6 + $0x8] sm:$0xf]
          %v1141 = vld [vmem:[#allocation6 + $0xc] sm:$0xf]
          %v1142 = vld [vmem:[#allocation6 + $0x10] sm:$0xf]
          %v1143 = vld [vmem:[#allocation6 + $0x14] sm:$0xf]
          %v1144 = vld [vmem:[#allocation6 + $0x18] sm:$0xf]
          %v1145 = vld [vmem:[#allocation6 + $0x1c] sm:$0xf]
          %v1146 = vld [vmem:[#allocation6 + $0x20] sm:$0xf]
          %v1147 = vld [vmem:[#allocation6 + $0x24] sm:$0xf]
          %v1148 = vld [vmem:[#allocation6 + $0x28] sm:$0xf]
          %v1149 = vld [vmem:[#allocation6 + $0x2c] sm:$0xf]
          %v1150 = vld [vmem:[#allocation6 + $0x30] sm:$0xf]
          %v1151 = vld [vmem:[#allocation6 + $0x34] sm:$0xf]
          %v1152 = vld [vmem:[#allocation6 + $0x38] sm:$0xf]
          %v1153 = vld [vmem:[#allocation6 + $0x3c] sm:$0xf]
          %v1154 = vld [vmem:[#allocation8] sm:$0x1]
          %v1156 = vlaneseq
          %v1157 = vshrl.u32 %v1156, 7
          %v1158 = vsub.s32 0, %v1157
          %v1159 = vrot.slane %v1154, %v1158
          %v1177 = vunpack.c.l.b16 %v1138
          %v1178 = vunpack.c.l.b16 %v1139
          %v1179 = vunpack.c.l.b16 %v1140
          %v1180 = vunpack.c.l.b16 %v1141
          %v1181 = vunpack.c.l.b16 %v1142
          %v1182 = vunpack.c.l.b16 %v1143
          %v1183 = vunpack.c.l.b16 %v1144
          %v1184 = vunpack.c.l.b16 %v1145
          %v1185 = vunpack.c.l.b16 %v1146
          %v1186 = vunpack.c.l.b16 %v1147
          %v1187 = vunpack.c.l.b16 %v1148
          %v1188 = vunpack.c.l.b16 %v1149
          %v1189 = vunpack.c.l.b16 %v1150
          %v1190 = vunpack.c.l.b16 %v1151
          %v1191 = vunpack.c.l.b16 %v1152
          %v1192 = vunpack.c.l.b16 %v1153
          %v1193 = vpack.c.b16 %v1178, %v1177
          %v1194 = vpack.c.b16 %v1180, %v1179
          %v1195 = vpack.c.b16 %v1182, %v1181
          %v1196 = vpack.c.b16 %v1184, %v1183
          %v1197 = vpack.c.b16 %v1186, %v1185
          %v1198 = vpack.c.b16 %v1188, %v1187
          %v1199 = vpack.c.b16 %v1190, %v1189
          %v1200 = vpack.c.b16 %v1192, %v1191
          %1209 = vmatprep.subr.bf16.mxu0 0
          %1210 = vmatpush1.bf16.msra.mxu0 %v1193
          %1211 = vmatprep.subr.bf16.mxu0 0
          %1212 = vmatpush1.bf16.msra.mxu0 %v1194
          %1213 = vmatprep.subr.bf16.mxu0 0
          %1214 = vmatpush1.bf16.msra.mxu0 %v1195
          %1215 = vmatprep.subr.bf16.mxu0 0
          %1216 = vmatpush1.bf16.msra.mxu0 %v1196
          %1217 = vmatprep.subr.bf16.mxu0 0
          %1218 = vmatpush1.bf16.msra.mxu0 %v1197
          %1219 = vmatprep.subr.bf16.mxu0 0
          %1220 = vmatpush1.bf16.msra.mxu0 %v1198
          %1221 = vmatprep.subr.bf16.mxu0 0
          %1222 = vmatpush1.bf16.msra.mxu0 %v1199
          %1223 = vmatprep.subr.bf16.mxu0 0
          %1224 = vmatpush1.bf16.msra.mxu0 %v1200
          %1225 = vmatprep.subr.bf16.mxu0 0
          %1226 = vmatpush1.bf16.msra.mxu0 0
          %1227 = vmatprep.subr.bf16.mxu0 0
          %1228 = vmatpush1.bf16.msra.mxu0 0
          %1229 = vmatprep.subr.bf16.mxu0 0
          %1230 = vmatpush1.bf16.msra.mxu0 0
          %1231 = vmatprep.subr.bf16.mxu0 0
          %1232 = vmatpush1.bf16.msra.mxu0 0
          %1233 = vmatprep.subr.bf16.mxu0 0
          %1234 = vmatpush1.bf16.msra.mxu0 0
          %1235 = vmatprep.subr.bf16.mxu0 0
          %1236 = vmatpush1.bf16.msra.mxu0 0
          %1237 = vmatprep.subr.bf16.mxu0 0
          %1238 = vmatpush1.bf16.msra.mxu0 0
          %1239 = vmatprep.subr.bf16.mxu0 0
          %1240 = vmatpush1.bf16.msra.mxu0 0
          %1241 = vmatprep.mubr.bf16.mxu0 0
          %1242 = vmatmul.mubr.bf16.gmra.mrb[0].mxu0 %v1137
          %v1243 = vpop.f32.mrb[0].mxu0
          %v1244 = vadd.f32 %v1159, %v1243
          %v1245 = vpop.f32.mrb[0].mxu0
          %v1246 = vpop.f32.mrb[0].mxu0
          %v1247 = vpop.f32.mrb[0].mxu0
          %1248 = vdwg.mxu0
          %v1249 = vmax.f32 %v1244, 0.0
          %v1250 = vpack.c.bf16 %v1249, %v1249
          %1251 = vst [vmem:[#allocation2 + $0x6] sm:$0x1] %v1250
          %v1252 = vld [vmem:[#allocation3 + $0x7] sm:$0x1]
          %v1253 = vld [vmem:[#allocation6] sm:$0xf]
          %v1254 = vld [vmem:[#allocation6 + $0x4] sm:$0xf]
          %v1255 = vld [vmem:[#allocation6 + $0x8] sm:$0xf]
          %v1256 = vld [vmem:[#allocation6 + $0xc] sm:$0xf]
          %v1257 = vld [vmem:[#allocation6 + $0x10] sm:$0xf]
          %v1258 = vld [vmem:[#allocation6 + $0x14] sm:$0xf]
          %v1259 = vld [vmem:[#allocation6 + $0x18] sm:$0xf]
          %v1260 = vld [vmem:[#allocation6 + $0x1c] sm:$0xf]
          %v1261 = vld [vmem:[#allocation6 + $0x20] sm:$0xf]
          %v1262 = vld [vmem:[#allocation6 + $0x24] sm:$0xf]
          %v1263 = vld [vmem:[#allocation6 + $0x28] sm:$0xf]
          %v1264 = vld [vmem:[#allocation6 + $0x2c] sm:$0xf]
          %v1265 = vld [vmem:[#allocation6 + $0x30] sm:$0xf]
          %v1266 = vld [vmem:[#allocation6 + $0x34] sm:$0xf]
          %v1267 = vld [vmem:[#allocation6 + $0x38] sm:$0xf]
          %v1268 = vld [vmem:[#allocation6 + $0x3c] sm:$0xf]
          %v1269 = vld [vmem:[#allocation8] sm:$0x1]
          %v1271 = vlaneseq
          %v1272 = vshrl.u32 %v1271, 7
          %v1273 = vsub.s32 0, %v1272
          %v1274 = vrot.slane %v1269, %v1273
          %v1292 = vunpack.c.l.b16 %v1253
          %v1293 = vunpack.c.l.b16 %v1254
          %v1294 = vunpack.c.l.b16 %v1255
          %v1295 = vunpack.c.l.b16 %v1256
          %v1296 = vunpack.c.l.b16 %v1257
          %v1297 = vunpack.c.l.b16 %v1258
          %v1298 = vunpack.c.l.b16 %v1259
          %v1299 = vunpack.c.l.b16 %v1260
          %v1300 = vunpack.c.l.b16 %v1261
          %v1301 = vunpack.c.l.b16 %v1262
          %v1302 = vunpack.c.l.b16 %v1263
          %v1303 = vunpack.c.l.b16 %v1264
          %v1304 = vunpack.c.l.b16 %v1265
          %v1305 = vunpack.c.l.b16 %v1266
          %v1306 = vunpack.c.l.b16 %v1267
          %v1307 = vunpack.c.l.b16 %v1268
          %v1308 = vpack.c.b16 %v1293, %v1292
          %v1309 = vpack.c.b16 %v1295, %v1294
          %v1310 = vpack.c.b16 %v1297, %v1296
          %v1311 = vpack.c.b16 %v1299, %v1298
          %v1312 = vpack.c.b16 %v1301, %v1300
          %v1313 = vpack.c.b16 %v1303, %v1302
          %v1314 = vpack.c.b16 %v1305, %v1304
          %v1315 = vpack.c.b16 %v1307, %v1306
          %1324 = vmatprep.subr.bf16.mxu0 0
          %1325 = vmatpush1.bf16.msra.mxu0 %v1308
          %1326 = vmatprep.subr.bf16.mxu0 0
          %1327 = vmatpush1.bf16.msra.mxu0 %v1309
          %1328 = vmatprep.subr.bf16.mxu0 0
          %1329 = vmatpush1.bf16.msra.mxu0 %v1310
          %1330 = vmatprep.subr.bf16.mxu0 0
          %1331 = vmatpush1.bf16.msra.mxu0 %v1311
          %1332 = vmatprep.subr.bf16.mxu0 0
          %1333 = vmatpush1.bf16.msra.mxu0 %v1312
          %1334 = vmatprep.subr.bf16.mxu0 0
          %1335 = vmatpush1.bf16.msra.mxu0 %v1313
          %1336 = vmatprep.subr.bf16.mxu0 0
          %1337 = vmatpush1.bf16.msra.mxu0 %v1314
          %1338 = vmatprep.subr.bf16.mxu0 0
          %1339 = vmatpush1.bf16.msra.mxu0 %v1315
          %1340 = vmatprep.subr.bf16.mxu0 0
          %1341 = vmatpush1.bf16.msra.mxu0 0
          %1342 = vmatprep.subr.bf16.mxu0 0
          %1343 = vmatpush1.bf16.msra.mxu0 0
          %1344 = vmatprep.subr.bf16.mxu0 0
          %1345 = vmatpush1.bf16.msra.mxu0 0
          %1346 = vmatprep.subr.bf16.mxu0 0
          %1347 = vmatpush1.bf16.msra.mxu0 0
          %1348 = vmatprep.subr.bf16.mxu0 0
          %1349 = vmatpush1.bf16.msra.mxu0 0
          %1350 = vmatprep.subr.bf16.mxu0 0
          %1351 = vmatpush1.bf16.msra.mxu0 0
          %1352 = vmatprep.subr.bf16.mxu0 0
          %1353 = vmatpush1.bf16.msra.mxu0 0
          %1354 = vmatprep.subr.bf16.mxu0 0
          %1355 = vmatpush1.bf16.msra.mxu0 0
          %1356 = vmatprep.mubr.bf16.mxu0 0
          %1357 = vmatmul.mubr.bf16.gmra.mrb[0].mxu0 %v1252
          %v1358 = vpop.f32.mrb[0].mxu0
          %v1359 = vadd.f32 %v1274, %v1358
          %v1360 = vpop.f32.mrb[0].mxu0
          %v1361 = vpop.f32.mrb[0].mxu0
          %v1362 = vpop.f32.mrb[0].mxu0
          %1363 = vdwg.mxu0
          %v1364 = vmax.f32 %v1359, 0.0
          %v1365 = vpack.c.bf16 %v1364, %v1364
          %1366 = vst [vmem:[#allocation2 + $0x7] sm:$0x1] %v1365
          %v1367 = vld [vmem:[#allocation3 + $0x8] sm:$0x1]
          %v1368 = vld [vmem:[#allocation6] sm:$0xf]
          %v1369 = vld [vmem:[#allocation6 + $0x4] sm:$0xf]
          %v1370 = vld [vmem:[#allocation6 + $0x8] sm:$0xf]
          %v1371 = vld [vmem:[#allocation6 + $0xc] sm:$0xf]
          %v1372 = vld [vmem:[#allocation6 + $0x10] sm:$0xf]
          %v1373 = vld [vmem:[#allocation6 + $0x14] sm:$0xf]
          %v1374 = vld [vmem:[#allocation6 + $0x18] sm:$0xf]
          %v1375 = vld [vmem:[#allocation6 + $0x1c] sm:$0xf]
          %v1376 = vld [vmem:[#allocation6 + $0x20] sm:$0xf]
          %v1377 = vld [vmem:[#allocation6 + $0x24] sm:$0xf]
          %v1378 = vld [vmem:[#allocation6 + $0x28] sm:$0xf]
          %v1379 = vld [vmem:[#allocation6 + $0x2c] sm:$0xf]
          %v1380 = vld [vmem:[#allocation6 + $0x30] sm:$0xf]
          %v1381 = vld [vmem:[#allocation6 + $0x34] sm:$0xf]
          %v1382 = vld [vmem:[#allocation6 + $0x38] sm:$0xf]
          %v1383 = vld [vmem:[#allocation6 + $0x3c] sm:$0xf]
          %v1384 = vld [vmem:[#allocation8] sm:$0x1]
          %v1386 = vlaneseq
          %v1387 = vshrl.u32 %v1386, 7
          %v1388 = vsub.s32 0, %v1387
          %v1389 = vrot.slane %v1384, %v1388
          %v1407 = vunpack.c.l.b16 %v1368
          %v1408 = vunpack.c.l.b16 %v1369
          %v1409 = vunpack.c.l.b16 %v1370
          %v1410 = vunpack.c.l.b16 %v1371
          %v1411 = vunpack.c.l.b16 %v1372
          %v1412 = vunpack.c.l.b16 %v1373
          %v1413 = vunpack.c.l.b16 %v1374
          %v1414 = vunpack.c.l.b16 %v1375
          %v1415 = vunpack.c.l.b16 %v1376
          %v1416 = vunpack.c.l.b16 %v1377
          %v1417 = vunpack.c.l.b16 %v1378
          %v1418 = vunpack.c.l.b16 %v1379
          %v1419 = vunpack.c.l.b16 %v1380
          %v1420 = vunpack.c.l.b16 %v1381
          %v1421 = vunpack.c.l.b16 %v1382
          %v1422 = vunpack.c.l.b16 %v1383
          %v1423 = vpack.c.b16 %v1408, %v1407
          %v1424 = vpack.c.b16 %v1410, %v1409
          %v1425 = vpack.c.b16 %v1412, %v1411
          %v1426 = vpack.c.b16 %v1414, %v1413
          %v1427 = vpack.c.b16 %v1416, %v1415
          %v1428 = vpack.c.b16 %v1418, %v1417
          %v1429 = vpack.c.b16 %v1420, %v1419
          %v1430 = vpack.c.b16 %v1422, %v1421
          %1439 = vmatprep.subr.bf16.mxu0 0
          %1440 = vmatpush1.bf16.msra.mxu0 %v1423
          %1441 = vmatprep.subr.bf16.mxu0 0
          %1442 = vmatpush1.bf16.msra.mxu0 %v1424
          %1443 = vmatprep.subr.bf16.mxu0 0
          %1444 = vmatpush1.bf16.msra.mxu0 %v1425
          %1445 = vmatprep.subr.bf16.mxu0 0
          %1446 = vmatpush1.bf16.msra.mxu0 %v1426
          %1447 = vmatprep.subr.bf16.mxu0 0
          %1448 = vmatpush1.bf16.msra.mxu0 %v1427
          %1449 = vmatprep.subr.bf16.mxu0 0
          %1450 = vmatpush1.bf16.msra.mxu0 %v1428
          %1451 = vmatprep.subr.bf16.mxu0 0
          %1452 = vmatpush1.bf16.msra.mxu0 %v1429
          %1453 = vmatprep.subr.bf16.mxu0 0
          %1454 = vmatpush1.bf16.msra.mxu0 %v1430
          %1455 = vmatprep.subr.bf16.mxu0 0
          %1456 = vmatpush1.bf16.msra.mxu0 0
          %1457 = vmatprep.subr.bf16.mxu0 0
          %1458 = vmatpush1.bf16.msra.mxu0 0
          %1459 = vmatprep.subr.bf16.mxu0 0
          %1460 = vmatpush1.bf16.msra.mxu0 0
          %1461 = vmatprep.subr.bf16.mxu0 0
          %1462 = vmatpush1.bf16.msra.mxu0 0
          %1463 = vmatprep.subr.bf16.mxu0 0
          %1464 = vmatpush1.bf16.msra.mxu0 0
          %1465 = vmatprep.subr.bf16.mxu0 0
          %1466 = vmatpush1.bf16.msra.mxu0 0
          %1467 = vmatprep.subr.bf16.mxu0 0
          %1468 = vmatpush1.bf16.msra.mxu0 0
          %1469 = vmatprep.subr.bf16.mxu0 0
          %1470 = vmatpush1.bf16.msra.mxu0 0
          %1471 = vmatprep.mubr.bf16.mxu0 0
          %1472 = vmatmul.mubr.bf16.gmra.mrb[0].mxu0 %v1367
          %v1473 = vpop.f32.mrb[0].mxu0
          %v1474 = vadd.f32 %v1389, %v1473
          %v1475 = vpop.f32.mrb[0].mxu0
          %v1476 = vpop.f32.mrb[0].mxu0
          %v1477 = vpop.f32.mrb[0].mxu0
          %1478 = vdwg.mxu0
          %v1479 = vmax.f32 %v1474, 0.0
          %v1480 = vpack.c.bf16 %v1479, %v1479
          %1481 = vst [vmem:[#allocation2 + $0x8] sm:$0x1] %v1480
          %v1482 = vld [vmem:[#allocation3 + $0x9] sm:$0x1]
          %v1483 = vld [vmem:[#allocation6] sm:$0xf]
          %v1484 = vld [vmem:[#allocation6 + $0x4] sm:$0xf]
          %v1485 = vld [vmem:[#allocation6 + $0x8] sm:$0xf]
          %v1486 = vld [vmem:[#allocation6 + $0xc] sm:$0xf]
          %v1487 = vld [vmem:[#allocation6 + $0x10] sm:$0xf]
          %v1488 = vld [vmem:[#allocation6 + $0x14] sm:$0xf]
          %v1489 = vld [vmem:[#allocation6 + $0x18] sm:$0xf]
          %v1490 = vld [vmem:[#allocation6 + $0x1c] sm:$0xf]
          %v1491 = vld [vmem:[#allocation6 + $0x20] sm:$0xf]
          %v1492 = vld [vmem:[#allocation6 + $0x24] sm:$0xf]
          %v1493 = vld [vmem:[#allocation6 + $0x28] sm:$0xf]
          %v1494 = vld [vmem:[#allocation6 + $0x2c] sm:$0xf]
          %v1495 = vld [vmem:[#allocation6 + $0x30] sm:$0xf]
          %v1496 = vld [vmem:[#allocation6 + $0x34] sm:$0xf]
          %v1497 = vld [vmem:[#allocation6 + $0x38] sm:$0xf]
          %v1498 = vld [vmem:[#allocation6 + $0x3c] sm:$0xf]
          %v1499 = vld [vmem:[#allocation8] sm:$0x1]
          %v1501 = vlaneseq
          %v1502 = vshrl.u32 %v1501, 7
          %v1503 = vsub.s32 0, %v1502
          %v1504 = vrot.slane %v1499, %v1503
          %v1522 = vunpack.c.l.b16 %v1483
          %v1523 = vunpack.c.l.b16 %v1484
          %v1524 = vunpack.c.l.b16 %v1485
          %v1525 = vunpack.c.l.b16 %v1486
          %v1526 = vunpack.c.l.b16 %v1487
          %v1527 = vunpack.c.l.b16 %v1488
          %v1528 = vunpack.c.l.b16 %v1489
          %v1529 = vunpack.c.l.b16 %v1490
          %v1530 = vunpack.c.l.b16 %v1491
          %v1531 = vunpack.c.l.b16 %v1492
          %v1532 = vunpack.c.l.b16 %v1493
          %v1533 = vunpack.c.l.b16 %v1494
          %v1534 = vunpack.c.l.b16 %v1495
          %v1535 = vunpack.c.l.b16 %v1496
          %v1536 = vunpack.c.l.b16 %v1497
          %v1537 = vunpack.c.l.b16 %v1498
          %v1538 = vpack.c.b16 %v1523, %v1522
          %v1539 = vpack.c.b16 %v1525, %v1524
          %v1540 = vpack.c.b16 %v1527, %v1526
          %v1541 = vpack.c.b16 %v1529, %v1528
          %v1542 = vpack.c.b16 %v1531, %v1530
          %v1543 = vpack.c.b16 %v1533, %v1532
          %v1544 = vpack.c.b16 %v1535, %v1534
          %v1545 = vpack.c.b16 %v1537, %v1536
          %1554 = vmatprep.subr.bf16.mxu0 0
          %1555 = vmatpush1.bf16.msra.mxu0 %v1538
          %1556 = vmatprep.subr.bf16.mxu0 0
          %1557 = vmatpush1.bf16.msra.mxu0 %v1539
          %1558 = vmatprep.subr.bf16.mxu0 0
          %1559 = vmatpush1.bf16.msra.mxu0 %v1540
          %1560 = vmatprep.subr.bf16.mxu0 0
          %1561 = vmatpush1.bf16.msra.mxu0 %v1541
          %1562 = vmatprep.subr.bf16.mxu0 0
          %1563 = vmatpush1.bf16.msra.mxu0 %v1542
          %1564 = vmatprep.subr.bf16.mxu0 0
          %1565 = vmatpush1.bf16.msra.mxu0 %v1543
          %1566 = vmatprep.subr.bf16.mxu0 0
          %1567 = vmatpush1.bf16.msra.mxu0 %v1544
          %1568 = vmatprep.subr.bf16.mxu0 0
          %1569 = vmatpush1.bf16.msra.mxu0 %v1545
          %1570 = vmatprep.subr.bf16.mxu0 0
          %1571 = vmatpush1.bf16.msra.mxu0 0
          %1572 = vmatprep.subr.bf16.mxu0 0
          %1573 = vmatpush1.bf16.msra.mxu0 0
          %1574 = vmatprep.subr.bf16.mxu0 0
          %1575 = vmatpush1.bf16.msra.mxu0 0
          %1576 = vmatprep.subr.bf16.mxu0 0
          %1577 = vmatpush1.bf16.msra.mxu0 0
          %1578 = vmatprep.subr.bf16.mxu0 0
          %1579 = vmatpush1.bf16.msra.mxu0 0
          %1580 = vmatprep.subr.bf16.mxu0 0
          %1581 = vmatpush1.bf16.msra.mxu0 0
          %1582 = vmatprep.subr.bf16.mxu0 0
          %1583 = vmatpush1.bf16.msra.mxu0 0
          %1584 = vmatprep.subr.bf16.mxu0 0
          %1585 = vmatpush1.bf16.msra.mxu0 0
          %1586 = vmatprep.mubr.bf16.mxu0 0
          %1587 = vmatmul.mubr.bf16.gmra.mrb[0].mxu0 %v1482
          %v1588 = vpop.f32.mrb[0].mxu0
          %v1589 = vadd.f32 %v1504, %v1588
          %v1590 = vpop.f32.mrb[0].mxu0
          %v1591 = vpop.f32.mrb[0].mxu0
          %v1592 = vpop.f32.mrb[0].mxu0
          %1593 = vdwg.mxu0
          %v1594 = vmax.f32 %v1589, 0.0
          %v1595 = vpack.c.bf16 %v1594, %v1594
          %1596 = vst [vmem:[#allocation2 + $0x9] sm:$0x1] %v1595
          %v1597 = vld [vmem:[#allocation3 + $0xa] sm:$0x1]
          %v1598 = vld [vmem:[#allocation6] sm:$0xf]
          %v1599 = vld [vmem:[#allocation6 + $0x4] sm:$0xf]
          %v1600 = vld [vmem:[#allocation6 + $0x8] sm:$0xf]
          %v1601 = vld [vmem:[#allocation6 + $0xc] sm:$0xf]
          %v1602 = vld [vmem:[#allocation6 + $0x10] sm:$0xf]
          %v1603 = vld [vmem:[#allocation6 + $0x14] sm:$0xf]
          %v1604 = vld [vmem:[#allocation6 + $0x18] sm:$0xf]
          %v1605 = vld [vmem:[#allocation6 + $0x1c] sm:$0xf]
          %v1606 = vld [vmem:[#allocation6 + $0x20] sm:$0xf]
          %v1607 = vld [vmem:[#allocation6 + $0x24] sm:$0xf]
          %v1608 = vld [vmem:[#allocation6 + $0x28] sm:$0xf]
          %v1609 = vld [vmem:[#allocation6 + $0x2c] sm:$0xf]
          %v1610 = vld [vmem:[#allocation6 + $0x30] sm:$0xf]
          %v1611 = vld [vmem:[#allocation6 + $0x34] sm:$0xf]
          %v1612 = vld [vmem:[#allocation6 + $0x38] sm:$0xf]
          %v1613 = vld [vmem:[#allocation6 + $0x3c] sm:$0xf]
          %v1614 = vld [vmem:[#allocation8] sm:$0x1]
          %v1616 = vlaneseq
          %v1617 = vshrl.u32 %v1616, 7
          %v1618 = vsub.s32 0, %v1617
          %v1619 = vrot.slane %v1614, %v1618
          %v1637 = vunpack.c.l.b16 %v1598
          %v1638 = vunpack.c.l.b16 %v1599
          %v1639 = vunpack.c.l.b16 %v1600
          %v1640 = vunpack.c.l.b16 %v1601
          %v1641 = vunpack.c.l.b16 %v1602
          %v1642 = vunpack.c.l.b16 %v1603
          %v1643 = vunpack.c.l.b16 %v1604
          %v1644 = vunpack.c.l.b16 %v1605
          %v1645 = vunpack.c.l.b16 %v1606
          %v1646 = vunpack.c.l.b16 %v1607
          %v1647 = vunpack.c.l.b16 %v1608
          %v1648 = vunpack.c.l.b16 %v1609
          %v1649 = vunpack.c.l.b16 %v1610
          %v1650 = vunpack.c.l.b16 %v1611
          %v1651 = vunpack.c.l.b16 %v1612
          %v1652 = vunpack.c.l.b16 %v1613
          %v1653 = vpack.c.b16 %v1638, %v1637
          %v1654 = vpack.c.b16 %v1640, %v1639
          %v1655 = vpack.c.b16 %v1642, %v1641
          %v1656 = vpack.c.b16 %v1644, %v1643
          %v1657 = vpack.c.b16 %v1646, %v1645
          %v1658 = vpack.c.b16 %v1648, %v1647
          %v1659 = vpack.c.b16 %v1650, %v1649
          %v1660 = vpack.c.b16 %v1652, %v1651
          %1669 = vmatprep.subr.bf16.mxu0 0
          %1670 = vmatpush1.bf16.msra.mxu0 %v1653
          %1671 = vmatprep.subr.bf16.mxu0 0
          %1672 = vmatpush1.bf16.msra.mxu0 %v1654
          %1673 = vmatprep.subr.bf16.mxu0 0
          %1674 = vmatpush1.bf16.msra.mxu0 %v1655
          %1675 = vmatprep.subr.bf16.mxu0 0
          %1676 = vmatpush1.bf16.msra.mxu0 %v1656
          %1677 = vmatprep.subr.bf16.mxu0 0
          %1678 = vmatpush1.bf16.msra.mxu0 %v1657
          %1679 = vmatprep.subr.bf16.mxu0 0
          %1680 = vmatpush1.bf16.msra.mxu0 %v1658
          %1681 = vmatprep.subr.bf16.mxu0 0
          %1682 = vmatpush1.bf16.msra.mxu0 %v1659
          %1683 = vmatprep.subr.bf16.mxu0 0
          %1684 = vmatpush1.bf16.msra.mxu0 %v1660
          %1685 = vmatprep.subr.bf16.mxu0 0
          %1686 = vmatpush1.bf16.msra.mxu0 0
          %1687 = vmatprep.subr.bf16.mxu0 0
          %1688 = vmatpush1.bf16.msra.mxu0 0
          %1689 = vmatprep.subr.bf16.mxu0 0
          %1690 = vmatpush1.bf16.msra.mxu0 0
          %1691 = vmatprep.subr.bf16.mxu0 0
          %1692 = vmatpush1.bf16.msra.mxu0 0
          %1693 = vmatprep.subr.bf16.mxu0 0
          %1694 = vmatpush1.bf16.msra.mxu0 0
          %1695 = vmatprep.subr.bf16.mxu0 0
          %1696 = vmatpush1.bf16.msra.mxu0 0
          %1697 = vmatprep.subr.bf16.mxu0 0
          %1698 = vmatpush1.bf16.msra.mxu0 0
          %1699 = vmatprep.subr.bf16.mxu0 0
          %1700 = vmatpush1.bf16.msra.mxu0 0
          %1701 = vmatprep.mubr.bf16.mxu0 0
          %1702 = vmatmul.mubr.bf16.gmra.mrb[0].mxu0 %v1597
          %v1703 = vpop.f32.mrb[0].mxu0
          %v1704 = vadd.f32 %v1619, %v1703
          %v1705 = vpop.f32.mrb[0].mxu0
          %v1706 = vpop.f32.mrb[0].mxu0
          %v1707 = vpop.f32.mrb[0].mxu0
          %1708 = vdwg.mxu0
          %v1709 = vmax.f32 %v1704, 0.0
          %v1710 = vpack.c.bf16 %v1709, %v1709
          %1711 = vst [vmem:[#allocation2 + $0xa] sm:$0x1] %v1710
          %v1712 = vld [vmem:[#allocation3 + $0xb] sm:$0x1]
          %v1713 = vld [vmem:[#allocation6] sm:$0xf]
          %v1714 = vld [vmem:[#allocation6 + $0x4] sm:$0xf]
          %v1715 = vld [vmem:[#allocation6 + $0x8] sm:$0xf]
          %v1716 = vld [vmem:[#allocation6 + $0xc] sm:$0xf]
          %v1717 = vld [vmem:[#allocation6 + $0x10] sm:$0xf]
          %v1718 = vld [vmem:[#allocation6 + $0x14] sm:$0xf]
          %v1719 = vld [vmem:[#allocation6 + $0x18] sm:$0xf]
          %v1720 = vld [vmem:[#allocation6 + $0x1c] sm:$0xf]
          %v1721 = vld [vmem:[#allocation6 + $0x20] sm:$0xf]
          %v1722 = vld [vmem:[#allocation6 + $0x24] sm:$0xf]
          %v1723 = vld [vmem:[#allocation6 + $0x28] sm:$0xf]
          %v1724 = vld [vmem:[#allocation6 + $0x2c] sm:$0xf]
          %v1725 = vld [vmem:[#allocation6 + $0x30] sm:$0xf]
          %v1726 = vld [vmem:[#allocation6 + $0x34] sm:$0xf]
          %v1727 = vld [vmem:[#allocation6 + $0x38] sm:$0xf]
          %v1728 = vld [vmem:[#allocation6 + $0x3c] sm:$0xf]
          %v1729 = vld [vmem:[#allocation8] sm:$0x1]
          %v1731 = vlaneseq
          %v1732 = vshrl.u32 %v1731, 7
          %v1733 = vsub.s32 0, %v1732
          %v1734 = vrot.slane %v1729, %v1733
          %v1752 = vunpack.c.l.b16 %v1713
          %v1753 = vunpack.c.l.b16 %v1714
          %v1754 = vunpack.c.l.b16 %v1715
          %v1755 = vunpack.c.l.b16 %v1716
          %v1756 = vunpack.c.l.b16 %v1717
          %v1757 = vunpack.c.l.b16 %v1718
          %v1758 = vunpack.c.l.b16 %v1719
          %v1759 = vunpack.c.l.b16 %v1720
          %v1760 = vunpack.c.l.b16 %v1721
          %v1761 = vunpack.c.l.b16 %v1722
          %v1762 = vunpack.c.l.b16 %v1723
          %v1763 = vunpack.c.l.b16 %v1724
          %v1764 = vunpack.c.l.b16 %v1725
          %v1765 = vunpack.c.l.b16 %v1726
          %v1766 = vunpack.c.l.b16 %v1727
          %v1767 = vunpack.c.l.b16 %v1728
          %v1768 = vpack.c.b16 %v1753, %v1752
          %v1769 = vpack.c.b16 %v1755, %v1754
          %v1770 = vpack.c.b16 %v1757, %v1756
          %v1771 = vpack.c.b16 %v1759, %v1758
          %v1772 = vpack.c.b16 %v1761, %v1760
          %v1773 = vpack.c.b16 %v1763, %v1762
          %v1774 = vpack.c.b16 %v1765, %v1764
          %v1775 = vpack.c.b16 %v1767, %v1766
          %1784 = vmatprep.subr.bf16.mxu0 0
          %1785 = vmatpush1.bf16.msra.mxu0 %v1768
          %1786 = vmatprep.subr.bf16.mxu0 0
          %1787 = vmatpush1.bf16.msra.mxu0 %v1769
          %1788 = vmatprep.subr.bf16.mxu0 0
          %1789 = vmatpush1.bf16.msra.mxu0 %v1770
          %1790 = vmatprep.subr.bf16.mxu0 0
          %1791 = vmatpush1.bf16.msra.mxu0 %v1771
          %1792 = vmatprep.subr.bf16.mxu0 0
          %1793 = vmatpush1.bf16.msra.mxu0 %v1772
          %1794 = vmatprep.subr.bf16.mxu0 0
          %1795 = vmatpush1.bf16.msra.mxu0 %v1773
          %1796 = vmatprep.subr.bf16.mxu0 0
          %1797 = vmatpush1.bf16.msra.mxu0 %v1774
          %1798 = vmatprep.subr.bf16.mxu0 0
          %1799 = vmatpush1.bf16.msra.mxu0 %v1775
          %1800 = vmatprep.subr.bf16.mxu0 0
          %1801 = vmatpush1.bf16.msra.mxu0 0
          %1802 = vmatprep.subr.bf16.mxu0 0
          %1803 = vmatpush1.bf16.msra.mxu0 0
          %1804 = vmatprep.subr.bf16.mxu0 0
          %1805 = vmatpush1.bf16.msra.mxu0 0
          %1806 = vmatprep.subr.bf16.mxu0 0
          %1807 = vmatpush1.bf16.msra.mxu0 0
          %1808 = vmatprep.subr.bf16.mxu0 0
          %1809 = vmatpush1.bf16.msra.mxu0 0
          %1810 = vmatprep.subr.bf16.mxu0 0
          %1811 = vmatpush1.bf16.msra.mxu0 0
          %1812 = vmatprep.subr.bf16.mxu0 0
          %1813 = vmatpush1.bf16.msra.mxu0 0
          %1814 = vmatprep.subr.bf16.mxu0 0
          %1815 = vmatpush1.bf16.msra.mxu0 0
          %1816 = vmatprep.mubr.bf16.mxu0 0
          %1817 = vmatmul.mubr.bf16.gmra.mrb[0].mxu0 %v1712
          %v1818 = vpop.f32.mrb[0].mxu0
          %v1819 = vadd.f32 %v1734, %v1818
          %v1820 = vpop.f32.mrb[0].mxu0
          %v1821 = vpop.f32.mrb[0].mxu0
          %v1822 = vpop.f32.mrb[0].mxu0
          %1823 = vdwg.mxu0
          %v1824 = vmax.f32 %v1819, 0.0
          %v1825 = vpack.c.bf16 %v1824, %v1824
          %1826 = vst [vmem:[#allocation2 + $0xb] sm:$0x1] %v1825
          %v1827 = vld [vmem:[#allocation3 + $0xc] sm:$0x1]
          %v1828 = vld [vmem:[#allocation6] sm:$0xf]
          %v1829 = vld [vmem:[#allocation6 + $0x4] sm:$0xf]
          %v1830 = vld [vmem:[#allocation6 + $0x8] sm:$0xf]
          %v1831 = vld [vmem:[#allocation6 + $0xc] sm:$0xf]
          %v1832 = vld [vmem:[#allocation6 + $0x10] sm:$0xf]
          %v1833 = vld [vmem:[#allocation6 + $0x14] sm:$0xf]
          %v1834 = vld [vmem:[#allocation6 + $0x18] sm:$0xf]
          %v1835 = vld [vmem:[#allocation6 + $0x1c] sm:$0xf]
          %v1836 = vld [vmem:[#allocation6 + $0x20] sm:$0xf]
          %v1837 = vld [vmem:[#allocation6 + $0x24] sm:$0xf]
          %v1838 = vld [vmem:[#allocation6 + $0x28] sm:$0xf]
          %v1839 = vld [vmem:[#allocation6 + $0x2c] sm:$0xf]
          %v1840 = vld [vmem:[#allocation6 + $0x30] sm:$0xf]
          %v1841 = vld [vmem:[#allocation6 + $0x34] sm:$0xf]
          %v1842 = vld [vmem:[#allocation6 + $0x38] sm:$0xf]
          %v1843 = vld [vmem:[#allocation6 + $0x3c] sm:$0xf]
          %v1844 = vld [vmem:[#allocation8] sm:$0x1]
          %v1846 = vlaneseq
          %v1847 = vshrl.u32 %v1846, 7
          %v1848 = vsub.s32 0, %v1847
          %v1849 = vrot.slane %v1844, %v1848
          %v1867 = vunpack.c.l.b16 %v1828
          %v1868 = vunpack.c.l.b16 %v1829
          %v1869 = vunpack.c.l.b16 %v1830
          %v1870 = vunpack.c.l.b16 %v1831
          %v1871 = vunpack.c.l.b16 %v1832
          %v1872 = vunpack.c.l.b16 %v1833
          %v1873 = vunpack.c.l.b16 %v1834
          %v1874 = vunpack.c.l.b16 %v1835
          %v1875 = vunpack.c.l.b16 %v1836
          %v1876 = vunpack.c.l.b16 %v1837
          %v1877 = vunpack.c.l.b16 %v1838
          %v1878 = vunpack.c.l.b16 %v1839
          %v1879 = vunpack.c.l.b16 %v1840
          %v1880 = vunpack.c.l.b16 %v1841
          %v1881 = vunpack.c.l.b16 %v1842
          %v1882 = vunpack.c.l.b16 %v1843
          %v1883 = vpack.c.b16 %v1868, %v1867
          %v1884 = vpack.c.b16 %v1870, %v1869
          %v1885 = vpack.c.b16 %v1872, %v1871
          %v1886 = vpack.c.b16 %v1874, %v1873
          %v1887 = vpack.c.b16 %v1876, %v1875
          %v1888 = vpack.c.b16 %v1878, %v1877
          %v1889 = vpack.c.b16 %v1880, %v1879
          %v1890 = vpack.c.b16 %v1882, %v1881
          %1899 = vmatprep.subr.bf16.mxu0 0
          %1900 = vmatpush1.bf16.msra.mxu0 %v1883
          %1901 = vmatprep.subr.bf16.mxu0 0
          %1902 = vmatpush1.bf16.msra.mxu0 %v1884
          %1903 = vmatprep.subr.bf16.mxu0 0
          %1904 = vmatpush1.bf16.msra.mxu0 %v1885
          %1905 = vmatprep.subr.bf16.mxu0 0
          %1906 = vmatpush1.bf16.msra.mxu0 %v1886
          %1907 = vmatprep.subr.bf16.mxu0 0
          %1908 = vmatpush1.bf16.msra.mxu0 %v1887
          %1909 = vmatprep.subr.bf16.mxu0 0
          %1910 = vmatpush1.bf16.msra.mxu0 %v1888
          %1911 = vmatprep.subr.bf16.mxu0 0
          %1912 = vmatpush1.bf16.msra.mxu0 %v1889
          %1913 = vmatprep.subr.bf16.mxu0 0
          %1914 = vmatpush1.bf16.msra.mxu0 %v1890
          %1915 = vmatprep.subr.bf16.mxu0 0
          %1916 = vmatpush1.bf16.msra.mxu0 0
          %1917 = vmatprep.subr.bf16.mxu0 0
          %1918 = vmatpush1.bf16.msra.mxu0 0
          %1919 = vmatprep.subr.bf16.mxu0 0
          %1920 = vmatpush1.bf16.msra.mxu0 0
          %1921 = vmatprep.subr.bf16.mxu0 0
          %1922 = vmatpush1.bf16.msra.mxu0 0
          %1923 = vmatprep.subr.bf16.mxu0 0
          %1924 = vmatpush1.bf16.msra.mxu0 0
          %1925 = vmatprep.subr.bf16.mxu0 0
          %1926 = vmatpush1.bf16.msra.mxu0 0
          %1927 = vmatprep.subr.bf16.mxu0 0
          %1928 = vmatpush1.bf16.msra.mxu0 0
          %1929 = vmatprep.subr.bf16.mxu0 0
          %1930 = vmatpush1.bf16.msra.mxu0 0
          %1931 = vmatprep.mubr.bf16.mxu0 0
          %1932 = vmatmul.mubr.bf16.gmra.mrb[0].mxu0 %v1827
          %v1933 = vpop.f32.mrb[0].mxu0
          %v1934 = vadd.f32 %v1849, %v1933
          %v1935 = vpop.f32.mrb[0].mxu0
          %v1936 = vpop.f32.mrb[0].mxu0
          %v1937 = vpop.f32.mrb[0].mxu0
          %1938 = vdwg.mxu0
          %v1939 = vmax.f32 %v1934, 0.0
          %v1940 = vpack.c.bf16 %v1939, %v1939
          %1941 = vst [vmem:[#allocation2 + $0xc] sm:$0x1] %v1940
          %v1942 = vld [vmem:[#allocation3 + $0xd] sm:$0x1]
          %v1943 = vld [vmem:[#allocation6] sm:$0xf]
          %v1944 = vld [vmem:[#allocation6 + $0x4] sm:$0xf]
          %v1945 = vld [vmem:[#allocation6 + $0x8] sm:$0xf]
          %v1946 = vld [vmem:[#allocation6 + $0xc] sm:$0xf]
          %v1947 = vld [vmem:[#allocation6 + $0x10] sm:$0xf]
          %v1948 = vld [vmem:[#allocation6 + $0x14] sm:$0xf]
          %v1949 = vld [vmem:[#allocation6 + $0x18] sm:$0xf]
          %v1950 = vld [vmem:[#allocation6 + $0x1c] sm:$0xf]
          %v1951 = vld [vmem:[#allocation6 + $0x20] sm:$0xf]
          %v1952 = vld [vmem:[#allocation6 + $0x24] sm:$0xf]
          %v1953 = vld [vmem:[#allocation6 + $0x28] sm:$0xf]
          %v1954 = vld [vmem:[#allocation6 + $0x2c] sm:$0xf]
          %v1955 = vld [vmem:[#allocation6 + $0x30] sm:$0xf]
          %v1956 = vld [vmem:[#allocation6 + $0x34] sm:$0xf]
          %v1957 = vld [vmem:[#allocation6 + $0x38] sm:$0xf]
          %v1958 = vld [vmem:[#allocation6 + $0x3c] sm:$0xf]
          %v1959 = vld [vmem:[#allocation8] sm:$0x1]
          %v1961 = vlaneseq
          %v1962 = vshrl.u32 %v1961, 7
          %v1963 = vsub.s32 0, %v1962
          %v1964 = vrot.slane %v1959, %v1963
          %v1982 = vunpack.c.l.b16 %v1943
          %v1983 = vunpack.c.l.b16 %v1944
          %v1984 = vunpack.c.l.b16 %v1945
          %v1985 = vunpack.c.l.b16 %v1946
          %v1986 = vunpack.c.l.b16 %v1947
          %v1987 = vunpack.c.l.b16 %v1948
          %v1988 = vunpack.c.l.b16 %v1949
          %v1989 = vunpack.c.l.b16 %v1950
          %v1990 = vunpack.c.l.b16 %v1951
          %v1991 = vunpack.c.l.b16 %v1952
          %v1992 = vunpack.c.l.b16 %v1953
          %v1993 = vunpack.c.l.b16 %v1954
          %v1994 = vunpack.c.l.b16 %v1955
          %v1995 = vunpack.c.l.b16 %v1956
          %v1996 = vunpack.c.l.b16 %v1957
          %v1997 = vunpack.c.l.b16 %v1958
          %v1998 = vpack.c.b16 %v1983, %v1982
          %v1999 = vpack.c.b16 %v1985, %v1984
          %v2000 = vpack.c.b16 %v1987, %v1986
          %v2001 = vpack.c.b16 %v1989, %v1988
          %v2002 = vpack.c.b16 %v1991, %v1990
          %v2003 = vpack.c.b16 %v1993, %v1992
          %v2004 = vpack.c.b16 %v1995, %v1994
          %v2005 = vpack.c.b16 %v1997, %v1996
          %2014 = vmatprep.subr.bf16.mxu0 0
          %2015 = vmatpush1.bf16.msra.mxu0 %v1998
          %2016 = vmatprep.subr.bf16.mxu0 0
          %2017 = vmatpush1.bf16.msra.mxu0 %v1999
          %2018 = vmatprep.subr.bf16.mxu0 0
          %2019 = vmatpush1.bf16.msra.mxu0 %v2000
          %2020 = vmatprep.subr.bf16.mxu0 0
          %2021 = vmatpush1.bf16.msra.mxu0 %v2001
          %2022 = vmatprep.subr.bf16.mxu0 0
          %2023 = vmatpush1.bf16.msra.mxu0 %v2002
          %2024 = vmatprep.subr.bf16.mxu0 0
          %2025 = vmatpush1.bf16.msra.mxu0 %v2003
          %2026 = vmatprep.subr.bf16.mxu0 0
          %2027 = vmatpush1.bf16.msra.mxu0 %v2004
          %2028 = vmatprep.subr.bf16.mxu0 0
          %2029 = vmatpush1.bf16.msra.mxu0 %v2005
          %2030 = vmatprep.subr.bf16.mxu0 0
          %2031 = vmatpush1.bf16.msra.mxu0 0
          %2032 = vmatprep.subr.bf16.mxu0 0
          %2033 = vmatpush1.bf16.msra.mxu0 0
          %2034 = vmatprep.subr.bf16.mxu0 0
          %2035 = vmatpush1.bf16.msra.mxu0 0
          %2036 = vmatprep.subr.bf16.mxu0 0
          %2037 = vmatpush1.bf16.msra.mxu0 0
          %2038 = vmatprep.subr.bf16.mxu0 0
          %2039 = vmatpush1.bf16.msra.mxu0 0
          %2040 = vmatprep.subr.bf16.mxu0 0
          %2041 = vmatpush1.bf16.msra.mxu0 0
          %2042 = vmatprep.subr.bf16.mxu0 0
          %2043 = vmatpush1.bf16.msra.mxu0 0
          %2044 = vmatprep.subr.bf16.mxu0 0
          %2045 = vmatpush1.bf16.msra.mxu0 0
          %2046 = vmatprep.mubr.bf16.mxu0 0
          %2047 = vmatmul.mubr.bf16.gmra.mrb[0].mxu0 %v1942
          %v2048 = vpop.f32.mrb[0].mxu0
          %v2049 = vadd.f32 %v1964, %v2048
          %v2050 = vpop.f32.mrb[0].mxu0
          %v2051 = vpop.f32.mrb[0].mxu0
          %v2052 = vpop.f32.mrb[0].mxu0
          %2053 = vdwg.mxu0
          %v2054 = vmax.f32 %v2049, 0.0
          %v2055 = vpack.c.bf16 %v2054, %v2054
          %2056 = vst [vmem:[#allocation2 + $0xd] sm:$0x1] %v2055
          %v2057 = vld [vmem:[#allocation3 + $0xe] sm:$0x1]
          %v2058 = vld [vmem:[#allocation6] sm:$0xf]
          %v2059 = vld [vmem:[#allocation6 + $0x4] sm:$0xf]
          %v2060 = vld [vmem:[#allocation6 + $0x8] sm:$0xf]
          %v2061 = vld [vmem:[#allocation6 + $0xc] sm:$0xf]
          %v2062 = vld [vmem:[#allocation6 + $0x10] sm:$0xf]
          %v2063 = vld [vmem:[#allocation6 + $0x14] sm:$0xf]
          %v2064 = vld [vmem:[#allocation6 + $0x18] sm:$0xf]
          %v2065 = vld [vmem:[#allocation6 + $0x1c] sm:$0xf]
          %v2066 = vld [vmem:[#allocation6 + $0x20] sm:$0xf]
          %v2067 = vld [vmem:[#allocation6 + $0x24] sm:$0xf]
          %v2068 = vld [vmem:[#allocation6 + $0x28] sm:$0xf]
          %v2069 = vld [vmem:[#allocation6 + $0x2c] sm:$0xf]
          %v2070 = vld [vmem:[#allocation6 + $0x30] sm:$0xf]
          %v2071 = vld [vmem:[#allocation6 + $0x34] sm:$0xf]
          %v2072 = vld [vmem:[#allocation6 + $0x38] sm:$0xf]
          %v2073 = vld [vmem:[#allocation6 + $0x3c] sm:$0xf]
          %v2074 = vld [vmem:[#allocation8] sm:$0x1]
          %v2076 = vlaneseq
          %v2077 = vshrl.u32 %v2076, 7
          %v2078 = vsub.s32 0, %v2077
          %v2079 = vrot.slane %v2074, %v2078
          %v2097 = vunpack.c.l.b16 %v2058
          %v2098 = vunpack.c.l.b16 %v2059
          %v2099 = vunpack.c.l.b16 %v2060
          %v2100 = vunpack.c.l.b16 %v2061
          %v2101 = vunpack.c.l.b16 %v2062
          %v2102 = vunpack.c.l.b16 %v2063
          %v2103 = vunpack.c.l.b16 %v2064
          %v2104 = vunpack.c.l.b16 %v2065
          %v2105 = vunpack.c.l.b16 %v2066
          %v2106 = vunpack.c.l.b16 %v2067
          %v2107 = vunpack.c.l.b16 %v2068
          %v2108 = vunpack.c.l.b16 %v2069
          %v2109 = vunpack.c.l.b16 %v2070
          %v2110 = vunpack.c.l.b16 %v2071
          %v2111 = vunpack.c.l.b16 %v2072
          %v2112 = vunpack.c.l.b16 %v2073
          %v2113 = vpack.c.b16 %v2098, %v2097
          %v2114 = vpack.c.b16 %v2100, %v2099
          %v2115 = vpack.c.b16 %v2102, %v2101
          %v2116 = vpack.c.b16 %v2104, %v2103
          %v2117 = vpack.c.b16 %v2106, %v2105
          %v2118 = vpack.c.b16 %v2108, %v2107
          %v2119 = vpack.c.b16 %v2110, %v2109
          %v2120 = vpack.c.b16 %v2112, %v2111
          %2129 = vmatprep.subr.bf16.mxu0 0
          %2130 = vmatpush1.bf16.msra.mxu0 %v2113
          %2131 = vmatprep.subr.bf16.mxu0 0
          %2132 = vmatpush1.bf16.msra.mxu0 %v2114
          %2133 = vmatprep.subr.bf16.mxu0 0
          %2134 = vmatpush1.bf16.msra.mxu0 %v2115
          %2135 = vmatprep.subr.bf16.mxu0 0
          %2136 = vmatpush1.bf16.msra.mxu0 %v2116
          %2137 = vmatprep.subr.bf16.mxu0 0
          %2138 = vmatpush1.bf16.msra.mxu0 %v2117
          %2139 = vmatprep.subr.bf16.mxu0 0
          %2140 = vmatpush1.bf16.msra.mxu0 %v2118
          %2141 = vmatprep.subr.bf16.mxu0 0
          %2142 = vmatpush1.bf16.msra.mxu0 %v2119
          %2143 = vmatprep.subr.bf16.mxu0 0
          %2144 = vmatpush1.bf16.msra.mxu0 %v2120
          %2145 = vmatprep.subr.bf16.mxu0 0
          %2146 = vmatpush1.bf16.msra.mxu0 0
          %2147 = vmatprep.subr.bf16.mxu0 0
          %2148 = vmatpush1.bf16.msra.mxu0 0
          %2149 = vmatprep.subr.bf16.mxu0 0
          %2150 = vmatpush1.bf16.msra.mxu0 0
          %2151 = vmatprep.subr.bf16.mxu0 0
          %2152 = vmatpush1.bf16.msra.mxu0 0
          %2153 = vmatprep.subr.bf16.mxu0 0
          %2154 = vmatpush1.bf16.msra.mxu0 0
          %2155 = vmatprep.subr.bf16.mxu0 0
          %2156 = vmatpush1.bf16.msra.mxu0 0
          %2157 = vmatprep.subr.bf16.mxu0 0
          %2158 = vmatpush1.bf16.msra.mxu0 0
          %2159 = vmatprep.subr.bf16.mxu0 0
          %2160 = vmatpush1.bf16.msra.mxu0 0
          %2161 = vmatprep.mubr.bf16.mxu0 0
          %2162 = vmatmul.mubr.bf16.gmra.mrb[0].mxu0 %v2057
          %v2163 = vpop.f32.mrb[0].mxu0
          %v2164 = vadd.f32 %v2079, %v2163
          %v2165 = vpop.f32.mrb[0].mxu0
          %v2166 = vpop.f32.mrb[0].mxu0
          %v2167 = vpop.f32.mrb[0].mxu0
          %2168 = vdwg.mxu0
          %v2169 = vmax.f32 %v2164, 0.0
          %v2170 = vpack.c.bf16 %v2169, %v2169
          %2171 = vst [vmem:[#allocation2 + $0xe] sm:$0x1] %v2170
          %v2172 = vld [vmem:[#allocation3 + $0xf] sm:$0x1]
          %v2173 = vld [vmem:[#allocation6] sm:$0xf]
          %v2174 = vld [vmem:[#allocation6 + $0x4] sm:$0xf]
          %v2175 = vld [vmem:[#allocation6 + $0x8] sm:$0xf]
          %v2176 = vld [vmem:[#allocation6 + $0xc] sm:$0xf]
          %v2177 = vld [vmem:[#allocation6 + $0x10] sm:$0xf]
          %v2178 = vld [vmem:[#allocation6 + $0x14] sm:$0xf]
          %v2179 = vld [vmem:[#allocation6 + $0x18] sm:$0xf]
          %v2180 = vld [vmem:[#allocation6 + $0x1c] sm:$0xf]
          %v2181 = vld [vmem:[#allocation6 + $0x20] sm:$0xf]
          %v2182 = vld [vmem:[#allocation6 + $0x24] sm:$0xf]
          %v2183 = vld [vmem:[#allocation6 + $0x28] sm:$0xf]
          %v2184 = vld [vmem:[#allocation6 + $0x2c] sm:$0xf]
          %v2185 = vld [vmem:[#allocation6 + $0x30] sm:$0xf]
          %v2186 = vld [vmem:[#allocation6 + $0x34] sm:$0xf]
          %v2187 = vld [vmem:[#allocation6 + $0x38] sm:$0xf]
          %v2188 = vld [vmem:[#allocation6 + $0x3c] sm:$0xf]
          %v2189 = vld [vmem:[#allocation8] sm:$0x1]
          %v2191 = vlaneseq
          %v2192 = vshrl.u32 %v2191, 7
          %v2193 = vsub.s32 0, %v2192
          %v2194 = vrot.slane %v2189, %v2193
          %v2212 = vunpack.c.l.b16 %v2173
          %v2213 = vunpack.c.l.b16 %v2174
          %v2214 = vunpack.c.l.b16 %v2175
          %v2215 = vunpack.c.l.b16 %v2176
          %v2216 = vunpack.c.l.b16 %v2177
          %v2217 = vunpack.c.l.b16 %v2178
          %v2218 = vunpack.c.l.b16 %v2179
          %v2219 = vunpack.c.l.b16 %v2180
          %v2220 = vunpack.c.l.b16 %v2181
          %v2221 = vunpack.c.l.b16 %v2182
          %v2222 = vunpack.c.l.b16 %v2183
          %v2223 = vunpack.c.l.b16 %v2184
          %v2224 = vunpack.c.l.b16 %v2185
          %v2225 = vunpack.c.l.b16 %v2186
          %v2226 = vunpack.c.l.b16 %v2187
          %v2227 = vunpack.c.l.b16 %v2188
          %v2228 = vpack.c.b16 %v2213, %v2212
          %v2229 = vpack.c.b16 %v2215, %v2214
          %v2230 = vpack.c.b16 %v2217, %v2216
          %v2231 = vpack.c.b16 %v2219, %v2218
          %v2232 = vpack.c.b16 %v2221, %v2220
          %v2233 = vpack.c.b16 %v2223, %v2222
          %v2234 = vpack.c.b16 %v2225, %v2224
          %v2235 = vpack.c.b16 %v2227, %v2226
          %2244 = vmatprep.subr.bf16.mxu0 0
          %2245 = vmatpush1.bf16.msra.mxu0 %v2228
          %2246 = vmatprep.subr.bf16.mxu0 0
          %2247 = vmatpush1.bf16.msra.mxu0 %v2229
          %2248 = vmatprep.subr.bf16.mxu0 0
          %2249 = vmatpush1.bf16.msra.mxu0 %v2230
          %2250 = vmatprep.subr.bf16.mxu0 0
          %2251 = vmatpush1.bf16.msra.mxu0 %v2231
          %2252 = vmatprep.subr.bf16.mxu0 0
          %2253 = vmatpush1.bf16.msra.mxu0 %v2232
          %2254 = vmatprep.subr.bf16.mxu0 0
          %2255 = vmatpush1.bf16.msra.mxu0 %v2233
          %2256 = vmatprep.subr.bf16.mxu0 0
          %2257 = vmatpush1.bf16.msra.mxu0 %v2234
          %2258 = vmatprep.subr.bf16.mxu0 0
          %2259 = vmatpush1.bf16.msra.mxu0 %v2235
          %2260 = vmatprep.subr.bf16.mxu0 0
          %2261 = vmatpush1.bf16.msra.mxu0 0
          %2262 = vmatprep.subr.bf16.mxu0 0
          %2263 = vmatpush1.bf16.msra.mxu0 0
          %2264 = vmatprep.subr.bf16.mxu0 0
          %2265 = vmatpush1.bf16.msra.mxu0 0
          %2266 = vmatprep.subr.bf16.mxu0 0
          %2267 = vmatpush1.bf16.msra.mxu0 0
          %2268 = vmatprep.subr.bf16.mxu0 0
          %2269 = vmatpush1.bf16.msra.mxu0 0
          %2270 = vmatprep.subr.bf16.mxu0 0
          %2271 = vmatpush1.bf16.msra.mxu0 0
          %2272 = vmatprep.subr.bf16.mxu0 0
          %2273 = vmatpush1.bf16.msra.mxu0 0
          %2274 = vmatprep.subr.bf16.mxu0 0
          %2275 = vmatpush1.bf16.msra.mxu0 0
          %2276 = vmatprep.mubr.bf16.mxu0 0
          %2277 = vmatmul.mubr.bf16.gmra.mrb[0].mxu0 %v2172
          %v2278 = vpop.f32.mrb[0].mxu0
          %v2279 = vadd.f32 %v2194, %v2278
          %v2280 = vpop.f32.mrb[0].mxu0
          %v2281 = vpop.f32.mrb[0].mxu0
          %v2282 = vpop.f32.mrb[0].mxu0
          %2283 = vdwg.mxu0
          %v2284 = vmax.f32 %v2279, 0.0
          %v2285 = vpack.c.bf16 %v2284, %v2284
          %2286 = vst [vmem:[#allocation2 + $0xf] sm:$0x1] %v2285
          %2287 = vst [vmem:[#allocation15] sm:$0x3] 0.0
        $region80: #{tpu_custom_call.1} parent=47 // pred_fallthru
          _
        %v2288 = vld [vmem:[#allocation2] sm:$0xff]
        %v2289 = vld [vmem:[#allocation2 + $0x8] sm:$0xff]
        %v2290 = vld [vmem:[%s381] sm:$0xff]
        %v2291 = vld [vmem:[%s381 + $0x8] sm:$0xff]
        %v2292 = vld [vmem:[%s381 + $0x10] sm:$0xff]
        %v2293 = vld [vmem:[%s381 + $0x18] sm:$0xff]
        %v2294 = vld [vmem:[%s381 + $0x20] sm:$0xff]
        %v2295 = vld [vmem:[%s381 + $0x28] sm:$0xff]
        %v2296 = vld [vmem:[%s381 + $0x30] sm:$0xff]
        %v2297 = vld [vmem:[%s381 + $0x38] sm:$0xff]
        %v2298 = vld [vmem:[%s381 + $0x40] sm:$0xff]
        %v2299 = vld [vmem:[%s381 + $0x48] sm:$0xff]
        %v2300 = vld [vmem:[%s381 + $0x50] sm:$0xff]
        %v2301 = vld [vmem:[%s381 + $0x58] sm:$0xff]
        %v2302 = vld [vmem:[%s381 + $0x60] sm:$0xff]
        %v2303 = vld [vmem:[%s381 + $0x68] sm:$0xff]
        %v2304 = vld [vmem:[%s381 + $0x70] sm:$0xff]
        %v2305 = vld [vmem:[%s381 + $0x78] sm:$0xff]
        %v2306 = vld [vmem:[%s381 + $0x80] sm:$0xff]
        %v2307 = vld [vmem:[%s381 + $0x88] sm:$0xff]
        %v2308 = vld [vmem:[%s381 + $0x90] sm:$0xff]
        %v2309 = vld [vmem:[%s381 + $0x98] sm:$0xff]
        %v2310 = vld [vmem:[%s381 + $0xa0] sm:$0xff]
        %v2311 = vld [vmem:[%s381 + $0xa8] sm:$0xff]
        %v2312 = vld [vmem:[%s381 + $0xb0] sm:$0xff]
        %v2313 = vld [vmem:[%s381 + $0xb8] sm:$0xff]
        %v2314 = vld [vmem:[%s381 + $0xc0] sm:$0xff]
        %v2315 = vld [vmem:[%s381 + $0xc8] sm:$0xff]
        %v2316 = vld [vmem:[%s381 + $0xd0] sm:$0xff]
        %v2317 = vld [vmem:[%s381 + $0xd8] sm:$0xff]
        %v2318 = vld [vmem:[%s381 + $0xe0] sm:$0xff]
        %v2319 = vld [vmem:[%s381 + $0xe8] sm:$0xff]
        %v2320 = vld [vmem:[%s381 + $0xf0] sm:$0xff]
        %v2321 = vld [vmem:[%s381 + $0xf8] sm:$0xff]
        %v2322 = vld [vmem:[%s381 + $0x100] sm:$0xff]
        %v2323 = vld [vmem:[%s381 + $0x108] sm:$0xff]
        %v2324 = vld [vmem:[%s381 + $0x110] sm:$0xff]
        %v2325 = vld [vmem:[%s381 + $0x118] sm:$0xff]
        %v2326 = vld [vmem:[%s381 + $0x120] sm:$0xff]
        %v2327 = vld [vmem:[%s381 + $0x128] sm:$0xff]
        %v2328 = vld [vmem:[%s381 + $0x130] sm:$0xff]
        %v2329 = vld [vmem:[%s381 + $0x138] sm:$0xff]
        %v2330 = vld [vmem:[%s381 + $0x140] sm:$0xff]
        %v2331 = vld [vmem:[%s381 + $0x148] sm:$0xff]
        %v2332 = vld [vmem:[%s381 + $0x150] sm:$0xff]
        %v2333 = vld [vmem:[%s381 + $0x158] sm:$0xff]
        %v2334 = vld [vmem:[%s381 + $0x160] sm:$0xff]
        %v2335 = vld [vmem:[%s381 + $0x168] sm:$0xff]
        %v2336 = vld [vmem:[%s381 + $0x170] sm:$0xff]
        %v2337 = vld [vmem:[%s381 + $0x178] sm:$0xff]
        %v2338 = vld [vmem:[%s381 + $0x180] sm:$0xff]
        %v2339 = vld [vmem:[%s381 + $0x188] sm:$0xff]
        %v2340 = vld [vmem:[%s381 + $0x190] sm:$0xff]
        %v2341 = vld [vmem:[%s381 + $0x198] sm:$0xff]
        %v2342 = vld [vmem:[%s381 + $0x1a0] sm:$0xff]
        %v2343 = vld [vmem:[%s381 + $0x1a8] sm:$0xff]
        %v2344 = vld [vmem:[%s381 + $0x1b0] sm:$0xff]
        %v2345 = vld [vmem:[%s381 + $0x1b8] sm:$0xff]
        %v2346 = vld [vmem:[%s381 + $0x1c0] sm:$0xff]
        %v2347 = vld [vmem:[%s381 + $0x1c8] sm:$0xff]
        %v2348 = vld [vmem:[%s381 + $0x1d0] sm:$0xff]
        %v2349 = vld [vmem:[%s381 + $0x1d8] sm:$0xff]
        %v2350 = vld [vmem:[%s381 + $0x1e0] sm:$0xff]
        %v2351 = vld [vmem:[%s381 + $0x1e8] sm:$0xff]
        %v2352 = vld [vmem:[%s381 + $0x1f0] sm:$0xff]
        %v2353 = vld [vmem:[%s381 + $0x1f8] sm:$0xff]
        %v2354 = vld [vmem:[%s381 + $0x200] sm:$0xff]
        %v2355 = vld [vmem:[%s381 + $0x208] sm:$0xff]
        %v2356 = vld [vmem:[%s381 + $0x210] sm:$0xff]
        %v2357 = vld [vmem:[%s381 + $0x218] sm:$0xff]
        %v2358 = vld [vmem:[%s381 + $0x220] sm:$0xff]
        %v2359 = vld [vmem:[%s381 + $0x228] sm:$0xff]
        %v2360 = vld [vmem:[%s381 + $0x230] sm:$0xff]
        %v2361 = vld [vmem:[%s381 + $0x238] sm:$0xff]
        %v2362 = vld [vmem:[%s381 + $0x240] sm:$0xff]
        %v2363 = vld [vmem:[%s381 + $0x248] sm:$0xff]
        %v2364 = vld [vmem:[%s381 + $0x250] sm:$0xff]
        %v2365 = vld [vmem:[%s381 + $0x258] sm:$0xff]
        %v2366 = vld [vmem:[%s381 + $0x260] sm:$0xff]
        %v2367 = vld [vmem:[%s381 + $0x268] sm:$0xff]
        %v2368 = vld [vmem:[%s381 + $0x270] sm:$0xff]
        %v2369 = vld [vmem:[%s381 + $0x278] sm:$0xff]
        %v2370 = vld [vmem:[%s381 + $0x280] sm:$0xff]
        %v2371 = vld [vmem:[%s381 + $0x288] sm:$0xff]
        %v2372 = vld [vmem:[%s381 + $0x290] sm:$0xff]
        %v2373 = vld [vmem:[%s381 + $0x298] sm:$0xff]
        %v2374 = vld [vmem:[%s381 + $0x2a0] sm:$0xff]
        %v2375 = vld [vmem:[%s381 + $0x2a8] sm:$0xff]
        %v2376 = vld [vmem:[%s381 + $0x2b0] sm:$0xff]
        %v2377 = vld [vmem:[%s381 + $0x2b8] sm:$0xff]
        %v2378 = vld [vmem:[%s381 + $0x2c0] sm:$0xff]
        %v2379 = vld [vmem:[%s381 + $0x2c8] sm:$0xff]
        %v2380 = vld [vmem:[%s381 + $0x2d0] sm:$0xff]
        %v2381 = vld [vmem:[%s381 + $0x2d8] sm:$0xff]
        %v2382 = vld [vmem:[%s381 + $0x2e0] sm:$0xff]
        %v2383 = vld [vmem:[%s381 + $0x2e8] sm:$0xff]
        %v2384 = vld [vmem:[%s381 + $0x2f0] sm:$0xff]
        %v2385 = vld [vmem:[%s381 + $0x2f8] sm:$0xff]
        %v2386 = vld [vmem:[%s381 + $0x300] sm:$0xff]
        %v2387 = vld [vmem:[%s381 + $0x308] sm:$0xff]
        %v2388 = vld [vmem:[%s381 + $0x310] sm:$0xff]
        %v2389 = vld [vmem:[%s381 + $0x318] sm:$0xff]
        %v2390 = vld [vmem:[%s381 + $0x320] sm:$0xff]
        %v2391 = vld [vmem:[%s381 + $0x328] sm:$0xff]
        %v2392 = vld [vmem:[%s381 + $0x330] sm:$0xff]
        %v2393 = vld [vmem:[%s381 + $0x338] sm:$0xff]
        %v2394 = vld [vmem:[%s381 + $0x340] sm:$0xff]
        %v2395 = vld [vmem:[%s381 + $0x348] sm:$0xff]
        %v2396 = vld [vmem:[%s381 + $0x350] sm:$0xff]
        %v2397 = vld [vmem:[%s381 + $0x358] sm:$0xff]
        %v2398 = vld [vmem:[%s381 + $0x360] sm:$0xff]
        %v2399 = vld [vmem:[%s381 + $0x368] sm:$0xff]
        %v2400 = vld [vmem:[%s381 + $0x370] sm:$0xff]
        %v2401 = vld [vmem:[%s381 + $0x378] sm:$0xff]
        %v2402 = vld [vmem:[%s381 + $0x380] sm:$0xff]
        %v2403 = vld [vmem:[%s381 + $0x388] sm:$0xff]
        %v2404 = vld [vmem:[%s381 + $0x390] sm:$0xff]
        %v2405 = vld [vmem:[%s381 + $0x398] sm:$0xff]
        %v2406 = vld [vmem:[%s381 + $0x3a0] sm:$0xff]
        %v2407 = vld [vmem:[%s381 + $0x3a8] sm:$0xff]
        %v2408 = vld [vmem:[%s381 + $0x3b0] sm:$0xff]
        %v2409 = vld [vmem:[%s381 + $0x3b8] sm:$0xff]
        %v2410 = vld [vmem:[%s381 + $0x3c0] sm:$0xff]
        %v2411 = vld [vmem:[%s381 + $0x3c8] sm:$0xff]
        %v2412 = vld [vmem:[%s381 + $0x3d0] sm:$0xff]
        %v2413 = vld [vmem:[%s381 + $0x3d8] sm:$0xff]
        %v2414 = vld [vmem:[%s381 + $0x3e0] sm:$0xff]
        %v2415 = vld [vmem:[%s381 + $0x3e8] sm:$0xff]
        %v2416 = vld [vmem:[%s381 + $0x3f0] sm:$0xff]
        %v2417 = vld [vmem:[%s381 + $0x3f8] sm:$0xff]
        %v2418 = vld [vmem:[%s381 + $0x400] sm:$0xff]
        %v2419 = vld [vmem:[%s381 + $0x408] sm:$0xff]
        %v2420 = vld [vmem:[%s381 + $0x410] sm:$0xff]
        %v2421 = vld [vmem:[%s381 + $0x418] sm:$0xff]
        %v2422 = vld [vmem:[%s381 + $0x420] sm:$0xff]
        %v2423 = vld [vmem:[%s381 + $0x428] sm:$0xff]
        %v2424 = vld [vmem:[%s381 + $0x430] sm:$0xff]
        %v2425 = vld [vmem:[%s381 + $0x438] sm:$0xff]
        %v2426 = vld [vmem:[%s381 + $0x440] sm:$0xff]
        %v2427 = vld [vmem:[%s381 + $0x448] sm:$0xff]
        %v2428 = vld [vmem:[%s381 + $0x450] sm:$0xff]
        %v2429 = vld [vmem:[%s381 + $0x458] sm:$0xff]
        %v2430 = vld [vmem:[%s381 + $0x460] sm:$0xff]
        %v2431 = vld [vmem:[%s381 + $0x468] sm:$0xff]
        %v2432 = vld [vmem:[%s381 + $0x470] sm:$0xff]
        %v2433 = vld [vmem:[%s381 + $0x478] sm:$0xff]
        %v2434 = vld [vmem:[%s381 + $0x480] sm:$0xff]
        %v2435 = vld [vmem:[%s381 + $0x488] sm:$0xff]
        %v2436 = vld [vmem:[%s381 + $0x490] sm:$0xff]
        %v2437 = vld [vmem:[%s381 + $0x498] sm:$0xff]
        %v2438 = vld [vmem:[%s381 + $0x4a0] sm:$0xff]
        %v2439 = vld [vmem:[%s381 + $0x4a8] sm:$0xff]
        %v2440 = vld [vmem:[%s381 + $0x4b0] sm:$0xff]
        %v2441 = vld [vmem:[%s381 + $0x4b8] sm:$0xff]
        %v2442 = vld [vmem:[%s381 + $0x4c0] sm:$0xff]
        %v2443 = vld [vmem:[%s381 + $0x4c8] sm:$0xff]
        %v2444 = vld [vmem:[%s381 + $0x4d0] sm:$0xff]
        %v2445 = vld [vmem:[%s381 + $0x4d8] sm:$0xff]
        %v2446 = vld [vmem:[%s381 + $0x4e0] sm:$0xff]
        %v2447 = vld [vmem:[%s381 + $0x4e8] sm:$0xff]
        %v2448 = vld [vmem:[%s381 + $0x4f0] sm:$0xff]
        %v2449 = vld [vmem:[%s381 + $0x4f8] sm:$0xff]
        %v2450 = vld [vmem:[%s381 + $0x500] sm:$0xff]
        %v2451 = vld [vmem:[%s381 + $0x508] sm:$0xff]
        %v2452 = vld [vmem:[%s381 + $0x510] sm:$0xff]
        %v2453 = vld [vmem:[%s381 + $0x518] sm:$0xff]
        %v2454 = vld [vmem:[%s381 + $0x520] sm:$0xff]
        %v2455 = vld [vmem:[%s381 + $0x528] sm:$0xff]
        %v2456 = vld [vmem:[%s381 + $0x530] sm:$0xff]
        %v2457 = vld [vmem:[%s381 + $0x538] sm:$0xff]
        %v2458 = vld [vmem:[%s381 + $0x540] sm:$0xff]
        %v2459 = vld [vmem:[%s381 + $0x548] sm:$0xff]
        %v2460 = vld [vmem:[%s381 + $0x550] sm:$0xff]
        %v2461 = vld [vmem:[%s381 + $0x558] sm:$0xff]
        %v2462 = vld [vmem:[%s381 + $0x560] sm:$0xff]
        %v2463 = vld [vmem:[%s381 + $0x568] sm:$0xff]
        %v2464 = vld [vmem:[%s381 + $0x570] sm:$0xff]
        %v2465 = vld [vmem:[%s381 + $0x578] sm:$0xff]
        %v2466 = vld [vmem:[%s381 + $0x580] sm:$0xff]
        %v2467 = vld [vmem:[%s381 + $0x588] sm:$0xff]
        %v2468 = vld [vmem:[%s381 + $0x590] sm:$0xff]
        %v2469 = vld [vmem:[%s381 + $0x598] sm:$0xff]
        %v2470 = vld [vmem:[%s381 + $0x5a0] sm:$0xff]
        %v2471 = vld [vmem:[%s381 + $0x5a8] sm:$0xff]
        %v2472 = vld [vmem:[%s381 + $0x5b0] sm:$0xff]
        %v2473 = vld [vmem:[%s381 + $0x5b8] sm:$0xff]
        %v2474 = vld [vmem:[%s381 + $0x5c0] sm:$0xff]
        %v2475 = vld [vmem:[%s381 + $0x5c8] sm:$0xff]
        %v2476 = vld [vmem:[%s381 + $0x5d0] sm:$0xff]
        %v2477 = vld [vmem:[%s381 + $0x5d8] sm:$0xff]
        %v2478 = vld [vmem:[%s381 + $0x5e0] sm:$0xff]
        %v2479 = vld [vmem:[%s381 + $0x5e8] sm:$0xff]
        %v2480 = vld [vmem:[%s381 + $0x5f0] sm:$0xff]
        %v2481 = vld [vmem:[%s381 + $0x5f8] sm:$0xff]
        %v2482 = vld [vmem:[%s381 + $0x600] sm:$0xff]
        %v2483 = vld [vmem:[%s381 + $0x608] sm:$0xff]
        %v2484 = vld [vmem:[%s381 + $0x610] sm:$0xff]
        %v2485 = vld [vmem:[%s381 + $0x618] sm:$0xff]
        %v2486 = vld [vmem:[%s381 + $0x620] sm:$0xff]
        %v2487 = vld [vmem:[%s381 + $0x628] sm:$0xff]
        %v2488 = vld [vmem:[%s381 + $0x630] sm:$0xff]
        %v2489 = vld [vmem:[%s381 + $0x638] sm:$0xff]
        %v2490 = vld [vmem:[%s381 + $0x640] sm:$0xff]
        %v2491 = vld [vmem:[%s381 + $0x648] sm:$0xff]
        %v2492 = vld [vmem:[%s381 + $0x650] sm:$0xff]
        %v2493 = vld [vmem:[%s381 + $0x658] sm:$0xff]
        %v2494 = vld [vmem:[%s381 + $0x660] sm:$0xff]
        %v2495 = vld [vmem:[%s381 + $0x668] sm:$0xff]
        %v2496 = vld [vmem:[%s381 + $0x670] sm:$0xff]
        %v2497 = vld [vmem:[%s381 + $0x678] sm:$0xff]
        %v2498 = vld [vmem:[%s381 + $0x680] sm:$0xff]
        %v2499 = vld [vmem:[%s381 + $0x688] sm:$0xff]
        %v2500 = vld [vmem:[%s381 + $0x690] sm:$0xff]
        %v2501 = vld [vmem:[%s381 + $0x698] sm:$0xff]
        %v2502 = vld [vmem:[%s381 + $0x6a0] sm:$0xff]
        %v2503 = vld [vmem:[%s381 + $0x6a8] sm:$0xff]
        %v2504 = vld [vmem:[%s381 + $0x6b0] sm:$0xff]
        %v2505 = vld [vmem:[%s381 + $0x6b8] sm:$0xff]
        %v2506 = vld [vmem:[%s381 + $0x6c0] sm:$0xff]
        %v2507 = vld [vmem:[%s381 + $0x6c8] sm:$0xff]
        %v2508 = vld [vmem:[%s381 + $0x6d0] sm:$0xff]
        %v2509 = vld [vmem:[%s381 + $0x6d8] sm:$0xff]
        %v2510 = vld [vmem:[%s381 + $0x6e0] sm:$0xff]
        %v2511 = vld [vmem:[%s381 + $0x6e8] sm:$0xff]
        %v2512 = vld [vmem:[%s381 + $0x6f0] sm:$0xff]
        %v2513 = vld [vmem:[%s381 + $0x6f8] sm:$0xff]
        %v2514 = vld [vmem:[%s381 + $0x700] sm:$0xff]
        %v2515 = vld [vmem:[%s381 + $0x708] sm:$0xff]
        %v2516 = vld [vmem:[%s381 + $0x710] sm:$0xff]
        %v2517 = vld [vmem:[%s381 + $0x718] sm:$0xff]
        %v2518 = vld [vmem:[%s381 + $0x720] sm:$0xff]
        %v2519 = vld [vmem:[%s381 + $0x728] sm:$0xff]
        %v2520 = vld [vmem:[%s381 + $0x730] sm:$0xff]
        %v2521 = vld [vmem:[%s381 + $0x738] sm:$0xff]
        %v2522 = vld [vmem:[%s381 + $0x740] sm:$0xff]
        %v2523 = vld [vmem:[%s381 + $0x748] sm:$0xff]
        %v2524 = vld [vmem:[%s381 + $0x750] sm:$0xff]
        %v2525 = vld [vmem:[%s381 + $0x758] sm:$0xff]
        %v2526 = vld [vmem:[%s381 + $0x760] sm:$0xff]
        %v2527 = vld [vmem:[%s381 + $0x768] sm:$0xff]
        %v2528 = vld [vmem:[%s381 + $0x770] sm:$0xff]
        %v2529 = vld [vmem:[%s381 + $0x778] sm:$0xff]
        %v2530 = vld [vmem:[%s381 + $0x780] sm:$0xff]
        %v2531 = vld [vmem:[%s381 + $0x788] sm:$0xff]
        %v2532 = vld [vmem:[%s381 + $0x790] sm:$0xff]
        %v2533 = vld [vmem:[%s381 + $0x798] sm:$0xff]
        %v2534 = vld [vmem:[%s381 + $0x7a0] sm:$0xff]
        %v2535 = vld [vmem:[%s381 + $0x7a8] sm:$0xff]
        %v2536 = vld [vmem:[%s381 + $0x7b0] sm:$0xff]
        %v2537 = vld [vmem:[%s381 + $0x7b8] sm:$0xff]
        %v2538 = vld [vmem:[%s381 + $0x7c0] sm:$0xff]
        %v2539 = vld [vmem:[%s381 + $0x7c8] sm:$0xff]
        %v2540 = vld [vmem:[%s381 + $0x7d0] sm:$0xff]
        %v2541 = vld [vmem:[%s381 + $0x7d8] sm:$0xff]
        %v2542 = vld [vmem:[%s381 + $0x7e0] sm:$0xff]
        %v2543 = vld [vmem:[%s381 + $0x7e8] sm:$0xff]
        %v2544 = vld [vmem:[%s381 + $0x7f0] sm:$0xff]
        %v2545 = vld [vmem:[%s381 + $0x7f8] sm:$0xff]
        %v2546 = vld [vmem:[%s381 + $0x800] sm:$0xff]
        %v2547 = vld [vmem:[%s381 + $0x808] sm:$0xff]
        %v2548 = vld [vmem:[%s381 + $0x810] sm:$0xff]
        %v2549 = vld [vmem:[%s381 + $0x818] sm:$0xff]
        %v2550 = vld [vmem:[%s381 + $0x820] sm:$0xff]
        %v2551 = vld [vmem:[%s381 + $0x828] sm:$0xff]
        %v2552 = vld [vmem:[%s381 + $0x830] sm:$0xff]
        %v2553 = vld [vmem:[%s381 + $0x838] sm:$0xff]
        %v2554 = vld [vmem:[%s381 + $0x840] sm:$0xff]
        %v2555 = vld [vmem:[%s381 + $0x848] sm:$0xff]
        %v2556 = vld [vmem:[%s381 + $0x850] sm:$0xff]
        %v2557 = vld [vmem:[%s381 + $0x858] sm:$0xff]
        %v2558 = vld [vmem:[%s381 + $0x860] sm:$0xff]
        %v2559 = vld [vmem:[%s381 + $0x868] sm:$0xff]
        %v2560 = vld [vmem:[%s381 + $0x870] sm:$0xff]
        %v2561 = vld [vmem:[%s381 + $0x878] sm:$0xff]
        %v2562 = vld [vmem:[%s381 + $0x880] sm:$0xff]
        %v2563 = vld [vmem:[%s381 + $0x888] sm:$0xff]
        %v2564 = vld [vmem:[%s381 + $0x890] sm:$0xff]
        %v2565 = vld [vmem:[%s381 + $0x898] sm:$0xff]
        %v2566 = vld [vmem:[%s381 + $0x8a0] sm:$0xff]
        %v2567 = vld [vmem:[%s381 + $0x8a8] sm:$0xff]
        %v2568 = vld [vmem:[%s381 + $0x8b0] sm:$0xff]
        %v2569 = vld [vmem:[%s381 + $0x8b8] sm:$0xff]
        %v2570 = vld [vmem:[%s381 + $0x8c0] sm:$0xff]
        %v2571 = vld [vmem:[%s381 + $0x8c8] sm:$0xff]
        %v2572 = vld [vmem:[%s381 + $0x8d0] sm:$0xff]
        %v2573 = vld [vmem:[%s381 + $0x8d8] sm:$0xff]
        %v2574 = vld [vmem:[%s381 + $0x8e0] sm:$0xff]
        %v2575 = vld [vmem:[%s381 + $0x8e8] sm:$0xff]
        %v2576 = vld [vmem:[%s381 + $0x8f0] sm:$0xff]
        %v2577 = vld [vmem:[%s381 + $0x8f8] sm:$0xff]
        %v2578 = vld [vmem:[%s381 + $0x900] sm:$0xff]
        %v2579 = vld [vmem:[%s381 + $0x908] sm:$0xff]
        %v2580 = vld [vmem:[%s381 + $0x910] sm:$0xff]
        %v2581 = vld [vmem:[%s381 + $0x918] sm:$0xff]
        %v2582 = vld [vmem:[%s381 + $0x920] sm:$0xff]
        %v2583 = vld [vmem:[%s381 + $0x928] sm:$0xff]
        %v2584 = vld [vmem:[%s381 + $0x930] sm:$0xff]
        %v2585 = vld [vmem:[%s381 + $0x938] sm:$0xff]
        %v2586 = vld [vmem:[%s381 + $0x940] sm:$0xff]
        %v2587 = vld [vmem:[%s381 + $0x948] sm:$0xff]
        %v2588 = vld [vmem:[%s381 + $0x950] sm:$0xff]
        %v2589 = vld [vmem:[%s381 + $0x958] sm:$0xff]
        %v2590 = vld [vmem:[%s381 + $0x960] sm:$0xff]
        %v2591 = vld [vmem:[%s381 + $0x968] sm:$0xff]
        %v2592 = vld [vmem:[%s381 + $0x970] sm:$0xff]
        %v2593 = vld [vmem:[%s381 + $0x978] sm:$0xff]
        %v2594 = vld [vmem:[%s381 + $0x980] sm:$0xff]
        %v2595 = vld [vmem:[%s381 + $0x988] sm:$0xff]
        %v2596 = vld [vmem:[%s381 + $0x990] sm:$0xff]
        %v2597 = vld [vmem:[%s381 + $0x998] sm:$0xff]
        %v2598 = vld [vmem:[%s381 + $0x9a0] sm:$0xff]
        %v2599 = vld [vmem:[%s381 + $0x9a8] sm:$0xff]
        %v2600 = vld [vmem:[%s381 + $0x9b0] sm:$0xff]
        %v2601 = vld [vmem:[%s381 + $0x9b8] sm:$0xff]
        %v2602 = vld [vmem:[%s381 + $0x9c0] sm:$0xff]
        %v2603 = vld [vmem:[%s381 + $0x9c8] sm:$0xff]
        %v2604 = vld [vmem:[%s381 + $0x9d0] sm:$0xff]
        %v2605 = vld [vmem:[%s381 + $0x9d8] sm:$0xff]
        %v2606 = vld [vmem:[%s381 + $0x9e0] sm:$0xff]
        %v2607 = vld [vmem:[%s381 + $0x9e8] sm:$0xff]
        %v2608 = vld [vmem:[%s381 + $0x9f0] sm:$0xff]
        %v2609 = vld [vmem:[%s381 + $0x9f8] sm:$0xff]
        %v2610 = vld [vmem:[%s381 + $0xa00] sm:$0xff]
        %v2611 = vld [vmem:[%s381 + $0xa08] sm:$0xff]
        %v2612 = vld [vmem:[%s381 + $0xa10] sm:$0xff]
        %v2613 = vld [vmem:[%s381 + $0xa18] sm:$0xff]
        %v2614 = vld [vmem:[%s381 + $0xa20] sm:$0xff]
        %v2615 = vld [vmem:[%s381 + $0xa28] sm:$0xff]
        %v2616 = vld [vmem:[%s381 + $0xa30] sm:$0xff]
        %v2617 = vld [vmem:[%s381 + $0xa38] sm:$0xff]
        %v2618 = vld [vmem:[%s381 + $0xa40] sm:$0xff]
        %v2619 = vld [vmem:[%s381 + $0xa48] sm:$0xff]
        %v2620 = vld [vmem:[%s381 + $0xa50] sm:$0xff]
        %v2621 = vld [vmem:[%s381 + $0xa58] sm:$0xff]
        %v2622 = vld [vmem:[%s381 + $0xa60] sm:$0xff]
        %v2623 = vld [vmem:[%s381 + $0xa68] sm:$0xff]
        %v2624 = vld [vmem:[%s381 + $0xa70] sm:$0xff]
        %v2625 = vld [vmem:[%s381 + $0xa78] sm:$0xff]
        %v2626 = vld [vmem:[%s381 + $0xa80] sm:$0xff]
        %v2627 = vld [vmem:[%s381 + $0xa88] sm:$0xff]
        %v2628 = vld [vmem:[%s381 + $0xa90] sm:$0xff]
        %v2629 = vld [vmem:[%s381 + $0xa98] sm:$0xff]
        %v2630 = vld [vmem:[%s381 + $0xaa0] sm:$0xff]
        %v2631 = vld [vmem:[%s381 + $0xaa8] sm:$0xff]
        %v2632 = vld [vmem:[%s381 + $0xab0] sm:$0xff]
        %v2633 = vld [vmem:[%s381 + $0xab8] sm:$0xff]
        %v2634 = vld [vmem:[%s381 + $0xac0] sm:$0xff]
        %v2635 = vld [vmem:[%s381 + $0xac8] sm:$0xff]
        %v2636 = vld [vmem:[%s381 + $0xad0] sm:$0xff]
        %v2637 = vld [vmem:[%s381 + $0xad8] sm:$0xff]
        %v2638 = vld [vmem:[%s381 + $0xae0] sm:$0xff]
        %v2639 = vld [vmem:[%s381 + $0xae8] sm:$0xff]
        %v2640 = vld [vmem:[%s381 + $0xaf0] sm:$0xff]
        %v2641 = vld [vmem:[%s381 + $0xaf8] sm:$0xff]
        %v2642 = vld [vmem:[%s381 + $0xb00] sm:$0xff]
        %v2643 = vld [vmem:[%s381 + $0xb08] sm:$0xff]
        %v2644 = vld [vmem:[%s381 + $0xb10] sm:$0xff]
        %v2645 = vld [vmem:[%s381 + $0xb18] sm:$0xff]
        %v2646 = vld [vmem:[%s381 + $0xb20] sm:$0xff]
        %v2647 = vld [vmem:[%s381 + $0xb28] sm:$0xff]
        %v2648 = vld [vmem:[%s381 + $0xb30] sm:$0xff]
        %v2649 = vld [vmem:[%s381 + $0xb38] sm:$0xff]
        %v2650 = vld [vmem:[%s381 + $0xb40] sm:$0xff]
        %v2651 = vld [vmem:[%s381 + $0xb48] sm:$0xff]
        %v2652 = vld [vmem:[%s381 + $0xb50] sm:$0xff]
        %v2653 = vld [vmem:[%s381 + $0xb58] sm:$0xff]
        %v2654 = vld [vmem:[%s381 + $0xb60] sm:$0xff]
        %v2655 = vld [vmem:[%s381 + $0xb68] sm:$0xff]
        %v2656 = vld [vmem:[%s381 + $0xb70] sm:$0xff]
        %v2657 = vld [vmem:[%s381 + $0xb78] sm:$0xff]
        %v2658 = vld [vmem:[%s381 + $0xb80] sm:$0xff]
        %v2659 = vld [vmem:[%s381 + $0xb88] sm:$0xff]
        %v2660 = vld [vmem:[%s381 + $0xb90] sm:$0xff]
        %v2661 = vld [vmem:[%s381 + $0xb98] sm:$0xff]
        %v2662 = vld [vmem:[%s381 + $0xba0] sm:$0xff]
        %v2663 = vld [vmem:[%s381 + $0xba8] sm:$0xff]
        %v2664 = vld [vmem:[%s381 + $0xbb0] sm:$0xff]
        %v2665 = vld [vmem:[%s381 + $0xbb8] sm:$0xff]
        %v2666 = vld [vmem:[%s381 + $0xbc0] sm:$0xff]
        %v2667 = vld [vmem:[%s381 + $0xbc8] sm:$0xff]
        %v2668 = vld [vmem:[%s381 + $0xbd0] sm:$0xff]
        %v2669 = vld [vmem:[%s381 + $0xbd8] sm:$0xff]
        %v2670 = vld [vmem:[%s381 + $0xbe0] sm:$0xff]
        %v2671 = vld [vmem:[%s381 + $0xbe8] sm:$0xff]
        %v2672 = vld [vmem:[%s381 + $0xbf0] sm:$0xff]
        %v2673 = vld [vmem:[%s381 + $0xbf8] sm:$0xff]
        %v2674 = vld [vmem:[%s381 + $0xc00] sm:$0xff]
        %v2675 = vld [vmem:[%s381 + $0xc08] sm:$0xff]
        %v2676 = vld [vmem:[%s381 + $0xc10] sm:$0xff]
        %v2677 = vld [vmem:[%s381 + $0xc18] sm:$0xff]
        %v2678 = vld [vmem:[%s381 + $0xc20] sm:$0xff]
        %v2679 = vld [vmem:[%s381 + $0xc28] sm:$0xff]
        %v2680 = vld [vmem:[%s381 + $0xc30] sm:$0xff]
        %v2681 = vld [vmem:[%s381 + $0xc38] sm:$0xff]
        %v2682 = vld [vmem:[%s381 + $0xc40] sm:$0xff]
        %v2683 = vld [vmem:[%s381 + $0xc48] sm:$0xff]
        %v2684 = vld [vmem:[%s381 + $0xc50] sm:$0xff]
        %v2685 = vld [vmem:[%s381 + $0xc58] sm:$0xff]
        %v2686 = vld [vmem:[%s381 + $0xc60] sm:$0xff]
        %v2687 = vld [vmem:[%s381 + $0xc68] sm:$0xff]
        %v2688 = vld [vmem:[%s381 + $0xc70] sm:$0xff]
        %v2689 = vld [vmem:[%s381 + $0xc78] sm:$0xff]
        %v2690 = vld [vmem:[%s381 + $0xc80] sm:$0xff]
        %v2691 = vld [vmem:[%s381 + $0xc88] sm:$0xff]
        %v2692 = vld [vmem:[%s381 + $0xc90] sm:$0xff]
        %v2693 = vld [vmem:[%s381 + $0xc98] sm:$0xff]
        %v2694 = vld [vmem:[%s381 + $0xca0] sm:$0xff]
        %v2695 = vld [vmem:[%s381 + $0xca8] sm:$0xff]
        %v2696 = vld [vmem:[%s381 + $0xcb0] sm:$0xff]
        %v2697 = vld [vmem:[%s381 + $0xcb8] sm:$0xff]
        %v2698 = vld [vmem:[%s381 + $0xcc0] sm:$0xff]
        %v2699 = vld [vmem:[%s381 + $0xcc8] sm:$0xff]
        %v2700 = vld [vmem:[%s381 + $0xcd0] sm:$0xff]
        %v2701 = vld [vmem:[%s381 + $0xcd8] sm:$0xff]
        %v2702 = vld [vmem:[%s381 + $0xce0] sm:$0xff]
        %v2703 = vld [vmem:[%s381 + $0xce8] sm:$0xff]
        %v2704 = vld [vmem:[%s381 + $0xcf0] sm:$0xff]
        %v2705 = vld [vmem:[%s381 + $0xcf8] sm:$0xff]
        %v2706 = vld [vmem:[%s381 + $0xd00] sm:$0xff]
        %v2707 = vld [vmem:[%s381 + $0xd08] sm:$0xff]
        %v2708 = vld [vmem:[%s381 + $0xd10] sm:$0xff]
        %v2709 = vld [vmem:[%s381 + $0xd18] sm:$0xff]
        %v2710 = vld [vmem:[%s381 + $0xd20] sm:$0xff]
        %v2711 = vld [vmem:[%s381 + $0xd28] sm:$0xff]
        %v2712 = vld [vmem:[%s381 + $0xd30] sm:$0xff]
        %v2713 = vld [vmem:[%s381 + $0xd38] sm:$0xff]
        %v2714 = vld [vmem:[%s381 + $0xd40] sm:$0xff]
        %v2715 = vld [vmem:[%s381 + $0xd48] sm:$0xff]
        %v2716 = vld [vmem:[%s381 + $0xd50] sm:$0xff]
        %v2717 = vld [vmem:[%s381 + $0xd58] sm:$0xff]
        %v2718 = vld [vmem:[%s381 + $0xd60] sm:$0xff]
        %v2719 = vld [vmem:[%s381 + $0xd68] sm:$0xff]
        %v2720 = vld [vmem:[%s381 + $0xd70] sm:$0xff]
        %v2721 = vld [vmem:[%s381 + $0xd78] sm:$0xff]
        %v2722 = vld [vmem:[%s381 + $0xd80] sm:$0xff]
        %v2723 = vld [vmem:[%s381 + $0xd88] sm:$0xff]
        %v2724 = vld [vmem:[%s381 + $0xd90] sm:$0xff]
        %v2725 = vld [vmem:[%s381 + $0xd98] sm:$0xff]
        %v2726 = vld [vmem:[%s381 + $0xda0] sm:$0xff]
        %v2727 = vld [vmem:[%s381 + $0xda8] sm:$0xff]
        %v2728 = vld [vmem:[%s381 + $0xdb0] sm:$0xff]
        %v2729 = vld [vmem:[%s381 + $0xdb8] sm:$0xff]
        %v2730 = vld [vmem:[%s381 + $0xdc0] sm:$0xff]
        %v2731 = vld [vmem:[%s381 + $0xdc8] sm:$0xff]
        %v2732 = vld [vmem:[%s381 + $0xdd0] sm:$0xff]
        %v2733 = vld [vmem:[%s381 + $0xdd8] sm:$0xff]
        %v2734 = vld [vmem:[%s381 + $0xde0] sm:$0xff]
        %v2735 = vld [vmem:[%s381 + $0xde8] sm:$0xff]
        %v2736 = vld [vmem:[%s381 + $0xdf0] sm:$0xff]
        %v2737 = vld [vmem:[%s381 + $0xdf8] sm:$0xff]
        %v2738 = vld [vmem:[%s381 + $0xe00] sm:$0xff]
        %v2739 = vld [vmem:[%s381 + $0xe08] sm:$0xff]
        %v2740 = vld [vmem:[%s381 + $0xe10] sm:$0xff]
        %v2741 = vld [vmem:[%s381 + $0xe18] sm:$0xff]
        %v2742 = vld [vmem:[%s381 + $0xe20] sm:$0xff]
        %v2743 = vld [vmem:[%s381 + $0xe28] sm:$0xff]
        %v2744 = vld [vmem:[%s381 + $0xe30] sm:$0xff]
        %v2745 = vld [vmem:[%s381 + $0xe38] sm:$0xff]
        %v2746 = vld [vmem:[%s381 + $0xe40] sm:$0xff]
        %v2747 = vld [vmem:[%s381 + $0xe48] sm:$0xff]
        %v2748 = vld [vmem:[%s381 + $0xe50] sm:$0xff]
        %v2749 = vld [vmem:[%s381 + $0xe58] sm:$0xff]
        %v2750 = vld [vmem:[%s381 + $0xe60] sm:$0xff]
        %v2751 = vld [vmem:[%s381 + $0xe68] sm:$0xff]
        %v2752 = vld [vmem:[%s381 + $0xe70] sm:$0xff]
        %v2753 = vld [vmem:[%s381 + $0xe78] sm:$0xff]
        %v2754 = vld [vmem:[%s381 + $0xe80] sm:$0xff]
        %v2755 = vld [vmem:[%s381 + $0xe88] sm:$0xff]
        %v2756 = vld [vmem:[%s381 + $0xe90] sm:$0xff]
        %v2757 = vld [vmem:[%s381 + $0xe98] sm:$0xff]
        %v2758 = vld [vmem:[%s381 + $0xea0] sm:$0xff]
        %v2759 = vld [vmem:[%s381 + $0xea8] sm:$0xff]
        %v2760 = vld [vmem:[%s381 + $0xeb0] sm:$0xff]
        %v2761 = vld [vmem:[%s381 + $0xeb8] sm:$0xff]
        %v2762 = vld [vmem:[%s381 + $0xec0] sm:$0xff]
        %v2763 = vld [vmem:[%s381 + $0xec8] sm:$0xff]
        %v2764 = vld [vmem:[%s381 + $0xed0] sm:$0xff]
        %v2765 = vld [vmem:[%s381 + $0xed8] sm:$0xff]
        %v2766 = vld [vmem:[%s381 + $0xee0] sm:$0xff]
        %v2767 = vld [vmem:[%s381 + $0xee8] sm:$0xff]
        %v2768 = vld [vmem:[%s381 + $0xef0] sm:$0xff]
        %v2769 = vld [vmem:[%s381 + $0xef8] sm:$0xff]
        %v2770 = vld [vmem:[%s381 + $0xf00] sm:$0xff]
        %v2771 = vld [vmem:[%s381 + $0xf08] sm:$0xff]
        %v2772 = vld [vmem:[%s381 + $0xf10] sm:$0xff]
        %v2773 = vld [vmem:[%s381 + $0xf18] sm:$0xff]
        %v2774 = vld [vmem:[%s381 + $0xf20] sm:$0xff]
        %v2775 = vld [vmem:[%s381 + $0xf28] sm:$0xff]
        %v2776 = vld [vmem:[%s381 + $0xf30] sm:$0xff]
        %v2777 = vld [vmem:[%s381 + $0xf38] sm:$0xff]
        %v2778 = vld [vmem:[%s381 + $0xf40] sm:$0xff]
        %v2779 = vld [vmem:[%s381 + $0xf48] sm:$0xff]
        %v2780 = vld [vmem:[%s381 + $0xf50] sm:$0xff]
        %v2781 = vld [vmem:[%s381 + $0xf58] sm:$0xff]
        %v2782 = vld [vmem:[%s381 + $0xf60] sm:$0xff]
        %v2783 = vld [vmem:[%s381 + $0xf68] sm:$0xff]
        %v2784 = vld [vmem:[%s381 + $0xf70] sm:$0xff]
        %v2785 = vld [vmem:[%s381 + $0xf78] sm:$0xff]
        %v2786 = vld [vmem:[%s381 + $0xf80] sm:$0xff]
        %v2787 = vld [vmem:[%s381 + $0xf88] sm:$0xff]
        %v2788 = vld [vmem:[%s381 + $0xf90] sm:$0xff]
        %v2789 = vld [vmem:[%s381 + $0xf98] sm:$0xff]
        %v2790 = vld [vmem:[%s381 + $0xfa0] sm:$0xff]
        %v2791 = vld [vmem:[%s381 + $0xfa8] sm:$0xff]
        %v2792 = vld [vmem:[%s381 + $0xfb0] sm:$0xff]
        %v2793 = vld [vmem:[%s381 + $0xfb8] sm:$0xff]
        %v2794 = vld [vmem:[%s381 + $0xfc0] sm:$0xff]
        %v2795 = vld [vmem:[%s381 + $0xfc8] sm:$0xff]
        %v2796 = vld [vmem:[%s381 + $0xfd0] sm:$0xff]
        %v2797 = vld [vmem:[%s381 + $0xfd8] sm:$0xff]
        %v2798 = vld [vmem:[%s381 + $0xfe0] sm:$0xff]
        %v2799 = vld [vmem:[%s381 + $0xfe8] sm:$0xff]
        %v2800 = vld [vmem:[%s381 + $0xff0] sm:$0xff]
        %v2801 = vld [vmem:[%s381 + $0xff8] sm:$0xff]
        %v2802 = vld [vmem:[%s390] sm:$0xf]
        %v2804 = vlaneseq
        %v2805 = vshrl.u32 %v2804, 7
        %v2806 = vsub.s32 0, %v2805
        %v2807 = vrot.slane %v2802, %v2806
        %v2808 = vlaneseq
        %v2809 = vshrl.u32 %v2808, 7
        %v2810 = vsub.s32 1, %v2809
        %v2811 = vrot.slane %v2802, %v2810
        %v2812 = vlaneseq
        %v2813 = vshrl.u32 %v2812, 7
        %v2814 = vsub.s32 2, %v2813
        %v2815 = vrot.slane %v2802, %v2814
        %v2816 = vlaneseq
        %v2817 = vshrl.u32 %v2816, 7
        %v2818 = vsub.s32 3, %v2817
        %v2819 = vrot.slane %v2802, %v2818
        %v2826 = vcombine.high %v2288, %v2288
        %v2828 = vunpack.c.l.s4 1966171168
        %v2829 = vunpack.c.0.s8 %v2828
        %v2830 = vlaneseq
        %v2831 = vshrl.u32 %v2830, 7
        %v2832 = vsub.s32 %v2829, %v2831
        %v2833 = vrot.slane %v2288, %v2832
        %v2835 = vunpack.c.l.s4 1966171168
        %v2836 = vunpack.c.0.s8 %v2835
        %v2837 = vlaneseq
        %v2838 = vshrl.u32 %v2837, 7
        %v2839 = vsub.s32 %v2836, %v2838
        %v2840 = vrot.slane %v2826, %v2839
        %v2841 = vcombine.high %v2833, %v2833
        %v2842 = vcombine.high %v2840, %v2840
        %v2844 = vunpack.c.l.s4 1966171168
        %v2845 = vunpack.c.0.s8 %v2844
        %v2846 = vlaneseq
        %v2847 = vshrl.u32 %v2846, 7
        %v2848 = vsub.s32 %v2845, %v2847
        %v2849 = vrot.slane %v2833, %v2848
        %v2851 = vunpack.c.l.s4 1966171168
        %v2852 = vunpack.c.0.s8 %v2851
        %v2853 = vlaneseq
        %v2854 = vshrl.u32 %v2853, 7
        %v2855 = vsub.s32 %v2852, %v2854
        %v2856 = vrot.slane %v2840, %v2855
        %v2858 = vunpack.c.l.s4 1966171168
        %v2859 = vunpack.c.0.s8 %v2858
        %v2860 = vlaneseq
        %v2861 = vshrl.u32 %v2860, 7
        %v2862 = vsub.s32 %v2859, %v2861
        %v2863 = vrot.slane %v2841, %v2862
        %v2865 = vunpack.c.l.s4 1966171168
        %v2866 = vunpack.c.0.s8 %v2865
        %v2867 = vlaneseq
        %v2868 = vshrl.u32 %v2867, 7
        %v2869 = vsub.s32 %v2866, %v2868
        %v2870 = vrot.slane %v2842, %v2869
        %v2871 = vcombine.high %v2849, %v2849
        %v2872 = vcombine.high %v2856, %v2856
        %v2873 = vcombine.high %v2863, %v2863
        %v2874 = vcombine.high %v2870, %v2870
        %v2875 = vcombine.high %v2289, %v2289
        %v2877 = vunpack.c.l.s4 1966171168
        %v2878 = vunpack.c.0.s8 %v2877
        %v2879 = vlaneseq
        %v2880 = vshrl.u32 %v2879, 7
        %v2881 = vsub.s32 %v2878, %v2880
        %v2882 = vrot.slane %v2289, %v2881
        %v2884 = vunpack.c.l.s4 1966171168
        %v2885 = vunpack.c.0.s8 %v2884
        %v2886 = vlaneseq
        %v2887 = vshrl.u32 %v2886, 7
        %v2888 = vsub.s32 %v2885, %v2887
        %v2889 = vrot.slane %v2875, %v2888
        %v2890 = vcombine.high %v2882, %v2882
        %v2891 = vcombine.high %v2889, %v2889
        %v2893 = vunpack.c.l.s4 1966171168
        %v2894 = vunpack.c.0.s8 %v2893
        %v2895 = vlaneseq
        %v2896 = vshrl.u32 %v2895, 7
        %v2897 = vsub.s32 %v2894, %v2896
        %v2898 = vrot.slane %v2882, %v2897
        %v2900 = vunpack.c.l.s4 1966171168
        %v2901 = vunpack.c.0.s8 %v2900
        %v2902 = vlaneseq
        %v2903 = vshrl.u32 %v2902, 7
        %v2904 = vsub.s32 %v2901, %v2903
        %v2905 = vrot.slane %v2889, %v2904
        %v2907 = vunpack.c.l.s4 1966171168
        %v2908 = vunpack.c.0.s8 %v2907
        %v2909 = vlaneseq
        %v2910 = vshrl.u32 %v2909, 7
        %v2911 = vsub.s32 %v2908, %v2910
        %v2912 = vrot.slane %v2890, %v2911
        %v2914 = vunpack.c.l.s4 1966171168
        %v2915 = vunpack.c.0.s8 %v2914
        %v2916 = vlaneseq
        %v2917 = vshrl.u32 %v2916, 7
        %v2918 = vsub.s32 %v2915, %v2917
        %v2919 = vrot.slane %v2891, %v2918
        %v2920 = vcombine.high %v2898, %v2898
        %v2921 = vcombine.high %v2905, %v2905
        %v2922 = vcombine.high %v2912, %v2912
        %v2923 = vcombine.high %v2919, %v2919
        %v3452 = vunpack.c.l.b16 %v2290
        %v3453 = vunpack.c.h.b16 %v2290
        %v3454 = vunpack.c.l.b16 %v2291
        %v3455 = vunpack.c.h.b16 %v2291
        %v3456 = vunpack.c.l.b16 %v2292
        %v3457 = vunpack.c.h.b16 %v2292
        %v3458 = vunpack.c.l.b16 %v2293
        %v3459 = vunpack.c.h.b16 %v2293
        %v3460 = vunpack.c.l.b16 %v2294
        %v3461 = vunpack.c.h.b16 %v2294
        %v3462 = vunpack.c.l.b16 %v2295
        %v3463 = vunpack.c.h.b16 %v2295
        %v3464 = vunpack.c.l.b16 %v2296
        %v3465 = vunpack.c.h.b16 %v2296
        %v3466 = vunpack.c.l.b16 %v2297
        %v3467 = vunpack.c.h.b16 %v2297
        %v3468 = vunpack.c.l.b16 %v2298
        %v3469 = vunpack.c.h.b16 %v2298
        %v3470 = vunpack.c.l.b16 %v2299
        %v3471 = vunpack.c.h.b16 %v2299
        %v3472 = vunpack.c.l.b16 %v2300
        %v3473 = vunpack.c.h.b16 %v2300
        %v3474 = vunpack.c.l.b16 %v2301
        %v3475 = vunpack.c.h.b16 %v2301
        %v3476 = vunpack.c.l.b16 %v2302
        %v3477 = vunpack.c.h.b16 %v2302
        %v3478 = vunpack.c.l.b16 %v2303
        %v3479 = vunpack.c.h.b16 %v2303
        %v3480 = vunpack.c.l.b16 %v2304
        %v3481 = vunpack.c.h.b16 %v2304
        %v3482 = vunpack.c.l.b16 %v2305
        %v3483 = vunpack.c.h.b16 %v2305
        %v3484 = vunpack.c.l.b16 %v2306
        %v3485 = vunpack.c.h.b16 %v2306
        %v3486 = vunpack.c.l.b16 %v2307
        %v3487 = vunpack.c.h.b16 %v2307
        %v3488 = vunpack.c.l.b16 %v2308
        %v3489 = vunpack.c.h.b16 %v2308
        %v3490 = vunpack.c.l.b16 %v2309
        %v3491 = vunpack.c.h.b16 %v2309
        %v3492 = vunpack.c.l.b16 %v2310
        %v3493 = vunpack.c.h.b16 %v2310
        %v3494 = vunpack.c.l.b16 %v2311
        %v3495 = vunpack.c.h.b16 %v2311
        %v3496 = vunpack.c.l.b16 %v2312
        %v3497 = vunpack.c.h.b16 %v2312
        %v3498 = vunpack.c.l.b16 %v2313
        %v3499 = vunpack.c.h.b16 %v2313
        %v3500 = vunpack.c.l.b16 %v2314
        %v3501 = vunpack.c.h.b16 %v2314
        %v3502 = vunpack.c.l.b16 %v2315
        %v3503 = vunpack.c.h.b16 %v2315
        %v3504 = vunpack.c.l.b16 %v2316
        %v3505 = vunpack.c.h.b16 %v2316
        %v3506 = vunpack.c.l.b16 %v2317
        %v3507 = vunpack.c.h.b16 %v2317
        %v3508 = vunpack.c.l.b16 %v2318
        %v3509 = vunpack.c.h.b16 %v2318
        %v3510 = vunpack.c.l.b16 %v2319
        %v3511 = vunpack.c.h.b16 %v2319
        %v3512 = vunpack.c.l.b16 %v2320
        %v3513 = vunpack.c.h.b16 %v2320
        %v3514 = vunpack.c.l.b16 %v2321
        %v3515 = vunpack.c.h.b16 %v2321
        %v3516 = vunpack.c.l.b16 %v2322
        %v3517 = vunpack.c.h.b16 %v2322
        %v3518 = vunpack.c.l.b16 %v2323
        %v3519 = vunpack.c.h.b16 %v2323
        %v3520 = vunpack.c.l.b16 %v2324
        %v3521 = vunpack.c.h.b16 %v2324
        %v3522 = vunpack.c.l.b16 %v2325
        %v3523 = vunpack.c.h.b16 %v2325
        %v3524 = vunpack.c.l.b16 %v2326
        %v3525 = vunpack.c.h.b16 %v2326
        %v3526 = vunpack.c.l.b16 %v2327
        %v3527 = vunpack.c.h.b16 %v2327
        %v3528 = vunpack.c.l.b16 %v2328
        %v3529 = vunpack.c.h.b16 %v2328
        %v3530 = vunpack.c.l.b16 %v2329
        %v3531 = vunpack.c.h.b16 %v2329
        %v3532 = vunpack.c.l.b16 %v2330
        %v3533 = vunpack.c.h.b16 %v2330
        %v3534 = vunpack.c.l.b16 %v2331
        %v3535 = vunpack.c.h.b16 %v2331
        %v3536 = vunpack.c.l.b16 %v2332
        %v3537 = vunpack.c.h.b16 %v2332
        %v3538 = vunpack.c.l.b16 %v2333
        %v3539 = vunpack.c.h.b16 %v2333
        %v3540 = vunpack.c.l.b16 %v2334
        %v3541 = vunpack.c.h.b16 %v2334
        %v3542 = vunpack.c.l.b16 %v2335
        %v3543 = vunpack.c.h.b16 %v2335
        %v3544 = vunpack.c.l.b16 %v2336
        %v3545 = vunpack.c.h.b16 %v2336
        %v3546 = vunpack.c.l.b16 %v2337
        %v3547 = vunpack.c.h.b16 %v2337
        %v3548 = vunpack.c.l.b16 %v2338
        %v3549 = vunpack.c.h.b16 %v2338
        %v3550 = vunpack.c.l.b16 %v2339
        %v3551 = vunpack.c.h.b16 %v2339
        %v3552 = vunpack.c.l.b16 %v2340
        %v3553 = vunpack.c.h.b16 %v2340
        %v3554 = vunpack.c.l.b16 %v2341
        %v3555 = vunpack.c.h.b16 %v2341
        %v3556 = vunpack.c.l.b16 %v2342
        %v3557 = vunpack.c.h.b16 %v2342
        %v3558 = vunpack.c.l.b16 %v2343
        %v3559 = vunpack.c.h.b16 %v2343
        %v3560 = vunpack.c.l.b16 %v2344
        %v3561 = vunpack.c.h.b16 %v2344
        %v3562 = vunpack.c.l.b16 %v2345
        %v3563 = vunpack.c.h.b16 %v2345
        %v3564 = vunpack.c.l.b16 %v2346
        %v3565 = vunpack.c.h.b16 %v2346
        %v3566 = vunpack.c.l.b16 %v2347
        %v3567 = vunpack.c.h.b16 %v2347
        %v3568 = vunpack.c.l.b16 %v2348
        %v3569 = vunpack.c.h.b16 %v2348
        %v3570 = vunpack.c.l.b16 %v2349
        %v3571 = vunpack.c.h.b16 %v2349
        %v3572 = vunpack.c.l.b16 %v2350
        %v3573 = vunpack.c.h.b16 %v2350
        %v3574 = vunpack.c.l.b16 %v2351
        %v3575 = vunpack.c.h.b16 %v2351
        %v3576 = vunpack.c.l.b16 %v2352
        %v3577 = vunpack.c.h.b16 %v2352
        %v3578 = vunpack.c.l.b16 %v2353
        %v3579 = vunpack.c.h.b16 %v2353
        %v3580 = vunpack.c.l.b16 %v2354
        %v3581 = vunpack.c.h.b16 %v2354
        %v3582 = vunpack.c.l.b16 %v2355
        %v3583 = vunpack.c.h.b16 %v2355
        %v3584 = vunpack.c.l.b16 %v2356
        %v3585 = vunpack.c.h.b16 %v2356
        %v3586 = vunpack.c.l.b16 %v2357
        %v3587 = vunpack.c.h.b16 %v2357
        %v3588 = vunpack.c.l.b16 %v2358
        %v3589 = vunpack.c.h.b16 %v2358
        %v3590 = vunpack.c.l.b16 %v2359
        %v3591 = vunpack.c.h.b16 %v2359
        %v3592 = vunpack.c.l.b16 %v2360
        %v3593 = vunpack.c.h.b16 %v2360
        %v3594 = vunpack.c.l.b16 %v2361
        %v3595 = vunpack.c.h.b16 %v2361
        %v3596 = vunpack.c.l.b16 %v2362
        %v3597 = vunpack.c.h.b16 %v2362
        %v3598 = vunpack.c.l.b16 %v2363
        %v3599 = vunpack.c.h.b16 %v2363
        %v3600 = vunpack.c.l.b16 %v2364
        %v3601 = vunpack.c.h.b16 %v2364
        %v3602 = vunpack.c.l.b16 %v2365
        %v3603 = vunpack.c.h.b16 %v2365
        %v3604 = vunpack.c.l.b16 %v2366
        %v3605 = vunpack.c.h.b16 %v2366
        %v3606 = vunpack.c.l.b16 %v2367
        %v3607 = vunpack.c.h.b16 %v2367
        %v3608 = vunpack.c.l.b16 %v2368
        %v3609 = vunpack.c.h.b16 %v2368
        %v3610 = vunpack.c.l.b16 %v2369
        %v3611 = vunpack.c.h.b16 %v2369
        %v3612 = vunpack.c.l.b16 %v2370
        %v3613 = vunpack.c.h.b16 %v2370
        %v3614 = vunpack.c.l.b16 %v2371
        %v3615 = vunpack.c.h.b16 %v2371
        %v3616 = vunpack.c.l.b16 %v2372
        %v3617 = vunpack.c.h.b16 %v2372
        %v3618 = vunpack.c.l.b16 %v2373
        %v3619 = vunpack.c.h.b16 %v2373
        %v3620 = vunpack.c.l.b16 %v2374
        %v3621 = vunpack.c.h.b16 %v2374
        %v3622 = vunpack.c.l.b16 %v2375
        %v3623 = vunpack.c.h.b16 %v2375
        %v3624 = vunpack.c.l.b16 %v2376
        %v3625 = vunpack.c.h.b16 %v2376
        %v3626 = vunpack.c.l.b16 %v2377
        %v3627 = vunpack.c.h.b16 %v2377
        %v3628 = vunpack.c.l.b16 %v2378
        %v3629 = vunpack.c.h.b16 %v2378
        %v3630 = vunpack.c.l.b16 %v2379
        %v3631 = vunpack.c.h.b16 %v2379
        %v3632 = vunpack.c.l.b16 %v2380
        %v3633 = vunpack.c.h.b16 %v2380
        %v3634 = vunpack.c.l.b16 %v2381
        %v3635 = vunpack.c.h.b16 %v2381
        %v3636 = vunpack.c.l.b16 %v2382
        %v3637 = vunpack.c.h.b16 %v2382
        %v3638 = vunpack.c.l.b16 %v2383
        %v3639 = vunpack.c.h.b16 %v2383
        %v3640 = vunpack.c.l.b16 %v2384
        %v3641 = vunpack.c.h.b16 %v2384
        %v3642 = vunpack.c.l.b16 %v2385
        %v3643 = vunpack.c.h.b16 %v2385
        %v3644 = vunpack.c.l.b16 %v2386
        %v3645 = vunpack.c.h.b16 %v2386
        %v3646 = vunpack.c.l.b16 %v2387
        %v3647 = vunpack.c.h.b16 %v2387
        %v3648 = vunpack.c.l.b16 %v2388
        %v3649 = vunpack.c.h.b16 %v2388
        %v3650 = vunpack.c.l.b16 %v2389
        %v3651 = vunpack.c.h.b16 %v2389
        %v3652 = vunpack.c.l.b16 %v2390
        %v3653 = vunpack.c.h.b16 %v2390
        %v3654 = vunpack.c.l.b16 %v2391
        %v3655 = vunpack.c.h.b16 %v2391
        %v3656 = vunpack.c.l.b16 %v2392
        %v3657 = vunpack.c.h.b16 %v2392
        %v3658 = vunpack.c.l.b16 %v2393
        %v3659 = vunpack.c.h.b16 %v2393
        %v3660 = vunpack.c.l.b16 %v2394
        %v3661 = vunpack.c.h.b16 %v2394
        %v3662 = vunpack.c.l.b16 %v2395
        %v3663 = vunpack.c.h.b16 %v2395
        %v3664 = vunpack.c.l.b16 %v2396
        %v3665 = vunpack.c.h.b16 %v2396
        %v3666 = vunpack.c.l.b16 %v2397
        %v3667 = vunpack.c.h.b16 %v2397
        %v3668 = vunpack.c.l.b16 %v2398
        %v3669 = vunpack.c.h.b16 %v2398
        %v3670 = vunpack.c.l.b16 %v2399
        %v3671 = vunpack.c.h.b16 %v2399
        %v3672 = vunpack.c.l.b16 %v2400
        %v3673 = vunpack.c.h.b16 %v2400
        %v3674 = vunpack.c.l.b16 %v2401
        %v3675 = vunpack.c.h.b16 %v2401
        %v3676 = vunpack.c.l.b16 %v2402
        %v3677 = vunpack.c.h.b16 %v2402
        %v3678 = vunpack.c.l.b16 %v2403
        %v3679 = vunpack.c.h.b16 %v2403
        %v3680 = vunpack.c.l.b16 %v2404
        %v3681 = vunpack.c.h.b16 %v2404
        %v3682 = vunpack.c.l.b16 %v2405
        %v3683 = vunpack.c.h.b16 %v2405
        %v3684 = vunpack.c.l.b16 %v2406
        %v3685 = vunpack.c.h.b16 %v2406
        %v3686 = vunpack.c.l.b16 %v2407
        %v3687 = vunpack.c.h.b16 %v2407
        %v3688 = vunpack.c.l.b16 %v2408
        %v3689 = vunpack.c.h.b16 %v2408
        %v3690 = vunpack.c.l.b16 %v2409
        %v3691 = vunpack.c.h.b16 %v2409
        %v3692 = vunpack.c.l.b16 %v2410
        %v3693 = vunpack.c.h.b16 %v2410
        %v3694 = vunpack.c.l.b16 %v2411
        %v3695 = vunpack.c.h.b16 %v2411
        %v3696 = vunpack.c.l.b16 %v2412
        %v3697 = vunpack.c.h.b16 %v2412
        %v3698 = vunpack.c.l.b16 %v2413
        %v3699 = vunpack.c.h.b16 %v2413
        %v3700 = vunpack.c.l.b16 %v2414
        %v3701 = vunpack.c.h.b16 %v2414
        %v3702 = vunpack.c.l.b16 %v2415
        %v3703 = vunpack.c.h.b16 %v2415
        %v3704 = vunpack.c.l.b16 %v2416
        %v3705 = vunpack.c.h.b16 %v2416
        %v3706 = vunpack.c.l.b16 %v2417
        %v3707 = vunpack.c.h.b16 %v2417
        %v3708 = vunpack.c.l.b16 %v2418
        %v3709 = vunpack.c.h.b16 %v2418
        %v3710 = vunpack.c.l.b16 %v2419
        %v3711 = vunpack.c.h.b16 %v2419
        %v3712 = vunpack.c.l.b16 %v2420
        %v3713 = vunpack.c.h.b16 %v2420
        %v3714 = vunpack.c.l.b16 %v2421
        %v3715 = vunpack.c.h.b16 %v2421
        %v3716 = vunpack.c.l.b16 %v2422
        %v3717 = vunpack.c.h.b16 %v2422
        %v3718 = vunpack.c.l.b16 %v2423
        %v3719 = vunpack.c.h.b16 %v2423
        %v3720 = vunpack.c.l.b16 %v2424
        %v3721 = vunpack.c.h.b16 %v2424
        %v3722 = vunpack.c.l.b16 %v2425
        %v3723 = vunpack.c.h.b16 %v2425
        %v3724 = vunpack.c.l.b16 %v2426
        %v3725 = vunpack.c.h.b16 %v2426
        %v3726 = vunpack.c.l.b16 %v2427
        %v3727 = vunpack.c.h.b16 %v2427
        %v3728 = vunpack.c.l.b16 %v2428
        %v3729 = vunpack.c.h.b16 %v2428
        %v3730 = vunpack.c.l.b16 %v2429
        %v3731 = vunpack.c.h.b16 %v2429
        %v3732 = vunpack.c.l.b16 %v2430
        %v3733 = vunpack.c.h.b16 %v2430
        %v3734 = vunpack.c.l.b16 %v2431
        %v3735 = vunpack.c.h.b16 %v2431
        %v3736 = vunpack.c.l.b16 %v2432
        %v3737 = vunpack.c.h.b16 %v2432
        %v3738 = vunpack.c.l.b16 %v2433
        %v3739 = vunpack.c.h.b16 %v2433
        %v3740 = vunpack.c.l.b16 %v2434
        %v3741 = vunpack.c.h.b16 %v2434
        %v3742 = vunpack.c.l.b16 %v2435
        %v3743 = vunpack.c.h.b16 %v2435
        %v3744 = vunpack.c.l.b16 %v2436
        %v3745 = vunpack.c.h.b16 %v2436
        %v3746 = vunpack.c.l.b16 %v2437
        %v3747 = vunpack.c.h.b16 %v2437
        %v3748 = vunpack.c.l.b16 %v2438
        %v3749 = vunpack.c.h.b16 %v2438
        %v3750 = vunpack.c.l.b16 %v2439
        %v3751 = vunpack.c.h.b16 %v2439
        %v3752 = vunpack.c.l.b16 %v2440
        %v3753 = vunpack.c.h.b16 %v2440
        %v3754 = vunpack.c.l.b16 %v2441
        %v3755 = vunpack.c.h.b16 %v2441
        %v3756 = vunpack.c.l.b16 %v2442
        %v3757 = vunpack.c.h.b16 %v2442
        %v3758 = vunpack.c.l.b16 %v2443
        %v3759 = vunpack.c.h.b16 %v2443
        %v3760 = vunpack.c.l.b16 %v2444
        %v3761 = vunpack.c.h.b16 %v2444
        %v3762 = vunpack.c.l.b16 %v2445
        %v3763 = vunpack.c.h.b16 %v2445
        %v3764 = vunpack.c.l.b16 %v2446
        %v3765 = vunpack.c.h.b16 %v2446
        %v3766 = vunpack.c.l.b16 %v2447
        %v3767 = vunpack.c.h.b16 %v2447
        %v3768 = vunpack.c.l.b16 %v2448
        %v3769 = vunpack.c.h.b16 %v2448
        %v3770 = vunpack.c.l.b16 %v2449
        %v3771 = vunpack.c.h.b16 %v2449
        %v3772 = vunpack.c.l.b16 %v2450
        %v3773 = vunpack.c.h.b16 %v2450
        %v3774 = vunpack.c.l.b16 %v2451
        %v3775 = vunpack.c.h.b16 %v2451
        %v3776 = vunpack.c.l.b16 %v2452
        %v3777 = vunpack.c.h.b16 %v2452
        %v3778 = vunpack.c.l.b16 %v2453
        %v3779 = vunpack.c.h.b16 %v2453
        %v3780 = vunpack.c.l.b16 %v2454
        %v3781 = vunpack.c.h.b16 %v2454
        %v3782 = vunpack.c.l.b16 %v2455
        %v3783 = vunpack.c.h.b16 %v2455
        %v3784 = vunpack.c.l.b16 %v2456
        %v3785 = vunpack.c.h.b16 %v2456
        %v3786 = vunpack.c.l.b16 %v2457
        %v3787 = vunpack.c.h.b16 %v2457
        %v3788 = vunpack.c.l.b16 %v2458
        %v3789 = vunpack.c.h.b16 %v2458
        %v3790 = vunpack.c.l.b16 %v2459
        %v3791 = vunpack.c.h.b16 %v2459
        %v3792 = vunpack.c.l.b16 %v2460
        %v3793 = vunpack.c.h.b16 %v2460
        %v3794 = vunpack.c.l.b16 %v2461
        %v3795 = vunpack.c.h.b16 %v2461
        %v3796 = vunpack.c.l.b16 %v2462
        %v3797 = vunpack.c.h.b16 %v2462
        %v3798 = vunpack.c.l.b16 %v2463
        %v3799 = vunpack.c.h.b16 %v2463
        %v3800 = vunpack.c.l.b16 %v2464
        %v3801 = vunpack.c.h.b16 %v2464
        %v3802 = vunpack.c.l.b16 %v2465
        %v3803 = vunpack.c.h.b16 %v2465
        %v3804 = vunpack.c.l.b16 %v2466
        %v3805 = vunpack.c.h.b16 %v2466
        %v3806 = vunpack.c.l.b16 %v2467
        %v3807 = vunpack.c.h.b16 %v2467
        %v3808 = vunpack.c.l.b16 %v2468
        %v3809 = vunpack.c.h.b16 %v2468
        %v3810 = vunpack.c.l.b16 %v2469
        %v3811 = vunpack.c.h.b16 %v2469
        %v3812 = vunpack.c.l.b16 %v2470
        %v3813 = vunpack.c.h.b16 %v2470
        %v3814 = vunpack.c.l.b16 %v2471
        %v3815 = vunpack.c.h.b16 %v2471
        %v3816 = vunpack.c.l.b16 %v2472
        %v3817 = vunpack.c.h.b16 %v2472
        %v3818 = vunpack.c.l.b16 %v2473
        %v3819 = vunpack.c.h.b16 %v2473
        %v3820 = vunpack.c.l.b16 %v2474
        %v3821 = vunpack.c.h.b16 %v2474
        %v3822 = vunpack.c.l.b16 %v2475
        %v3823 = vunpack.c.h.b16 %v2475
        %v3824 = vunpack.c.l.b16 %v2476
        %v3825 = vunpack.c.h.b16 %v2476
        %v3826 = vunpack.c.l.b16 %v2477
        %v3827 = vunpack.c.h.b16 %v2477
        %v3828 = vunpack.c.l.b16 %v2478
        %v3829 = vunpack.c.h.b16 %v2478
        %v3830 = vunpack.c.l.b16 %v2479
        %v3831 = vunpack.c.h.b16 %v2479
        %v3832 = vunpack.c.l.b16 %v2480
        %v3833 = vunpack.c.h.b16 %v2480
        %v3834 = vunpack.c.l.b16 %v2481
        %v3835 = vunpack.c.h.b16 %v2481
        %v3836 = vunpack.c.l.b16 %v2482
        %v3837 = vunpack.c.h.b16 %v2482
        %v3838 = vunpack.c.l.b16 %v2483
        %v3839 = vunpack.c.h.b16 %v2483
        %v3840 = vunpack.c.l.b16 %v2484
        %v3841 = vunpack.c.h.b16 %v2484
        %v3842 = vunpack.c.l.b16 %v2485
        %v3843 = vunpack.c.h.b16 %v2485
        %v3844 = vunpack.c.l.b16 %v2486
        %v3845 = vunpack.c.h.b16 %v2486
        %v3846 = vunpack.c.l.b16 %v2487
        %v3847 = vunpack.c.h.b16 %v2487
        %v3848 = vunpack.c.l.b16 %v2488
        %v3849 = vunpack.c.h.b16 %v2488
        %v3850 = vunpack.c.l.b16 %v2489
        %v3851 = vunpack.c.h.b16 %v2489
        %v3852 = vunpack.c.l.b16 %v2490
        %v3853 = vunpack.c.h.b16 %v2490
        %v3854 = vunpack.c.l.b16 %v2491
        %v3855 = vunpack.c.h.b16 %v2491
        %v3856 = vunpack.c.l.b16 %v2492
        %v3857 = vunpack.c.h.b16 %v2492
        %v3858 = vunpack.c.l.b16 %v2493
        %v3859 = vunpack.c.h.b16 %v2493
        %v3860 = vunpack.c.l.b16 %v2494
        %v3861 = vunpack.c.h.b16 %v2494
        %v3862 = vunpack.c.l.b16 %v2495
        %v3863 = vunpack.c.h.b16 %v2495
        %v3864 = vunpack.c.l.b16 %v2496
        %v3865 = vunpack.c.h.b16 %v2496
        %v3866 = vunpack.c.l.b16 %v2497
        %v3867 = vunpack.c.h.b16 %v2497
        %v3868 = vunpack.c.l.b16 %v2498
        %v3869 = vunpack.c.h.b16 %v2498
        %v3870 = vunpack.c.l.b16 %v2499
        %v3871 = vunpack.c.h.b16 %v2499
        %v3872 = vunpack.c.l.b16 %v2500
        %v3873 = vunpack.c.h.b16 %v2500
        %v3874 = vunpack.c.l.b16 %v2501
        %v3875 = vunpack.c.h.b16 %v2501
        %v3876 = vunpack.c.l.b16 %v2502
        %v3877 = vunpack.c.h.b16 %v2502
        %v3878 = vunpack.c.l.b16 %v2503
        %v3879 = vunpack.c.h.b16 %v2503
        %v3880 = vunpack.c.l.b16 %v2504
        %v3881 = vunpack.c.h.b16 %v2504
        %v3882 = vunpack.c.l.b16 %v2505
        %v3883 = vunpack.c.h.b16 %v2505
        %v3884 = vunpack.c.l.b16 %v2506
        %v3885 = vunpack.c.h.b16 %v2506
        %v3886 = vunpack.c.l.b16 %v2507
        %v3887 = vunpack.c.h.b16 %v2507
        %v3888 = vunpack.c.l.b16 %v2508
        %v3889 = vunpack.c.h.b16 %v2508
        %v3890 = vunpack.c.l.b16 %v2509
        %v3891 = vunpack.c.h.b16 %v2509
        %v3892 = vunpack.c.l.b16 %v2510
        %v3893 = vunpack.c.h.b16 %v2510
        %v3894 = vunpack.c.l.b16 %v2511
        %v3895 = vunpack.c.h.b16 %v2511
        %v3896 = vunpack.c.l.b16 %v2512
        %v3897 = vunpack.c.h.b16 %v2512
        %v3898 = vunpack.c.l.b16 %v2513
        %v3899 = vunpack.c.h.b16 %v2513
        %v3900 = vunpack.c.l.b16 %v2514
        %v3901 = vunpack.c.h.b16 %v2514
        %v3902 = vunpack.c.l.b16 %v2515
        %v3903 = vunpack.c.h.b16 %v2515
        %v3904 = vunpack.c.l.b16 %v2516
        %v3905 = vunpack.c.h.b16 %v2516
        %v3906 = vunpack.c.l.b16 %v2517
        %v3907 = vunpack.c.h.b16 %v2517
        %v3908 = vunpack.c.l.b16 %v2518
        %v3909 = vunpack.c.h.b16 %v2518
        %v3910 = vunpack.c.l.b16 %v2519
        %v3911 = vunpack.c.h.b16 %v2519
        %v3912 = vunpack.c.l.b16 %v2520
        %v3913 = vunpack.c.h.b16 %v2520
        %v3914 = vunpack.c.l.b16 %v2521
        %v3915 = vunpack.c.h.b16 %v2521
        %v3916 = vunpack.c.l.b16 %v2522
        %v3917 = vunpack.c.h.b16 %v2522
        %v3918 = vunpack.c.l.b16 %v2523
        %v3919 = vunpack.c.h.b16 %v2523
        %v3920 = vunpack.c.l.b16 %v2524
        %v3921 = vunpack.c.h.b16 %v2524
        %v3922 = vunpack.c.l.b16 %v2525
        %v3923 = vunpack.c.h.b16 %v2525
        %v3924 = vunpack.c.l.b16 %v2526
        %v3925 = vunpack.c.h.b16 %v2526
        %v3926 = vunpack.c.l.b16 %v2527
        %v3927 = vunpack.c.h.b16 %v2527
        %v3928 = vunpack.c.l.b16 %v2528
        %v3929 = vunpack.c.h.b16 %v2528
        %v3930 = vunpack.c.l.b16 %v2529
        %v3931 = vunpack.c.h.b16 %v2529
        %v3932 = vunpack.c.l.b16 %v2530
        %v3933 = vunpack.c.h.b16 %v2530
        %v3934 = vunpack.c.l.b16 %v2531
        %v3935 = vunpack.c.h.b16 %v2531
        %v3936 = vunpack.c.l.b16 %v2532
        %v3937 = vunpack.c.h.b16 %v2532
        %v3938 = vunpack.c.l.b16 %v2533
        %v3939 = vunpack.c.h.b16 %v2533
        %v3940 = vunpack.c.l.b16 %v2534
        %v3941 = vunpack.c.h.b16 %v2534
        %v3942 = vunpack.c.l.b16 %v2535
        %v3943 = vunpack.c.h.b16 %v2535
        %v3944 = vunpack.c.l.b16 %v2536
        %v3945 = vunpack.c.h.b16 %v2536
        %v3946 = vunpack.c.l.b16 %v2537
        %v3947 = vunpack.c.h.b16 %v2537
        %v3948 = vunpack.c.l.b16 %v2538
        %v3949 = vunpack.c.h.b16 %v2538
        %v3950 = vunpack.c.l.b16 %v2539
        %v3951 = vunpack.c.h.b16 %v2539
        %v3952 = vunpack.c.l.b16 %v2540
        %v3953 = vunpack.c.h.b16 %v2540
        %v3954 = vunpack.c.l.b16 %v2541
        %v3955 = vunpack.c.h.b16 %v2541
        %v3956 = vunpack.c.l.b16 %v2542
        %v3957 = vunpack.c.h.b16 %v2542
        %v3958 = vunpack.c.l.b16 %v2543
        %v3959 = vunpack.c.h.b16 %v2543
        %v3960 = vunpack.c.l.b16 %v2544
        %v3961 = vunpack.c.h.b16 %v2544
        %v3962 = vunpack.c.l.b16 %v2545
        %v3963 = vunpack.c.h.b16 %v2545
        %v3964 = vunpack.c.l.b16 %v2546
        %v3965 = vunpack.c.h.b16 %v2546
        %v3966 = vunpack.c.l.b16 %v2547
        %v3967 = vunpack.c.h.b16 %v2547
        %v3968 = vunpack.c.l.b16 %v2548
        %v3969 = vunpack.c.h.b16 %v2548
        %v3970 = vunpack.c.l.b16 %v2549
        %v3971 = vunpack.c.h.b16 %v2549
        %v3972 = vunpack.c.l.b16 %v2550
        %v3973 = vunpack.c.h.b16 %v2550
        %v3974 = vunpack.c.l.b16 %v2551
        %v3975 = vunpack.c.h.b16 %v2551
        %v3976 = vunpack.c.l.b16 %v2552
        %v3977 = vunpack.c.h.b16 %v2552
        %v3978 = vunpack.c.l.b16 %v2553
        %v3979 = vunpack.c.h.b16 %v2553
        %v3980 = vunpack.c.l.b16 %v2554
        %v3981 = vunpack.c.h.b16 %v2554
        %v3982 = vunpack.c.l.b16 %v2555
        %v3983 = vunpack.c.h.b16 %v2555
        %v3984 = vunpack.c.l.b16 %v2556
        %v3985 = vunpack.c.h.b16 %v2556
        %v3986 = vunpack.c.l.b16 %v2557
        %v3987 = vunpack.c.h.b16 %v2557
        %v3988 = vunpack.c.l.b16 %v2558
        %v3989 = vunpack.c.h.b16 %v2558
        %v3990 = vunpack.c.l.b16 %v2559
        %v3991 = vunpack.c.h.b16 %v2559
        %v3992 = vunpack.c.l.b16 %v2560
        %v3993 = vunpack.c.h.b16 %v2560
        %v3994 = vunpack.c.l.b16 %v2561
        %v3995 = vunpack.c.h.b16 %v2561
        %v3996 = vunpack.c.l.b16 %v2562
        %v3997 = vunpack.c.h.b16 %v2562
        %v3998 = vunpack.c.l.b16 %v2563
        %v3999 = vunpack.c.h.b16 %v2563
        %v4000 = vunpack.c.l.b16 %v2564
        %v4001 = vunpack.c.h.b16 %v2564
        %v4002 = vunpack.c.l.b16 %v2565
        %v4003 = vunpack.c.h.b16 %v2565
        %v4004 = vunpack.c.l.b16 %v2566
        %v4005 = vunpack.c.h.b16 %v2566
        %v4006 = vunpack.c.l.b16 %v2567
        %v4007 = vunpack.c.h.b16 %v2567
        %v4008 = vunpack.c.l.b16 %v2568
        %v4009 = vunpack.c.h.b16 %v2568
        %v4010 = vunpack.c.l.b16 %v2569
        %v4011 = vunpack.c.h.b16 %v2569
        %v4012 = vunpack.c.l.b16 %v2570
        %v4013 = vunpack.c.h.b16 %v2570
        %v4014 = vunpack.c.l.b16 %v2571
        %v4015 = vunpack.c.h.b16 %v2571
        %v4016 = vunpack.c.l.b16 %v2572
        %v4017 = vunpack.c.h.b16 %v2572
        %v4018 = vunpack.c.l.b16 %v2573
        %v4019 = vunpack.c.h.b16 %v2573
        %v4020 = vunpack.c.l.b16 %v2574
        %v4021 = vunpack.c.h.b16 %v2574
        %v4022 = vunpack.c.l.b16 %v2575
        %v4023 = vunpack.c.h.b16 %v2575
        %v4024 = vunpack.c.l.b16 %v2576
        %v4025 = vunpack.c.h.b16 %v2576
        %v4026 = vunpack.c.l.b16 %v2577
        %v4027 = vunpack.c.h.b16 %v2577
        %v4028 = vunpack.c.l.b16 %v2578
        %v4029 = vunpack.c.h.b16 %v2578
        %v4030 = vunpack.c.l.b16 %v2579
        %v4031 = vunpack.c.h.b16 %v2579
        %v4032 = vunpack.c.l.b16 %v2580
        %v4033 = vunpack.c.h.b16 %v2580
        %v4034 = vunpack.c.l.b16 %v2581
        %v4035 = vunpack.c.h.b16 %v2581
        %v4036 = vunpack.c.l.b16 %v2582
        %v4037 = vunpack.c.h.b16 %v2582
        %v4038 = vunpack.c.l.b16 %v2583
        %v4039 = vunpack.c.h.b16 %v2583
        %v4040 = vunpack.c.l.b16 %v2584
        %v4041 = vunpack.c.h.b16 %v2584
        %v4042 = vunpack.c.l.b16 %v2585
        %v4043 = vunpack.c.h.b16 %v2585
        %v4044 = vunpack.c.l.b16 %v2586
        %v4045 = vunpack.c.h.b16 %v2586
        %v4046 = vunpack.c.l.b16 %v2587
        %v4047 = vunpack.c.h.b16 %v2587
        %v4048 = vunpack.c.l.b16 %v2588
        %v4049 = vunpack.c.h.b16 %v2588
        %v4050 = vunpack.c.l.b16 %v2589
        %v4051 = vunpack.c.h.b16 %v2589
        %v4052 = vunpack.c.l.b16 %v2590
        %v4053 = vunpack.c.h.b16 %v2590
        %v4054 = vunpack.c.l.b16 %v2591
        %v4055 = vunpack.c.h.b16 %v2591
        %v4056 = vunpack.c.l.b16 %v2592
        %v4057 = vunpack.c.h.b16 %v2592
        %v4058 = vunpack.c.l.b16 %v2593
        %v4059 = vunpack.c.h.b16 %v2593
        %v4060 = vunpack.c.l.b16 %v2594
        %v4061 = vunpack.c.h.b16 %v2594
        %v4062 = vunpack.c.l.b16 %v2595
        %v4063 = vunpack.c.h.b16 %v2595
        %v4064 = vunpack.c.l.b16 %v2596
        %v4065 = vunpack.c.h.b16 %v2596
        %v4066 = vunpack.c.l.b16 %v2597
        %v4067 = vunpack.c.h.b16 %v2597
        %v4068 = vunpack.c.l.b16 %v2598
        %v4069 = vunpack.c.h.b16 %v2598
        %v4070 = vunpack.c.l.b16 %v2599
        %v4071 = vunpack.c.h.b16 %v2599
        %v4072 = vunpack.c.l.b16 %v2600
        %v4073 = vunpack.c.h.b16 %v2600
        %v4074 = vunpack.c.l.b16 %v2601
        %v4075 = vunpack.c.h.b16 %v2601
        %v4076 = vunpack.c.l.b16 %v2602
        %v4077 = vunpack.c.h.b16 %v2602
        %v4078 = vunpack.c.l.b16 %v2603
        %v4079 = vunpack.c.h.b16 %v2603
        %v4080 = vunpack.c.l.b16 %v2604
        %v4081 = vunpack.c.h.b16 %v2604
        %v4082 = vunpack.c.l.b16 %v2605
        %v4083 = vunpack.c.h.b16 %v2605
        %v4084 = vunpack.c.l.b16 %v2606
        %v4085 = vunpack.c.h.b16 %v2606
        %v4086 = vunpack.c.l.b16 %v2607
        %v4087 = vunpack.c.h.b16 %v2607
        %v4088 = vunpack.c.l.b16 %v2608
        %v4089 = vunpack.c.h.b16 %v2608
        %v4090 = vunpack.c.l.b16 %v2609
        %v4091 = vunpack.c.h.b16 %v2609
        %v4092 = vunpack.c.l.b16 %v2610
        %v4093 = vunpack.c.h.b16 %v2610
        %v4094 = vunpack.c.l.b16 %v2611
        %v4095 = vunpack.c.h.b16 %v2611
        %v4096 = vunpack.c.l.b16 %v2612
        %v4097 = vunpack.c.h.b16 %v2612
        %v4098 = vunpack.c.l.b16 %v2613
        %v4099 = vunpack.c.h.b16 %v2613
        %v4100 = vunpack.c.l.b16 %v2614
        %v4101 = vunpack.c.h.b16 %v2614
        %v4102 = vunpack.c.l.b16 %v2615
        %v4103 = vunpack.c.h.b16 %v2615
        %v4104 = vunpack.c.l.b16 %v2616
        %v4105 = vunpack.c.h.b16 %v2616
        %v4106 = vunpack.c.l.b16 %v2617
        %v4107 = vunpack.c.h.b16 %v2617
        %v4108 = vunpack.c.l.b16 %v2618
        %v4109 = vunpack.c.h.b16 %v2618
        %v4110 = vunpack.c.l.b16 %v2619
        %v4111 = vunpack.c.h.b16 %v2619
        %v4112 = vunpack.c.l.b16 %v2620
        %v4113 = vunpack.c.h.b16 %v2620
        %v4114 = vunpack.c.l.b16 %v2621
        %v4115 = vunpack.c.h.b16 %v2621
        %v4116 = vunpack.c.l.b16 %v2622
        %v4117 = vunpack.c.h.b16 %v2622
        %v4118 = vunpack.c.l.b16 %v2623
        %v4119 = vunpack.c.h.b16 %v2623
        %v4120 = vunpack.c.l.b16 %v2624
        %v4121 = vunpack.c.h.b16 %v2624
        %v4122 = vunpack.c.l.b16 %v2625
        %v4123 = vunpack.c.h.b16 %v2625
        %v4124 = vunpack.c.l.b16 %v2626
        %v4125 = vunpack.c.h.b16 %v2626
        %v4126 = vunpack.c.l.b16 %v2627
        %v4127 = vunpack.c.h.b16 %v2627
        %v4128 = vunpack.c.l.b16 %v2628
        %v4129 = vunpack.c.h.b16 %v2628
        %v4130 = vunpack.c.l.b16 %v2629
        %v4131 = vunpack.c.h.b16 %v2629
        %v4132 = vunpack.c.l.b16 %v2630
        %v4133 = vunpack.c.h.b16 %v2630
        %v4134 = vunpack.c.l.b16 %v2631
        %v4135 = vunpack.c.h.b16 %v2631
        %v4136 = vunpack.c.l.b16 %v2632
        %v4137 = vunpack.c.h.b16 %v2632
        %v4138 = vunpack.c.l.b16 %v2633
        %v4139 = vunpack.c.h.b16 %v2633
        %v4140 = vunpack.c.l.b16 %v2634
        %v4141 = vunpack.c.h.b16 %v2634
        %v4142 = vunpack.c.l.b16 %v2635
        %v4143 = vunpack.c.h.b16 %v2635
        %v4144 = vunpack.c.l.b16 %v2636
        %v4145 = vunpack.c.h.b16 %v2636
        %v4146 = vunpack.c.l.b16 %v2637
        %v4147 = vunpack.c.h.b16 %v2637
        %v4148 = vunpack.c.l.b16 %v2638
        %v4149 = vunpack.c.h.b16 %v2638
        %v4150 = vunpack.c.l.b16 %v2639
        %v4151 = vunpack.c.h.b16 %v2639
        %v4152 = vunpack.c.l.b16 %v2640
        %v4153 = vunpack.c.h.b16 %v2640
        %v4154 = vunpack.c.l.b16 %v2641
        %v4155 = vunpack.c.h.b16 %v2641
        %v4156 = vunpack.c.l.b16 %v2642
        %v4157 = vunpack.c.h.b16 %v2642
        %v4158 = vunpack.c.l.b16 %v2643
        %v4159 = vunpack.c.h.b16 %v2643
        %v4160 = vunpack.c.l.b16 %v2644
        %v4161 = vunpack.c.h.b16 %v2644
        %v4162 = vunpack.c.l.b16 %v2645
        %v4163 = vunpack.c.h.b16 %v2645
        %v4164 = vunpack.c.l.b16 %v2646
        %v4165 = vunpack.c.h.b16 %v2646
        %v4166 = vunpack.c.l.b16 %v2647
        %v4167 = vunpack.c.h.b16 %v2647
        %v4168 = vunpack.c.l.b16 %v2648
        %v4169 = vunpack.c.h.b16 %v2648
        %v4170 = vunpack.c.l.b16 %v2649
        %v4171 = vunpack.c.h.b16 %v2649
        %v4172 = vunpack.c.l.b16 %v2650
        %v4173 = vunpack.c.h.b16 %v2650
        %v4174 = vunpack.c.l.b16 %v2651
        %v4175 = vunpack.c.h.b16 %v2651
        %v4176 = vunpack.c.l.b16 %v2652
        %v4177 = vunpack.c.h.b16 %v2652
        %v4178 = vunpack.c.l.b16 %v2653
        %v4179 = vunpack.c.h.b16 %v2653
        %v4180 = vunpack.c.l.b16 %v2654
        %v4181 = vunpack.c.h.b16 %v2654
        %v4182 = vunpack.c.l.b16 %v2655
        %v4183 = vunpack.c.h.b16 %v2655
        %v4184 = vunpack.c.l.b16 %v2656
        %v4185 = vunpack.c.h.b16 %v2656
        %v4186 = vunpack.c.l.b16 %v2657
        %v4187 = vunpack.c.h.b16 %v2657
        %v4188 = vunpack.c.l.b16 %v2658
        %v4189 = vunpack.c.h.b16 %v2658
        %v4190 = vunpack.c.l.b16 %v2659
        %v4191 = vunpack.c.h.b16 %v2659
        %v4192 = vunpack.c.l.b16 %v2660
        %v4193 = vunpack.c.h.b16 %v2660
        %v4194 = vunpack.c.l.b16 %v2661
        %v4195 = vunpack.c.h.b16 %v2661
        %v4196 = vunpack.c.l.b16 %v2662
        %v4197 = vunpack.c.h.b16 %v2662
        %v4198 = vunpack.c.l.b16 %v2663
        %v4199 = vunpack.c.h.b16 %v2663
        %v4200 = vunpack.c.l.b16 %v2664
        %v4201 = vunpack.c.h.b16 %v2664
        %v4202 = vunpack.c.l.b16 %v2665
        %v4203 = vunpack.c.h.b16 %v2665
        %v4204 = vunpack.c.l.b16 %v2666
        %v4205 = vunpack.c.h.b16 %v2666
        %v4206 = vunpack.c.l.b16 %v2667
        %v4207 = vunpack.c.h.b16 %v2667
        %v4208 = vunpack.c.l.b16 %v2668
        %v4209 = vunpack.c.h.b16 %v2668
        %v4210 = vunpack.c.l.b16 %v2669
        %v4211 = vunpack.c.h.b16 %v2669
        %v4212 = vunpack.c.l.b16 %v2670
        %v4213 = vunpack.c.h.b16 %v2670
        %v4214 = vunpack.c.l.b16 %v2671
        %v4215 = vunpack.c.h.b16 %v2671
        %v4216 = vunpack.c.l.b16 %v2672
        %v4217 = vunpack.c.h.b16 %v2672
        %v4218 = vunpack.c.l.b16 %v2673
        %v4219 = vunpack.c.h.b16 %v2673
        %v4220 = vunpack.c.l.b16 %v2674
        %v4221 = vunpack.c.h.b16 %v2674
        %v4222 = vunpack.c.l.b16 %v2675
        %v4223 = vunpack.c.h.b16 %v2675
        %v4224 = vunpack.c.l.b16 %v2676
        %v4225 = vunpack.c.h.b16 %v2676
        %v4226 = vunpack.c.l.b16 %v2677
        %v4227 = vunpack.c.h.b16 %v2677
        %v4228 = vunpack.c.l.b16 %v2678
        %v4229 = vunpack.c.h.b16 %v2678
        %v4230 = vunpack.c.l.b16 %v2679
        %v4231 = vunpack.c.h.b16 %v2679
        %v4232 = vunpack.c.l.b16 %v2680
        %v4233 = vunpack.c.h.b16 %v2680
        %v4234 = vunpack.c.l.b16 %v2681
        %v4235 = vunpack.c.h.b16 %v2681
        %v4236 = vunpack.c.l.b16 %v2682
        %v4237 = vunpack.c.h.b16 %v2682
        %v4238 = vunpack.c.l.b16 %v2683
        %v4239 = vunpack.c.h.b16 %v2683
        %v4240 = vunpack.c.l.b16 %v2684
        %v4241 = vunpack.c.h.b16 %v2684
        %v4242 = vunpack.c.l.b16 %v2685
        %v4243 = vunpack.c.h.b16 %v2685
        %v4244 = vunpack.c.l.b16 %v2686
        %v4245 = vunpack.c.h.b16 %v2686
        %v4246 = vunpack.c.l.b16 %v2687
        %v4247 = vunpack.c.h.b16 %v2687
        %v4248 = vunpack.c.l.b16 %v2688
        %v4249 = vunpack.c.h.b16 %v2688
        %v4250 = vunpack.c.l.b16 %v2689
        %v4251 = vunpack.c.h.b16 %v2689
        %v4252 = vunpack.c.l.b16 %v2690
        %v4253 = vunpack.c.h.b16 %v2690
        %v4254 = vunpack.c.l.b16 %v2691
        %v4255 = vunpack.c.h.b16 %v2691
        %v4256 = vunpack.c.l.b16 %v2692
        %v4257 = vunpack.c.h.b16 %v2692
        %v4258 = vunpack.c.l.b16 %v2693
        %v4259 = vunpack.c.h.b16 %v2693
        %v4260 = vunpack.c.l.b16 %v2694
        %v4261 = vunpack.c.h.b16 %v2694
        %v4262 = vunpack.c.l.b16 %v2695
        %v4263 = vunpack.c.h.b16 %v2695
        %v4264 = vunpack.c.l.b16 %v2696
        %v4265 = vunpack.c.h.b16 %v2696
        %v4266 = vunpack.c.l.b16 %v2697
        %v4267 = vunpack.c.h.b16 %v2697
        %v4268 = vunpack.c.l.b16 %v2698
        %v4269 = vunpack.c.h.b16 %v2698
        %v4270 = vunpack.c.l.b16 %v2699
        %v4271 = vunpack.c.h.b16 %v2699
        %v4272 = vunpack.c.l.b16 %v2700
        %v4273 = vunpack.c.h.b16 %v2700
        %v4274 = vunpack.c.l.b16 %v2701
        %v4275 = vunpack.c.h.b16 %v2701
        %v4276 = vunpack.c.l.b16 %v2702
        %v4277 = vunpack.c.h.b16 %v2702
        %v4278 = vunpack.c.l.b16 %v2703
        %v4279 = vunpack.c.h.b16 %v2703
        %v4280 = vunpack.c.l.b16 %v2704
        %v4281 = vunpack.c.h.b16 %v2704
        %v4282 = vunpack.c.l.b16 %v2705
        %v4283 = vunpack.c.h.b16 %v2705
        %v4284 = vunpack.c.l.b16 %v2706
        %v4285 = vunpack.c.h.b16 %v2706
        %v4286 = vunpack.c.l.b16 %v2707
        %v4287 = vunpack.c.h.b16 %v2707
        %v4288 = vunpack.c.l.b16 %v2708
        %v4289 = vunpack.c.h.b16 %v2708
        %v4290 = vunpack.c.l.b16 %v2709
        %v4291 = vunpack.c.h.b16 %v2709
        %v4292 = vunpack.c.l.b16 %v2710
        %v4293 = vunpack.c.h.b16 %v2710
        %v4294 = vunpack.c.l.b16 %v2711
        %v4295 = vunpack.c.h.b16 %v2711
        %v4296 = vunpack.c.l.b16 %v2712
        %v4297 = vunpack.c.h.b16 %v2712
        %v4298 = vunpack.c.l.b16 %v2713
        %v4299 = vunpack.c.h.b16 %v2713
        %v4300 = vunpack.c.l.b16 %v2714
        %v4301 = vunpack.c.h.b16 %v2714
        %v4302 = vunpack.c.l.b16 %v2715
        %v4303 = vunpack.c.h.b16 %v2715
        %v4304 = vunpack.c.l.b16 %v2716
        %v4305 = vunpack.c.h.b16 %v2716
        %v4306 = vunpack.c.l.b16 %v2717
        %v4307 = vunpack.c.h.b16 %v2717
        %v4308 = vunpack.c.l.b16 %v2718
        %v4309 = vunpack.c.h.b16 %v2718
        %v4310 = vunpack.c.l.b16 %v2719
        %v4311 = vunpack.c.h.b16 %v2719
        %v4312 = vunpack.c.l.b16 %v2720
        %v4313 = vunpack.c.h.b16 %v2720
        %v4314 = vunpack.c.l.b16 %v2721
        %v4315 = vunpack.c.h.b16 %v2721
        %v4316 = vunpack.c.l.b16 %v2722
        %v4317 = vunpack.c.h.b16 %v2722
        %v4318 = vunpack.c.l.b16 %v2723
        %v4319 = vunpack.c.h.b16 %v2723
        %v4320 = vunpack.c.l.b16 %v2724
        %v4321 = vunpack.c.h.b16 %v2724
        %v4322 = vunpack.c.l.b16 %v2725
        %v4323 = vunpack.c.h.b16 %v2725
        %v4324 = vunpack.c.l.b16 %v2726
        %v4325 = vunpack.c.h.b16 %v2726
        %v4326 = vunpack.c.l.b16 %v2727
        %v4327 = vunpack.c.h.b16 %v2727
        %v4328 = vunpack.c.l.b16 %v2728
        %v4329 = vunpack.c.h.b16 %v2728
        %v4330 = vunpack.c.l.b16 %v2729
        %v4331 = vunpack.c.h.b16 %v2729
        %v4332 = vunpack.c.l.b16 %v2730
        %v4333 = vunpack.c.h.b16 %v2730
        %v4334 = vunpack.c.l.b16 %v2731
        %v4335 = vunpack.c.h.b16 %v2731
        %v4336 = vunpack.c.l.b16 %v2732
        %v4337 = vunpack.c.h.b16 %v2732
        %v4338 = vunpack.c.l.b16 %v2733
        %v4339 = vunpack.c.h.b16 %v2733
        %v4340 = vunpack.c.l.b16 %v2734
        %v4341 = vunpack.c.h.b16 %v2734
        %v4342 = vunpack.c.l.b16 %v2735
        %v4343 = vunpack.c.h.b16 %v2735
        %v4344 = vunpack.c.l.b16 %v2736
        %v4345 = vunpack.c.h.b16 %v2736
        %v4346 = vunpack.c.l.b16 %v2737
        %v4347 = vunpack.c.h.b16 %v2737
        %v4348 = vunpack.c.l.b16 %v2738
        %v4349 = vunpack.c.h.b16 %v2738
        %v4350 = vunpack.c.l.b16 %v2739
        %v4351 = vunpack.c.h.b16 %v2739
        %v4352 = vunpack.c.l.b16 %v2740
        %v4353 = vunpack.c.h.b16 %v2740
        %v4354 = vunpack.c.l.b16 %v2741
        %v4355 = vunpack.c.h.b16 %v2741
        %v4356 = vunpack.c.l.b16 %v2742
        %v4357 = vunpack.c.h.b16 %v2742
        %v4358 = vunpack.c.l.b16 %v2743
        %v4359 = vunpack.c.h.b16 %v2743
        %v4360 = vunpack.c.l.b16 %v2744
        %v4361 = vunpack.c.h.b16 %v2744
        %v4362 = vunpack.c.l.b16 %v2745
        %v4363 = vunpack.c.h.b16 %v2745
        %v4364 = vunpack.c.l.b16 %v2746
        %v4365 = vunpack.c.h.b16 %v2746
        %v4366 = vunpack.c.l.b16 %v2747
        %v4367 = vunpack.c.h.b16 %v2747
        %v4368 = vunpack.c.l.b16 %v2748
        %v4369 = vunpack.c.h.b16 %v2748
        %v4370 = vunpack.c.l.b16 %v2749
        %v4371 = vunpack.c.h.b16 %v2749
        %v4372 = vunpack.c.l.b16 %v2750
        %v4373 = vunpack.c.h.b16 %v2750
        %v4374 = vunpack.c.l.b16 %v2751
        %v4375 = vunpack.c.h.b16 %v2751
        %v4376 = vunpack.c.l.b16 %v2752
        %v4377 = vunpack.c.h.b16 %v2752
        %v4378 = vunpack.c.l.b16 %v2753
        %v4379 = vunpack.c.h.b16 %v2753
        %v4380 = vunpack.c.l.b16 %v2754
        %v4381 = vunpack.c.h.b16 %v2754
        %v4382 = vunpack.c.l.b16 %v2755
        %v4383 = vunpack.c.h.b16 %v2755
        %v4384 = vunpack.c.l.b16 %v2756
        %v4385 = vunpack.c.h.b16 %v2756
        %v4386 = vunpack.c.l.b16 %v2757
        %v4387 = vunpack.c.h.b16 %v2757
        %v4388 = vunpack.c.l.b16 %v2758
        %v4389 = vunpack.c.h.b16 %v2758
        %v4390 = vunpack.c.l.b16 %v2759
        %v4391 = vunpack.c.h.b16 %v2759
        %v4392 = vunpack.c.l.b16 %v2760
        %v4393 = vunpack.c.h.b16 %v2760
        %v4394 = vunpack.c.l.b16 %v2761
        %v4395 = vunpack.c.h.b16 %v2761
        %v4396 = vunpack.c.l.b16 %v2762
        %v4397 = vunpack.c.h.b16 %v2762
        %v4398 = vunpack.c.l.b16 %v2763
        %v4399 = vunpack.c.h.b16 %v2763
        %v4400 = vunpack.c.l.b16 %v2764
        %v4401 = vunpack.c.h.b16 %v2764
        %v4402 = vunpack.c.l.b16 %v2765
        %v4403 = vunpack.c.h.b16 %v2765
        %v4404 = vunpack.c.l.b16 %v2766
        %v4405 = vunpack.c.h.b16 %v2766
        %v4406 = vunpack.c.l.b16 %v2767
        %v4407 = vunpack.c.h.b16 %v2767
        %v4408 = vunpack.c.l.b16 %v2768
        %v4409 = vunpack.c.h.b16 %v2768
        %v4410 = vunpack.c.l.b16 %v2769
        %v4411 = vunpack.c.h.b16 %v2769
        %v4412 = vunpack.c.l.b16 %v2770
        %v4413 = vunpack.c.h.b16 %v2770
        %v4414 = vunpack.c.l.b16 %v2771
        %v4415 = vunpack.c.h.b16 %v2771
        %v4416 = vunpack.c.l.b16 %v2772
        %v4417 = vunpack.c.h.b16 %v2772
        %v4418 = vunpack.c.l.b16 %v2773
        %v4419 = vunpack.c.h.b16 %v2773
        %v4420 = vunpack.c.l.b16 %v2774
        %v4421 = vunpack.c.h.b16 %v2774
        %v4422 = vunpack.c.l.b16 %v2775
        %v4423 = vunpack.c.h.b16 %v2775
        %v4424 = vunpack.c.l.b16 %v2776
        %v4425 = vunpack.c.h.b16 %v2776
        %v4426 = vunpack.c.l.b16 %v2777
        %v4427 = vunpack.c.h.b16 %v2777
        %v4428 = vunpack.c.l.b16 %v2778
        %v4429 = vunpack.c.h.b16 %v2778
        %v4430 = vunpack.c.l.b16 %v2779
        %v4431 = vunpack.c.h.b16 %v2779
        %v4432 = vunpack.c.l.b16 %v2780
        %v4433 = vunpack.c.h.b16 %v2780
        %v4434 = vunpack.c.l.b16 %v2781
        %v4435 = vunpack.c.h.b16 %v2781
        %v4436 = vunpack.c.l.b16 %v2782
        %v4437 = vunpack.c.h.b16 %v2782
        %v4438 = vunpack.c.l.b16 %v2783
        %v4439 = vunpack.c.h.b16 %v2783
        %v4440 = vunpack.c.l.b16 %v2784
        %v4441 = vunpack.c.h.b16 %v2784
        %v4442 = vunpack.c.l.b16 %v2785
        %v4443 = vunpack.c.h.b16 %v2785
        %v4444 = vunpack.c.l.b16 %v2786
        %v4445 = vunpack.c.h.b16 %v2786
        %v4446 = vunpack.c.l.b16 %v2787
        %v4447 = vunpack.c.h.b16 %v2787
        %v4448 = vunpack.c.l.b16 %v2788
        %v4449 = vunpack.c.h.b16 %v2788
        %v4450 = vunpack.c.l.b16 %v2789
        %v4451 = vunpack.c.h.b16 %v2789
        %v4452 = vunpack.c.l.b16 %v2790
        %v4453 = vunpack.c.h.b16 %v2790
        %v4454 = vunpack.c.l.b16 %v2791
        %v4455 = vunpack.c.h.b16 %v2791
        %v4456 = vunpack.c.l.b16 %v2792
        %v4457 = vunpack.c.h.b16 %v2792
        %v4458 = vunpack.c.l.b16 %v2793
        %v4459 = vunpack.c.h.b16 %v2793
        %v4460 = vunpack.c.l.b16 %v2794
        %v4461 = vunpack.c.h.b16 %v2794
        %v4462 = vunpack.c.l.b16 %v2795
        %v4463 = vunpack.c.h.b16 %v2795
        %v4464 = vunpack.c.l.b16 %v2796
        %v4465 = vunpack.c.h.b16 %v2796
        %v4466 = vunpack.c.l.b16 %v2797
        %v4467 = vunpack.c.h.b16 %v2797
        %v4468 = vunpack.c.l.b16 %v2798
        %v4469 = vunpack.c.h.b16 %v2798
        %v4470 = vunpack.c.l.b16 %v2799
        %v4471 = vunpack.c.h.b16 %v2799
        %v4472 = vunpack.c.l.b16 %v2800
        %v4473 = vunpack.c.h.b16 %v2800
        %v4474 = vunpack.c.l.b16 %v2801
        %v4475 = vunpack.c.h.b16 %v2801
        %v4476 = vpack.c.b16 %v3456, %v3452
        %v4477 = vpack.c.b16 %v3457, %v3453
        %v4478 = vpack.c.b16 %v3458, %v3454
        %v4479 = vpack.c.b16 %v3459, %v3455
        %v4480 = vpack.c.b16 %v3464, %v3460
        %v4481 = vpack.c.b16 %v3465, %v3461
        %v4482 = vpack.c.b16 %v3466, %v3462
        %v4483 = vpack.c.b16 %v3467, %v3463
        %v4484 = vpack.c.b16 %v3472, %v3468
        %v4485 = vpack.c.b16 %v3473, %v3469
        %v4486 = vpack.c.b16 %v3474, %v3470
        %v4487 = vpack.c.b16 %v3475, %v3471
        %v4488 = vpack.c.b16 %v3480, %v3476
        %v4489 = vpack.c.b16 %v3481, %v3477
        %v4490 = vpack.c.b16 %v3482, %v3478
        %v4491 = vpack.c.b16 %v3483, %v3479
        %v4492 = vpack.c.b16 %v3488, %v3484
        %v4493 = vpack.c.b16 %v3489, %v3485
        %v4494 = vpack.c.b16 %v3490, %v3486
        %v4495 = vpack.c.b16 %v3491, %v3487
        %v4496 = vpack.c.b16 %v3496, %v3492
        %v4497 = vpack.c.b16 %v3497, %v3493
        %v4498 = vpack.c.b16 %v3498, %v3494
        %v4499 = vpack.c.b16 %v3499, %v3495
        %v4500 = vpack.c.b16 %v3504, %v3500
        %v4501 = vpack.c.b16 %v3505, %v3501
        %v4502 = vpack.c.b16 %v3506, %v3502
        %v4503 = vpack.c.b16 %v3507, %v3503
        %v4504 = vpack.c.b16 %v3512, %v3508
        %v4505 = vpack.c.b16 %v3513, %v3509
        %v4506 = vpack.c.b16 %v3514, %v3510
        %v4507 = vpack.c.b16 %v3515, %v3511
        %v4508 = vpack.c.b16 %v3520, %v3516
        %v4509 = vpack.c.b16 %v3521, %v3517
        %v4510 = vpack.c.b16 %v3522, %v3518
        %v4511 = vpack.c.b16 %v3523, %v3519
        %v4512 = vpack.c.b16 %v3528, %v3524
        %v4513 = vpack.c.b16 %v3529, %v3525
        %v4514 = vpack.c.b16 %v3530, %v3526
        %v4515 = vpack.c.b16 %v3531, %v3527
        %v4516 = vpack.c.b16 %v3536, %v3532
        %v4517 = vpack.c.b16 %v3537, %v3533
        %v4518 = vpack.c.b16 %v3538, %v3534
        %v4519 = vpack.c.b16 %v3539, %v3535
        %v4520 = vpack.c.b16 %v3544, %v3540
        %v4521 = vpack.c.b16 %v3545, %v3541
        %v4522 = vpack.c.b16 %v3546, %v3542
        %v4523 = vpack.c.b16 %v3547, %v3543
        %v4524 = vpack.c.b16 %v3552, %v3548
        %v4525 = vpack.c.b16 %v3553, %v3549
        %v4526 = vpack.c.b16 %v3554, %v3550
        %v4527 = vpack.c.b16 %v3555, %v3551
        %v4528 = vpack.c.b16 %v3560, %v3556
        %v4529 = vpack.c.b16 %v3561, %v3557
        %v4530 = vpack.c.b16 %v3562, %v3558
        %v4531 = vpack.c.b16 %v3563, %v3559
        %v4532 = vpack.c.b16 %v3568, %v3564
        %v4533 = vpack.c.b16 %v3569, %v3565
        %v4534 = vpack.c.b16 %v3570, %v3566
        %v4535 = vpack.c.b16 %v3571, %v3567
        %v4536 = vpack.c.b16 %v3576, %v3572
        %v4537 = vpack.c.b16 %v3577, %v3573
        %v4538 = vpack.c.b16 %v3578, %v3574
        %v4539 = vpack.c.b16 %v3579, %v3575
        %v4540 = vpack.c.b16 %v3584, %v3580
        %v4541 = vpack.c.b16 %v3585, %v3581
        %v4542 = vpack.c.b16 %v3586, %v3582
        %v4543 = vpack.c.b16 %v3587, %v3583
        %v4544 = vpack.c.b16 %v3592, %v3588
        %v4545 = vpack.c.b16 %v3593, %v3589
        %v4546 = vpack.c.b16 %v3594, %v3590
        %v4547 = vpack.c.b16 %v3595, %v3591
        %v4548 = vpack.c.b16 %v3600, %v3596
        %v4549 = vpack.c.b16 %v3601, %v3597
        %v4550 = vpack.c.b16 %v3602, %v3598
        %v4551 = vpack.c.b16 %v3603, %v3599
        %v4552 = vpack.c.b16 %v3608, %v3604
        %v4553 = vpack.c.b16 %v3609, %v3605
        %v4554 = vpack.c.b16 %v3610, %v3606
        %v4555 = vpack.c.b16 %v3611, %v3607
        %v4556 = vpack.c.b16 %v3616, %v3612
        %v4557 = vpack.c.b16 %v3617, %v3613
        %v4558 = vpack.c.b16 %v3618, %v3614
        %v4559 = vpack.c.b16 %v3619, %v3615
        %v4560 = vpack.c.b16 %v3624, %v3620
        %v4561 = vpack.c.b16 %v3625, %v3621
        %v4562 = vpack.c.b16 %v3626, %v3622
        %v4563 = vpack.c.b16 %v3627, %v3623
        %v4564 = vpack.c.b16 %v3632, %v3628
        %v4565 = vpack.c.b16 %v3633, %v3629
        %v4566 = vpack.c.b16 %v3634, %v3630
        %v4567 = vpack.c.b16 %v3635, %v3631
        %v4568 = vpack.c.b16 %v3640, %v3636
        %v4569 = vpack.c.b16 %v3641, %v3637
        %v4570 = vpack.c.b16 %v3642, %v3638
        %v4571 = vpack.c.b16 %v3643, %v3639
        %v4572 = vpack.c.b16 %v3648, %v3644
        %v4573 = vpack.c.b16 %v3649, %v3645
        %v4574 = vpack.c.b16 %v3650, %v3646
        %v4575 = vpack.c.b16 %v3651, %v3647
        %v4576 = vpack.c.b16 %v3656, %v3652
        %v4577 = vpack.c.b16 %v3657, %v3653
        %v4578 = vpack.c.b16 %v3658, %v3654
        %v4579 = vpack.c.b16 %v3659, %v3655
        %v4580 = vpack.c.b16 %v3664, %v3660
        %v4581 = vpack.c.b16 %v3665, %v3661
        %v4582 = vpack.c.b16 %v3666, %v3662
        %v4583 = vpack.c.b16 %v3667, %v3663
        %v4584 = vpack.c.b16 %v3672, %v3668
        %v4585 = vpack.c.b16 %v3673, %v3669
        %v4586 = vpack.c.b16 %v3674, %v3670
        %v4587 = vpack.c.b16 %v3675, %v3671
        %v4588 = vpack.c.b16 %v3680, %v3676
        %v4589 = vpack.c.b16 %v3681, %v3677
        %v4590 = vpack.c.b16 %v3682, %v3678
        %v4591 = vpack.c.b16 %v3683, %v3679
        %v4592 = vpack.c.b16 %v3688, %v3684
        %v4593 = vpack.c.b16 %v3689, %v3685
        %v4594 = vpack.c.b16 %v3690, %v3686
        %v4595 = vpack.c.b16 %v3691, %v3687
        %v4596 = vpack.c.b16 %v3696, %v3692
        %v4597 = vpack.c.b16 %v3697, %v3693
        %v4598 = vpack.c.b16 %v3698, %v3694
        %v4599 = vpack.c.b16 %v3699, %v3695
        %v4600 = vpack.c.b16 %v3704, %v3700
        %v4601 = vpack.c.b16 %v3705, %v3701
        %v4602 = vpack.c.b16 %v3706, %v3702
        %v4603 = vpack.c.b16 %v3707, %v3703
        %v4604 = vpack.c.b16 %v3712, %v3708
        %v4605 = vpack.c.b16 %v3713, %v3709
        %v4606 = vpack.c.b16 %v3714, %v3710
        %v4607 = vpack.c.b16 %v3715, %v3711
        %v4608 = vpack.c.b16 %v3720, %v3716
        %v4609 = vpack.c.b16 %v3721, %v3717
        %v4610 = vpack.c.b16 %v3722, %v3718
        %v4611 = vpack.c.b16 %v3723, %v3719
        %v4612 = vpack.c.b16 %v3728, %v3724
        %v4613 = vpack.c.b16 %v3729, %v3725
        %v4614 = vpack.c.b16 %v3730, %v3726
        %v4615 = vpack.c.b16 %v3731, %v3727
        %v4616 = vpack.c.b16 %v3736, %v3732
        %v4617 = vpack.c.b16 %v3737, %v3733
        %v4618 = vpack.c.b16 %v3738, %v3734
        %v4619 = vpack.c.b16 %v3739, %v3735
        %v4620 = vpack.c.b16 %v3744, %v3740
        %v4621 = vpack.c.b16 %v3745, %v3741
        %v4622 = vpack.c.b16 %v3746, %v3742
        %v4623 = vpack.c.b16 %v3747, %v3743
        %v4624 = vpack.c.b16 %v3752, %v3748
        %v4625 = vpack.c.b16 %v3753, %v3749
        %v4626 = vpack.c.b16 %v3754, %v3750
        %v4627 = vpack.c.b16 %v3755, %v3751
        %v4628 = vpack.c.b16 %v3760, %v3756
        %v4629 = vpack.c.b16 %v3761, %v3757
        %v4630 = vpack.c.b16 %v3762, %v3758
        %v4631 = vpack.c.b16 %v3763, %v3759
        %v4632 = vpack.c.b16 %v3768, %v3764
        %v4633 = vpack.c.b16 %v3769, %v3765
        %v4634 = vpack.c.b16 %v3770, %v3766
        %v4635 = vpack.c.b16 %v3771, %v3767
        %v4636 = vpack.c.b16 %v3776, %v3772
        %v4637 = vpack.c.b16 %v3777, %v3773
        %v4638 = vpack.c.b16 %v3778, %v3774
        %v4639 = vpack.c.b16 %v3779, %v3775
        %v4640 = vpack.c.b16 %v3784, %v3780
        %v4641 = vpack.c.b16 %v3785, %v3781
        %v4642 = vpack.c.b16 %v3786, %v3782
        %v4643 = vpack.c.b16 %v3787, %v3783
        %v4644 = vpack.c.b16 %v3792, %v3788
        %v4645 = vpack.c.b16 %v3793, %v3789
        %v4646 = vpack.c.b16 %v3794, %v3790
        %v4647 = vpack.c.b16 %v3795, %v3791
        %v4648 = vpack.c.b16 %v3800, %v3796
        %v4649 = vpack.c.b16 %v3801, %v3797
        %v4650 = vpack.c.b16 %v3802, %v3798
        %v4651 = vpack.c.b16 %v3803, %v3799
        %v4652 = vpack.c.b16 %v3808, %v3804
        %v4653 = vpack.c.b16 %v3809, %v3805
        %v4654 = vpack.c.b16 %v3810, %v3806
        %v4655 = vpack.c.b16 %v3811, %v3807
        %v4656 = vpack.c.b16 %v3816, %v3812
        %v4657 = vpack.c.b16 %v3817, %v3813
        %v4658 = vpack.c.b16 %v3818, %v3814
        %v4659 = vpack.c.b16 %v3819, %v3815
        %v4660 = vpack.c.b16 %v3824, %v3820
        %v4661 = vpack.c.b16 %v3825, %v3821
        %v4662 = vpack.c.b16 %v3826, %v3822
        %v4663 = vpack.c.b16 %v3827, %v3823
        %v4664 = vpack.c.b16 %v3832, %v3828
        %v4665 = vpack.c.b16 %v3833, %v3829
        %v4666 = vpack.c.b16 %v3834, %v3830
        %v4667 = vpack.c.b16 %v3835, %v3831
        %v4668 = vpack.c.b16 %v3840, %v3836
        %v4669 = vpack.c.b16 %v3841, %v3837
        %v4670 = vpack.c.b16 %v3842, %v3838
        %v4671 = vpack.c.b16 %v3843, %v3839
        %v4672 = vpack.c.b16 %v3848, %v3844
        %v4673 = vpack.c.b16 %v3849, %v3845
        %v4674 = vpack.c.b16 %v3850, %v3846
        %v4675 = vpack.c.b16 %v3851, %v3847
        %v4676 = vpack.c.b16 %v3856, %v3852
        %v4677 = vpack.c.b16 %v3857, %v3853
        %v4678 = vpack.c.b16 %v3858, %v3854
        %v4679 = vpack.c.b16 %v3859, %v3855
        %v4680 = vpack.c.b16 %v3864, %v3860
        %v4681 = vpack.c.b16 %v3865, %v3861
        %v4682 = vpack.c.b16 %v3866, %v3862
        %v4683 = vpack.c.b16 %v3867, %v3863
        %v4684 = vpack.c.b16 %v3872, %v3868
        %v4685 = vpack.c.b16 %v3873, %v3869
        %v4686 = vpack.c.b16 %v3874, %v3870
        %v4687 = vpack.c.b16 %v3875, %v3871
        %v4688 = vpack.c.b16 %v3880, %v3876
        %v4689 = vpack.c.b16 %v3881, %v3877
        %v4690 = vpack.c.b16 %v3882, %v3878
        %v4691 = vpack.c.b16 %v3883, %v3879
        %v4692 = vpack.c.b16 %v3888, %v3884
        %v4693 = vpack.c.b16 %v3889, %v3885
        %v4694 = vpack.c.b16 %v3890, %v3886
        %v4695 = vpack.c.b16 %v3891, %v3887
        %v4696 = vpack.c.b16 %v3896, %v3892
        %v4697 = vpack.c.b16 %v3897, %v3893
        %v4698 = vpack.c.b16 %v3898, %v3894
        %v4699 = vpack.c.b16 %v3899, %v3895
        %v4700 = vpack.c.b16 %v3904, %v3900
        %v4701 = vpack.c.b16 %v3905, %v3901
        %v4702 = vpack.c.b16 %v3906, %v3902
        %v4703 = vpack.c.b16 %v3907, %v3903
        %v4704 = vpack.c.b16 %v3912, %v3908
        %v4705 = vpack.c.b16 %v3913, %v3909
        %v4706 = vpack.c.b16 %v3914, %v3910
        %v4707 = vpack.c.b16 %v3915, %v3911
        %v4708 = vpack.c.b16 %v3920, %v3916
        %v4709 = vpack.c.b16 %v3921, %v3917
        %v4710 = vpack.c.b16 %v3922, %v3918
        %v4711 = vpack.c.b16 %v3923, %v3919
        %v4712 = vpack.c.b16 %v3928, %v3924
        %v4713 = vpack.c.b16 %v3929, %v3925
        %v4714 = vpack.c.b16 %v3930, %v3926
        %v4715 = vpack.c.b16 %v3931, %v3927
        %v4716 = vpack.c.b16 %v3936, %v3932
        %v4717 = vpack.c.b16 %v3937, %v3933
        %v4718 = vpack.c.b16 %v3938, %v3934
        %v4719 = vpack.c.b16 %v3939, %v3935
        %v4720 = vpack.c.b16 %v3944, %v3940
        %v4721 = vpack.c.b16 %v3945, %v3941
        %v4722 = vpack.c.b16 %v3946, %v3942
        %v4723 = vpack.c.b16 %v3947, %v3943
        %v4724 = vpack.c.b16 %v3952, %v3948
        %v4725 = vpack.c.b16 %v3953, %v3949
        %v4726 = vpack.c.b16 %v3954, %v3950
        %v4727 = vpack.c.b16 %v3955, %v3951
        %v4728 = vpack.c.b16 %v3960, %v3956
        %v4729 = vpack.c.b16 %v3961, %v3957
        %v4730 = vpack.c.b16 %v3962, %v3958
        %v4731 = vpack.c.b16 %v3963, %v3959
        %v4732 = vpack.c.b16 %v3968, %v3964
        %v4733 = vpack.c.b16 %v3969, %v3965
        %v4734 = vpack.c.b16 %v3970, %v3966
        %v4735 = vpack.c.b16 %v3971, %v3967
        %v4736 = vpack.c.b16 %v3976, %v3972
        %v4737 = vpack.c.b16 %v3977, %v3973
        %v4738 = vpack.c.b16 %v3978, %v3974
        %v4739 = vpack.c.b16 %v3979, %v3975
        %v4740 = vpack.c.b16 %v3984, %v3980
        %v4741 = vpack.c.b16 %v3985, %v3981
        %v4742 = vpack.c.b16 %v3986, %v3982
        %v4743 = vpack.c.b16 %v3987, %v3983
        %v4744 = vpack.c.b16 %v3992, %v3988
        %v4745 = vpack.c.b16 %v3993, %v3989
        %v4746 = vpack.c.b16 %v3994, %v3990
        %v4747 = vpack.c.b16 %v3995, %v3991
        %v4748 = vpack.c.b16 %v4000, %v3996
        %v4749 = vpack.c.b16 %v4001, %v3997
        %v4750 = vpack.c.b16 %v4002, %v3998
        %v4751 = vpack.c.b16 %v4003, %v3999
        %v4752 = vpack.c.b16 %v4008, %v4004
        %v4753 = vpack.c.b16 %v4009, %v4005
        %v4754 = vpack.c.b16 %v4010, %v4006
        %v4755 = vpack.c.b16 %v4011, %v4007
        %v4756 = vpack.c.b16 %v4016, %v4012
        %v4757 = vpack.c.b16 %v4017, %v4013
        %v4758 = vpack.c.b16 %v4018, %v4014
        %v4759 = vpack.c.b16 %v4019, %v4015
        %v4760 = vpack.c.b16 %v4024, %v4020
        %v4761 = vpack.c.b16 %v4025, %v4021
        %v4762 = vpack.c.b16 %v4026, %v4022
        %v4763 = vpack.c.b16 %v4027, %v4023
        %v4764 = vpack.c.b16 %v4032, %v4028
        %v4765 = vpack.c.b16 %v4033, %v4029
        %v4766 = vpack.c.b16 %v4034, %v4030
        %v4767 = vpack.c.b16 %v4035, %v4031
        %v4768 = vpack.c.b16 %v4040, %v4036
        %v4769 = vpack.c.b16 %v4041, %v4037
        %v4770 = vpack.c.b16 %v4042, %v4038
        %v4771 = vpack.c.b16 %v4043, %v4039
        %v4772 = vpack.c.b16 %v4048, %v4044
        %v4773 = vpack.c.b16 %v4049, %v4045
        %v4774 = vpack.c.b16 %v4050, %v4046
        %v4775 = vpack.c.b16 %v4051, %v4047
        %v4776 = vpack.c.b16 %v4056, %v4052
        %v4777 = vpack.c.b16 %v4057, %v4053
        %v4778 = vpack.c.b16 %v4058, %v4054
        %v4779 = vpack.c.b16 %v4059, %v4055
        %v4780 = vpack.c.b16 %v4064, %v4060
        %v4781 = vpack.c.b16 %v4065, %v4061
        %v4782 = vpack.c.b16 %v4066, %v4062
        %v4783 = vpack.c.b16 %v4067, %v4063
        %v4784 = vpack.c.b16 %v4072, %v4068
        %v4785 = vpack.c.b16 %v4073, %v4069
        %v4786 = vpack.c.b16 %v4074, %v4070
        %v4787 = vpack.c.b16 %v4075, %v4071
        %v4788 = vpack.c.b16 %v4080, %v4076
        %v4789 = vpack.c.b16 %v4081, %v4077
        %v4790 = vpack.c.b16 %v4082, %v4078
        %v4791 = vpack.c.b16 %v4083, %v4079
        %v4792 = vpack.c.b16 %v4088, %v4084
        %v4793 = vpack.c.b16 %v4089, %v4085
        %v4794 = vpack.c.b16 %v4090, %v4086
        %v4795 = vpack.c.b16 %v4091, %v4087
        %v4796 = vpack.c.b16 %v4096, %v4092
        %v4797 = vpack.c.b16 %v4097, %v4093
        %v4798 = vpack.c.b16 %v4098, %v4094
        %v4799 = vpack.c.b16 %v4099, %v4095
        %v4800 = vpack.c.b16 %v4104, %v4100
        %v4801 = vpack.c.b16 %v4105, %v4101
        %v4802 = vpack.c.b16 %v4106, %v4102
        %v4803 = vpack.c.b16 %v4107, %v4103
        %v4804 = vpack.c.b16 %v4112, %v4108
        %v4805 = vpack.c.b16 %v4113, %v4109
        %v4806 = vpack.c.b16 %v4114, %v4110
        %v4807 = vpack.c.b16 %v4115, %v4111
        %v4808 = vpack.c.b16 %v4120, %v4116
        %v4809 = vpack.c.b16 %v4121, %v4117
        %v4810 = vpack.c.b16 %v4122, %v4118
        %v4811 = vpack.c.b16 %v4123, %v4119
        %v4812 = vpack.c.b16 %v4128, %v4124
        %v4813 = vpack.c.b16 %v4129, %v4125
        %v4814 = vpack.c.b16 %v4130, %v4126
        %v4815 = vpack.c.b16 %v4131, %v4127
        %v4816 = vpack.c.b16 %v4136, %v4132
        %v4817 = vpack.c.b16 %v4137, %v4133
        %v4818 = vpack.c.b16 %v4138, %v4134
        %v4819 = vpack.c.b16 %v4139, %v4135
        %v4820 = vpack.c.b16 %v4144, %v4140
        %v4821 = vpack.c.b16 %v4145, %v4141
        %v4822 = vpack.c.b16 %v4146, %v4142
        %v4823 = vpack.c.b16 %v4147, %v4143
        %v4824 = vpack.c.b16 %v4152, %v4148
        %v4825 = vpack.c.b16 %v4153, %v4149
        %v4826 = vpack.c.b16 %v4154, %v4150
        %v4827 = vpack.c.b16 %v4155, %v4151
        %v4828 = vpack.c.b16 %v4160, %v4156
        %v4829 = vpack.c.b16 %v4161, %v4157
        %v4830 = vpack.c.b16 %v4162, %v4158
        %v4831 = vpack.c.b16 %v4163, %v4159
        %v4832 = vpack.c.b16 %v4168, %v4164
        %v4833 = vpack.c.b16 %v4169, %v4165
        %v4834 = vpack.c.b16 %v4170, %v4166
        %v4835 = vpack.c.b16 %v4171, %v4167
        %v4836 = vpack.c.b16 %v4176, %v4172
        %v4837 = vpack.c.b16 %v4177, %v4173
        %v4838 = vpack.c.b16 %v4178, %v4174
        %v4839 = vpack.c.b16 %v4179, %v4175
        %v4840 = vpack.c.b16 %v4184, %v4180
        %v4841 = vpack.c.b16 %v4185, %v4181
        %v4842 = vpack.c.b16 %v4186, %v4182
        %v4843 = vpack.c.b16 %v4187, %v4183
        %v4844 = vpack.c.b16 %v4192, %v4188
        %v4845 = vpack.c.b16 %v4193, %v4189
        %v4846 = vpack.c.b16 %v4194, %v4190
        %v4847 = vpack.c.b16 %v4195, %v4191
        %v4848 = vpack.c.b16 %v4200, %v4196
        %v4849 = vpack.c.b16 %v4201, %v4197
        %v4850 = vpack.c.b16 %v4202, %v4198
        %v4851 = vpack.c.b16 %v4203, %v4199
        %v4852 = vpack.c.b16 %v4208, %v4204
        %v4853 = vpack.c.b16 %v4209, %v4205
        %v4854 = vpack.c.b16 %v4210, %v4206
        %v4855 = vpack.c.b16 %v4211, %v4207
        %v4856 = vpack.c.b16 %v4216, %v4212
        %v4857 = vpack.c.b16 %v4217, %v4213
        %v4858 = vpack.c.b16 %v4218, %v4214
        %v4859 = vpack.c.b16 %v4219, %v4215
        %v4860 = vpack.c.b16 %v4224, %v4220
        %v4861 = vpack.c.b16 %v4225, %v4221
        %v4862 = vpack.c.b16 %v4226, %v4222
        %v4863 = vpack.c.b16 %v4227, %v4223
        %v4864 = vpack.c.b16 %v4232, %v4228
        %v4865 = vpack.c.b16 %v4233, %v4229
        %v4866 = vpack.c.b16 %v4234, %v4230
        %v4867 = vpack.c.b16 %v4235, %v4231
        %v4868 = vpack.c.b16 %v4240, %v4236
        %v4869 = vpack.c.b16 %v4241, %v4237
        %v4870 = vpack.c.b16 %v4242, %v4238
        %v4871 = vpack.c.b16 %v4243, %v4239
        %v4872 = vpack.c.b16 %v4248, %v4244
        %v4873 = vpack.c.b16 %v4249, %v4245
        %v4874 = vpack.c.b16 %v4250, %v4246
        %v4875 = vpack.c.b16 %v4251, %v4247
        %v4876 = vpack.c.b16 %v4256, %v4252
        %v4877 = vpack.c.b16 %v4257, %v4253
        %v4878 = vpack.c.b16 %v4258, %v4254
        %v4879 = vpack.c.b16 %v4259, %v4255
        %v4880 = vpack.c.b16 %v4264, %v4260
        %v4881 = vpack.c.b16 %v4265, %v4261
        %v4882 = vpack.c.b16 %v4266, %v4262
        %v4883 = vpack.c.b16 %v4267, %v4263
        %v4884 = vpack.c.b16 %v4272, %v4268
        %v4885 = vpack.c.b16 %v4273, %v4269
        %v4886 = vpack.c.b16 %v4274, %v4270
        %v4887 = vpack.c.b16 %v4275, %v4271
        %v4888 = vpack.c.b16 %v4280, %v4276
        %v4889 = vpack.c.b16 %v4281, %v4277
        %v4890 = vpack.c.b16 %v4282, %v4278
        %v4891 = vpack.c.b16 %v4283, %v4279
        %v4892 = vpack.c.b16 %v4288, %v4284
        %v4893 = vpack.c.b16 %v4289, %v4285
        %v4894 = vpack.c.b16 %v4290, %v4286
        %v4895 = vpack.c.b16 %v4291, %v4287
        %v4896 = vpack.c.b16 %v4296, %v4292
        %v4897 = vpack.c.b16 %v4297, %v4293
        %v4898 = vpack.c.b16 %v4298, %v4294
        %v4899 = vpack.c.b16 %v4299, %v4295
        %v4900 = vpack.c.b16 %v4304, %v4300
        %v4901 = vpack.c.b16 %v4305, %v4301
        %v4902 = vpack.c.b16 %v4306, %v4302
        %v4903 = vpack.c.b16 %v4307, %v4303
        %v4904 = vpack.c.b16 %v4312, %v4308
        %v4905 = vpack.c.b16 %v4313, %v4309
        %v4906 = vpack.c.b16 %v4314, %v4310
        %v4907 = vpack.c.b16 %v4315, %v4311
        %v4908 = vpack.c.b16 %v4320, %v4316
        %v4909 = vpack.c.b16 %v4321, %v4317
        %v4910 = vpack.c.b16 %v4322, %v4318
        %v4911 = vpack.c.b16 %v4323, %v4319
        %v4912 = vpack.c.b16 %v4328, %v4324
        %v4913 = vpack.c.b16 %v4329, %v4325
        %v4914 = vpack.c.b16 %v4330, %v4326
        %v4915 = vpack.c.b16 %v4331, %v4327
        %v4916 = vpack.c.b16 %v4336, %v4332
        %v4917 = vpack.c.b16 %v4337, %v4333
        %v4918 = vpack.c.b16 %v4338, %v4334
        %v4919 = vpack.c.b16 %v4339, %v4335
        %v4920 = vpack.c.b16 %v4344, %v4340
        %v4921 = vpack.c.b16 %v4345, %v4341
        %v4922 = vpack.c.b16 %v4346, %v4342
        %v4923 = vpack.c.b16 %v4347, %v4343
        %v4924 = vpack.c.b16 %v4352, %v4348
        %v4925 = vpack.c.b16 %v4353, %v4349
        %v4926 = vpack.c.b16 %v4354, %v4350
        %v4927 = vpack.c.b16 %v4355, %v4351
        %v4928 = vpack.c.b16 %v4360, %v4356
        %v4929 = vpack.c.b16 %v4361, %v4357
        %v4930 = vpack.c.b16 %v4362, %v4358
        %v4931 = vpack.c.b16 %v4363, %v4359
        %v4932 = vpack.c.b16 %v4368, %v4364
        %v4933 = vpack.c.b16 %v4369, %v4365
        %v4934 = vpack.c.b16 %v4370, %v4366
        %v4935 = vpack.c.b16 %v4371, %v4367
        %v4936 = vpack.c.b16 %v4376, %v4372
        %v4937 = vpack.c.b16 %v4377, %v4373
        %v4938 = vpack.c.b16 %v4378, %v4374
        %v4939 = vpack.c.b16 %v4379, %v4375
        %v4940 = vpack.c.b16 %v4384, %v4380
        %v4941 = vpack.c.b16 %v4385, %v4381
        %v4942 = vpack.c.b16 %v4386, %v4382
        %v4943 = vpack.c.b16 %v4387, %v4383
        %v4944 = vpack.c.b16 %v4392, %v4388
        %v4945 = vpack.c.b16 %v4393, %v4389
        %v4946 = vpack.c.b16 %v4394, %v4390
        %v4947 = vpack.c.b16 %v4395, %v4391
        %v4948 = vpack.c.b16 %v4400, %v4396
        %v4949 = vpack.c.b16 %v4401, %v4397
        %v4950 = vpack.c.b16 %v4402, %v4398
        %v4951 = vpack.c.b16 %v4403, %v4399
        %v4952 = vpack.c.b16 %v4408, %v4404
        %v4953 = vpack.c.b16 %v4409, %v4405
        %v4954 = vpack.c.b16 %v4410, %v4406
        %v4955 = vpack.c.b16 %v4411, %v4407
        %v4956 = vpack.c.b16 %v4416, %v4412
        %v4957 = vpack.c.b16 %v4417, %v4413
        %v4958 = vpack.c.b16 %v4418, %v4414
        %v4959 = vpack.c.b16 %v4419, %v4415
        %v4960 = vpack.c.b16 %v4424, %v4420
        %v4961 = vpack.c.b16 %v4425, %v4421
        %v4962 = vpack.c.b16 %v4426, %v4422
        %v4963 = vpack.c.b16 %v4427, %v4423
        %v4964 = vpack.c.b16 %v4432, %v4428
        %v4965 = vpack.c.b16 %v4433, %v4429
        %v4966 = vpack.c.b16 %v4434, %v4430
        %v4967 = vpack.c.b16 %v4435, %v4431
        %v4968 = vpack.c.b16 %v4440, %v4436
        %v4969 = vpack.c.b16 %v4441, %v4437
        %v4970 = vpack.c.b16 %v4442, %v4438
        %v4971 = vpack.c.b16 %v4443, %v4439
        %v4972 = vpack.c.b16 %v4448, %v4444
        %v4973 = vpack.c.b16 %v4449, %v4445
        %v4974 = vpack.c.b16 %v4450, %v4446
        %v4975 = vpack.c.b16 %v4451, %v4447
        %v4976 = vpack.c.b16 %v4456, %v4452
        %v4977 = vpack.c.b16 %v4457, %v4453
        %v4978 = vpack.c.b16 %v4458, %v4454
        %v4979 = vpack.c.b16 %v4459, %v4455
        %v4980 = vpack.c.b16 %v4464, %v4460
        %v4981 = vpack.c.b16 %v4465, %v4461
        %v4982 = vpack.c.b16 %v4466, %v4462
        %v4983 = vpack.c.b16 %v4467, %v4463
        %v4984 = vpack.c.b16 %v4472, %v4468
        %v4985 = vpack.c.b16 %v4473, %v4469
        %v4986 = vpack.c.b16 %v4474, %v4470
        %v4987 = vpack.c.b16 %v4475, %v4471
        %5500 = vmatprep.subr.bf16.mxu0 %v4477
        %5501 = vmatpush1.bf16.msra.mxu0 %v4476
        %5502 = vmatprep.subr.bf16.mxu0 %v4481
        %5503 = vmatpush1.bf16.msra.mxu0 %v4480
        %5504 = vmatprep.subr.bf16.mxu0 %v4485
        %5505 = vmatpush1.bf16.msra.mxu0 %v4484
        %5506 = vmatprep.subr.bf16.mxu0 %v4489
        %5507 = vmatpush1.bf16.msra.mxu0 %v4488
        %5508 = vmatprep.subr.bf16.mxu0 %v4493
        %5509 = vmatpush1.bf16.msra.mxu0 %v4492
        %5510 = vmatprep.subr.bf16.mxu0 %v4497
        %5511 = vmatpush1.bf16.msra.mxu0 %v4496
        %5512 = vmatprep.subr.bf16.mxu0 %v4501
        %5513 = vmatpush1.bf16.msra.mxu0 %v4500
        %5514 = vmatprep.subr.bf16.mxu0 %v4505
        %5515 = vmatpush1.bf16.msra.mxu0 %v4504
        %5516 = vmatprep.subr.bf16.mxu0 %v4509
        %5517 = vmatpush1.bf16.msra.mxu0 %v4508
        %5518 = vmatprep.subr.bf16.mxu0 %v4513
        %5519 = vmatpush1.bf16.msra.mxu0 %v4512
        %5520 = vmatprep.subr.bf16.mxu0 %v4517
        %5521 = vmatpush1.bf16.msra.mxu0 %v4516
        %5522 = vmatprep.subr.bf16.mxu0 %v4521
        %5523 = vmatpush1.bf16.msra.mxu0 %v4520
        %5524 = vmatprep.subr.bf16.mxu0 %v4525
        %5525 = vmatpush1.bf16.msra.mxu0 %v4524
        %5526 = vmatprep.subr.bf16.mxu0 %v4529
        %5527 = vmatpush1.bf16.msra.mxu0 %v4528
        %5528 = vmatprep.subr.bf16.mxu0 %v4533
        %5529 = vmatpush1.bf16.msra.mxu0 %v4532
        %5530 = vmatprep.subr.bf16.mxu0 %v4537
        %5531 = vmatpush1.bf16.msra.mxu0 %v4536
        %5532 = vmatprep.mubr.bf16.mxu0 %v2863
        %5533 = vmatmul.mubr.bf16.gmra.mrb[0].mxu0 %v2849
        %v5534 = vpop.f32.mrb[0].mxu0
        %v5535 = vadd.f32 %v2807, %v5534
        %v5536 = vpop.f32.mrb[0].mxu0
        %v5537 = vadd.f32 %v2811, %v5536
        %v5538 = vpop.f32.mrb[0].mxu0
        %v5539 = vpop.f32.mrb[0].mxu0
        %5540 = vdwg.mxu0
        %5541 = vmatprep.subr.bf16.mxu0 %v4541
        %5542 = vmatpush1.bf16.msra.mxu0 %v4540
        %5543 = vmatprep.subr.bf16.mxu0 %v4545
        %5544 = vmatpush1.bf16.msra.mxu0 %v4544
        %5545 = vmatprep.subr.bf16.mxu0 %v4549
        %5546 = vmatpush1.bf16.msra.mxu0 %v4548
        %5547 = vmatprep.subr.bf16.mxu0 %v4553
        %5548 = vmatpush1.bf16.msra.mxu0 %v4552
        %5549 = vmatprep.subr.bf16.mxu0 %v4557
        %5550 = vmatpush1.bf16.msra.mxu0 %v4556
        %5551 = vmatprep.subr.bf16.mxu0 %v4561
        %5552 = vmatpush1.bf16.msra.mxu0 %v4560
        %5553 = vmatprep.subr.bf16.mxu0 %v4565
        %5554 = vmatpush1.bf16.msra.mxu0 %v4564
        %5555 = vmatprep.subr.bf16.mxu0 %v4569
        %5556 = vmatpush1.bf16.msra.mxu0 %v4568
        %5557 = vmatprep.subr.bf16.mxu0 %v4573
        %5558 = vmatpush1.bf16.msra.mxu0 %v4572
        %5559 = vmatprep.subr.bf16.mxu0 %v4577
        %5560 = vmatpush1.bf16.msra.mxu0 %v4576
        %5561 = vmatprep.subr.bf16.mxu0 %v4581
        %5562 = vmatpush1.bf16.msra.mxu0 %v4580
        %5563 = vmatprep.subr.bf16.mxu0 %v4585
        %5564 = vmatpush1.bf16.msra.mxu0 %v4584
        %5565 = vmatprep.subr.bf16.mxu0 %v4589
        %5566 = vmatpush1.bf16.msra.mxu0 %v4588
        %5567 = vmatprep.subr.bf16.mxu0 %v4593
        %5568 = vmatpush1.bf16.msra.mxu0 %v4592
        %5569 = vmatprep.subr.bf16.mxu0 %v4597
        %5570 = vmatpush1.bf16.msra.mxu0 %v4596
        %5571 = vmatprep.subr.bf16.mxu0 %v4601
        %5572 = vmatpush1.bf16.msra.mxu0 %v4600
        %5573 = vmatprep.mubr.bf16.mxu0 %v2873
        %5574 = vmatmul.mubr.bf16.gmra.mrb[0].mxu0 %v2871
        %v5575 = vpop.f32.mrb[0].mxu0
        %v5576 = vadd.f32 %v5535, %v5575
        %v5577 = vpop.f32.mrb[0].mxu0
        %v5578 = vadd.f32 %v5537, %v5577
        %v5579 = vpop.f32.mrb[0].mxu0
        %v5580 = vpop.f32.mrb[0].mxu0
        %5581 = vdwg.mxu0
        %5582 = vmatprep.subr.bf16.mxu0 %v4605
        %5583 = vmatpush1.bf16.msra.mxu0 %v4604
        %5584 = vmatprep.subr.bf16.mxu0 %v4609
        %5585 = vmatpush1.bf16.msra.mxu0 %v4608
        %5586 = vmatprep.subr.bf16.mxu0 %v4613
        %5587 = vmatpush1.bf16.msra.mxu0 %v4612
        %5588 = vmatprep.subr.bf16.mxu0 %v4617
        %5589 = vmatpush1.bf16.msra.mxu0 %v4616
        %5590 = vmatprep.subr.bf16.mxu0 %v4621
        %5591 = vmatpush1.bf16.msra.mxu0 %v4620
        %5592 = vmatprep.subr.bf16.mxu0 %v4625
        %5593 = vmatpush1.bf16.msra.mxu0 %v4624
        %5594 = vmatprep.subr.bf16.mxu0 %v4629
        %5595 = vmatpush1.bf16.msra.mxu0 %v4628
        %5596 = vmatprep.subr.bf16.mxu0 %v4633
        %5597 = vmatpush1.bf16.msra.mxu0 %v4632
        %5598 = vmatprep.subr.bf16.mxu0 %v4637
        %5599 = vmatpush1.bf16.msra.mxu0 %v4636
        %5600 = vmatprep.subr.bf16.mxu0 %v4641
        %5601 = vmatpush1.bf16.msra.mxu0 %v4640
        %5602 = vmatprep.subr.bf16.mxu0 %v4645
        %5603 = vmatpush1.bf16.msra.mxu0 %v4644
        %5604 = vmatprep.subr.bf16.mxu0 %v4649
        %5605 = vmatpush1.bf16.msra.mxu0 %v4648
        %5606 = vmatprep.subr.bf16.mxu0 %v4653
        %5607 = vmatpush1.bf16.msra.mxu0 %v4652
        %5608 = vmatprep.subr.bf16.mxu0 %v4657
        %5609 = vmatpush1.bf16.msra.mxu0 %v4656
        %5610 = vmatprep.subr.bf16.mxu0 %v4661
        %5611 = vmatpush1.bf16.msra.mxu0 %v4660
        %5612 = vmatprep.subr.bf16.mxu0 %v4665
        %5613 = vmatpush1.bf16.msra.mxu0 %v4664
        %5614 = vmatprep.mubr.bf16.mxu0 %v2870
        %5615 = vmatmul.mubr.bf16.gmra.mrb[0].mxu0 %v2856
        %v5616 = vpop.f32.mrb[0].mxu0
        %v5617 = vadd.f32 %v5576, %v5616
        %v5618 = vpop.f32.mrb[0].mxu0
        %v5619 = vadd.f32 %v5578, %v5618
        %v5620 = vpop.f32.mrb[0].mxu0
        %v5621 = vpop.f32.mrb[0].mxu0
        %5622 = vdwg.mxu0
        %5623 = vmatprep.subr.bf16.mxu0 %v4669
        %5624 = vmatpush1.bf16.msra.mxu0 %v4668
        %5625 = vmatprep.subr.bf16.mxu0 %v4673
        %5626 = vmatpush1.bf16.msra.mxu0 %v4672
        %5627 = vmatprep.subr.bf16.mxu0 %v4677
        %5628 = vmatpush1.bf16.msra.mxu0 %v4676
        %5629 = vmatprep.subr.bf16.mxu0 %v4681
        %5630 = vmatpush1.bf16.msra.mxu0 %v4680
        %5631 = vmatprep.subr.bf16.mxu0 %v4685
        %5632 = vmatpush1.bf16.msra.mxu0 %v4684
        %5633 = vmatprep.subr.bf16.mxu0 %v4689
        %5634 = vmatpush1.bf16.msra.mxu0 %v4688
        %5635 = vmatprep.subr.bf16.mxu0 %v4693
        %5636 = vmatpush1.bf16.msra.mxu0 %v4692
        %5637 = vmatprep.subr.bf16.mxu0 %v4697
        %5638 = vmatpush1.bf16.msra.mxu0 %v4696
        %5639 = vmatprep.subr.bf16.mxu0 %v4701
        %5640 = vmatpush1.bf16.msra.mxu0 %v4700
        %5641 = vmatprep.subr.bf16.mxu0 %v4705
        %5642 = vmatpush1.bf16.msra.mxu0 %v4704
        %5643 = vmatprep.subr.bf16.mxu0 %v4709
        %5644 = vmatpush1.bf16.msra.mxu0 %v4708
        %5645 = vmatprep.subr.bf16.mxu0 %v4713
        %5646 = vmatpush1.bf16.msra.mxu0 %v4712
        %5647 = vmatprep.subr.bf16.mxu0 %v4717
        %5648 = vmatpush1.bf16.msra.mxu0 %v4716
        %5649 = vmatprep.subr.bf16.mxu0 %v4721
        %5650 = vmatpush1.bf16.msra.mxu0 %v4720
        %5651 = vmatprep.subr.bf16.mxu0 %v4725
        %5652 = vmatpush1.bf16.msra.mxu0 %v4724
        %5653 = vmatprep.subr.bf16.mxu0 %v4729
        %5654 = vmatpush1.bf16.msra.mxu0 %v4728
        %5655 = vmatprep.mubr.bf16.mxu0 %v2874
        %5656 = vmatmul.mubr.bf16.gmra.mrb[0].mxu0 %v2872
        %v5657 = vpop.f32.mrb[0].mxu0
        %v5658 = vadd.f32 %v5617, %v5657
        %v5659 = vpop.f32.mrb[0].mxu0
        %v5660 = vadd.f32 %v5619, %v5659
        %v5661 = vpop.f32.mrb[0].mxu0
        %v5662 = vpop.f32.mrb[0].mxu0
        %5663 = vdwg.mxu0
        %5664 = vmatprep.subr.bf16.mxu0 %v4733
        %5665 = vmatpush1.bf16.msra.mxu0 %v4732
        %5666 = vmatprep.subr.bf16.mxu0 %v4737
        %5667 = vmatpush1.bf16.msra.mxu0 %v4736
        %5668 = vmatprep.subr.bf16.mxu0 %v4741
        %5669 = vmatpush1.bf16.msra.mxu0 %v4740
        %5670 = vmatprep.subr.bf16.mxu0 %v4745
        %5671 = vmatpush1.bf16.msra.mxu0 %v4744
        %5672 = vmatprep.subr.bf16.mxu0 %v4749
        %5673 = vmatpush1.bf16.msra.mxu0 %v4748
        %5674 = vmatprep.subr.bf16.mxu0 %v4753
        %5675 = vmatpush1.bf16.msra.mxu0 %v4752
        %5676 = vmatprep.subr.bf16.mxu0 %v4757
        %5677 = vmatpush1.bf16.msra.mxu0 %v4756
        %5678 = vmatprep.subr.bf16.mxu0 %v4761
        %5679 = vmatpush1.bf16.msra.mxu0 %v4760
        %5680 = vmatprep.subr.bf16.mxu0 %v4765
        %5681 = vmatpush1.bf16.msra.mxu0 %v4764
        %5682 = vmatprep.subr.bf16.mxu0 %v4769
        %5683 = vmatpush1.bf16.msra.mxu0 %v4768
        %5684 = vmatprep.subr.bf16.mxu0 %v4773
        %5685 = vmatpush1.bf16.msra.mxu0 %v4772
        %5686 = vmatprep.subr.bf16.mxu0 %v4777
        %5687 = vmatpush1.bf16.msra.mxu0 %v4776
        %5688 = vmatprep.subr.bf16.mxu0 %v4781
        %5689 = vmatpush1.bf16.msra.mxu0 %v4780
        %5690 = vmatprep.subr.bf16.mxu0 %v4785
        %5691 = vmatpush1.bf16.msra.mxu0 %v4784
        %5692 = vmatprep.subr.bf16.mxu0 %v4789
        %5693 = vmatpush1.bf16.msra.mxu0 %v4788
        %5694 = vmatprep.subr.bf16.mxu0 %v4793
        %5695 = vmatpush1.bf16.msra.mxu0 %v4792
        %5696 = vmatprep.mubr.bf16.mxu0 %v2912
        %5697 = vmatmul.mubr.bf16.gmra.mrb[0].mxu0 %v2898
        %v5698 = vpop.f32.mrb[0].mxu0
        %v5699 = vadd.f32 %v5658, %v5698
        %v5700 = vpop.f32.mrb[0].mxu0
        %v5701 = vadd.f32 %v5660, %v5700
        %v5702 = vpop.f32.mrb[0].mxu0
        %v5703 = vpop.f32.mrb[0].mxu0
        %5704 = vdwg.mxu0
        %5705 = vmatprep.subr.bf16.mxu0 %v4797
        %5706 = vmatpush1.bf16.msra.mxu0 %v4796
        %5707 = vmatprep.subr.bf16.mxu0 %v4801
        %5708 = vmatpush1.bf16.msra.mxu0 %v4800
        %5709 = vmatprep.subr.bf16.mxu0 %v4805
        %5710 = vmatpush1.bf16.msra.mxu0 %v4804
        %5711 = vmatprep.subr.bf16.mxu0 %v4809
        %5712 = vmatpush1.bf16.msra.mxu0 %v4808
        %5713 = vmatprep.subr.bf16.mxu0 %v4813
        %5714 = vmatpush1.bf16.msra.mxu0 %v4812
        %5715 = vmatprep.subr.bf16.mxu0 %v4817
        %5716 = vmatpush1.bf16.msra.mxu0 %v4816
        %5717 = vmatprep.subr.bf16.mxu0 %v4821
        %5718 = vmatpush1.bf16.msra.mxu0 %v4820
        %5719 = vmatprep.subr.bf16.mxu0 %v4825
        %5720 = vmatpush1.bf16.msra.mxu0 %v4824
        %5721 = vmatprep.subr.bf16.mxu0 %v4829
        %5722 = vmatpush1.bf16.msra.mxu0 %v4828
        %5723 = vmatprep.subr.bf16.mxu0 %v4833
        %5724 = vmatpush1.bf16.msra.mxu0 %v4832
        %5725 = vmatprep.subr.bf16.mxu0 %v4837
        %5726 = vmatpush1.bf16.msra.mxu0 %v4836
        %5727 = vmatprep.subr.bf16.mxu0 %v4841
        %5728 = vmatpush1.bf16.msra.mxu0 %v4840
        %5729 = vmatprep.subr.bf16.mxu0 %v4845
        %5730 = vmatpush1.bf16.msra.mxu0 %v4844
        %5731 = vmatprep.subr.bf16.mxu0 %v4849
        %5732 = vmatpush1.bf16.msra.mxu0 %v4848
        %5733 = vmatprep.subr.bf16.mxu0 %v4853
        %5734 = vmatpush1.bf16.msra.mxu0 %v4852
        %5735 = vmatprep.subr.bf16.mxu0 %v4857
        %5736 = vmatpush1.bf16.msra.mxu0 %v4856
        %5737 = vmatprep.mubr.bf16.mxu0 %v2922
        %5738 = vmatmul.mubr.bf16.gmra.mrb[0].mxu0 %v2920
        %v5739 = vpop.f32.mrb[0].mxu0
        %v5740 = vadd.f32 %v5699, %v5739
        %v5741 = vpop.f32.mrb[0].mxu0
        %v5742 = vadd.f32 %v5701, %v5741
        %v5743 = vpop.f32.mrb[0].mxu0
        %v5744 = vpop.f32.mrb[0].mxu0
        %5745 = vdwg.mxu0
        %5746 = vmatprep.subr.bf16.mxu0 %v4861
        %5747 = vmatpush1.bf16.msra.mxu0 %v4860
        %5748 = vmatprep.subr.bf16.mxu0 %v4865
        %5749 = vmatpush1.bf16.msra.mxu0 %v4864
        %5750 = vmatprep.subr.bf16.mxu0 %v4869
        %5751 = vmatpush1.bf16.msra.mxu0 %v4868
        %5752 = vmatprep.subr.bf16.mxu0 %v4873
        %5753 = vmatpush1.bf16.msra.mxu0 %v4872
        %5754 = vmatprep.subr.bf16.mxu0 %v4877
        %5755 = vmatpush1.bf16.msra.mxu0 %v4876
        %5756 = vmatprep.subr.bf16.mxu0 %v4881
        %5757 = vmatpush1.bf16.msra.mxu0 %v4880
        %5758 = vmatprep.subr.bf16.mxu0 %v4885
        %5759 = vmatpush1.bf16.msra.mxu0 %v4884
        %5760 = vmatprep.subr.bf16.mxu0 %v4889
        %5761 = vmatpush1.bf16.msra.mxu0 %v4888
        %5762 = vmatprep.subr.bf16.mxu0 %v4893
        %5763 = vmatpush1.bf16.msra.mxu0 %v4892
        %5764 = vmatprep.subr.bf16.mxu0 %v4897
        %5765 = vmatpush1.bf16.msra.mxu0 %v4896
        %5766 = vmatprep.subr.bf16.mxu0 %v4901
        %5767 = vmatpush1.bf16.msra.mxu0 %v4900
        %5768 = vmatprep.subr.bf16.mxu0 %v4905
        %5769 = vmatpush1.bf16.msra.mxu0 %v4904
        %5770 = vmatprep.subr.bf16.mxu0 %v4909
        %5771 = vmatpush1.bf16.msra.mxu0 %v4908
        %5772 = vmatprep.subr.bf16.mxu0 %v4913
        %5773 = vmatpush1.bf16.msra.mxu0 %v4912
        %5774 = vmatprep.subr.bf16.mxu0 %v4917
        %5775 = vmatpush1.bf16.msra.mxu0 %v4916
        %5776 = vmatprep.subr.bf16.mxu0 %v4921
        %5777 = vmatpush1.bf16.msra.mxu0 %v4920
        %5778 = vmatprep.mubr.bf16.mxu0 %v2919
        %5779 = vmatmul.mubr.bf16.gmra.mrb[0].mxu0 %v2905
        %v5780 = vpop.f32.mrb[0].mxu0
        %v5781 = vadd.f32 %v5740, %v5780
        %v5782 = vpop.f32.mrb[0].mxu0
        %v5783 = vadd.f32 %v5742, %v5782
        %v5784 = vpop.f32.mrb[0].mxu0
        %v5785 = vpop.f32.mrb[0].mxu0
        %5786 = vdwg.mxu0
        %5787 = vmatprep.subr.bf16.mxu0 %v4925
        %5788 = vmatpush1.bf16.msra.mxu0 %v4924
        %5789 = vmatprep.subr.bf16.mxu0 %v4929
        %5790 = vmatpush1.bf16.msra.mxu0 %v4928
        %5791 = vmatprep.subr.bf16.mxu0 %v4933
        %5792 = vmatpush1.bf16.msra.mxu0 %v4932
        %5793 = vmatprep.subr.bf16.mxu0 %v4937
        %5794 = vmatpush1.bf16.msra.mxu0 %v4936
        %5795 = vmatprep.subr.bf16.mxu0 %v4941
        %5796 = vmatpush1.bf16.msra.mxu0 %v4940
        %5797 = vmatprep.subr.bf16.mxu0 %v4945
        %5798 = vmatpush1.bf16.msra.mxu0 %v4944
        %5799 = vmatprep.subr.bf16.mxu0 %v4949
        %5800 = vmatpush1.bf16.msra.mxu0 %v4948
        %5801 = vmatprep.subr.bf16.mxu0 %v4953
        %5802 = vmatpush1.bf16.msra.mxu0 %v4952
        %5803 = vmatprep.subr.bf16.mxu0 %v4957
        %5804 = vmatpush1.bf16.msra.mxu0 %v4956
        %5805 = vmatprep.subr.bf16.mxu0 %v4961
        %5806 = vmatpush1.bf16.msra.mxu0 %v4960
        %5807 = vmatprep.subr.bf16.mxu0 %v4965
        %5808 = vmatpush1.bf16.msra.mxu0 %v4964
        %5809 = vmatprep.subr.bf16.mxu0 %v4969
        %5810 = vmatpush1.bf16.msra.mxu0 %v4968
        %5811 = vmatprep.subr.bf16.mxu0 %v4973
        %5812 = vmatpush1.bf16.msra.mxu0 %v4972
        %5813 = vmatprep.subr.bf16.mxu0 %v4977
        %5814 = vmatpush1.bf16.msra.mxu0 %v4976
        %5815 = vmatprep.subr.bf16.mxu0 %v4981
        %5816 = vmatpush1.bf16.msra.mxu0 %v4980
        %5817 = vmatprep.subr.bf16.mxu0 %v4985
        %5818 = vmatpush1.bf16.msra.mxu0 %v4984
        %5819 = vmatprep.mubr.bf16.mxu0 %v2923
        %5820 = vmatmul.mubr.bf16.gmra.mrb[0].mxu0 %v2921
        %v5821 = vpop.f32.mrb[0].mxu0
        %v5822 = vadd.f32 %v5781, %v5821
        %v5823 = vpop.f32.mrb[0].mxu0
        %v5824 = vadd.f32 %v5783, %v5823
        %v5825 = vpop.f32.mrb[0].mxu0
        %v5826 = vpop.f32.mrb[0].mxu0
        %5827 = vdwg.mxu0
        %5828 = vmatprep.subr.bf16.mxu0 %v4479
        %5829 = vmatpush1.bf16.msra.mxu0 %v4478
        %5830 = vmatprep.subr.bf16.mxu0 %v4483
        %5831 = vmatpush1.bf16.msra.mxu0 %v4482
        %5832 = vmatprep.subr.bf16.mxu0 %v4487
        %5833 = vmatpush1.bf16.msra.mxu0 %v4486
        %5834 = vmatprep.subr.bf16.mxu0 %v4491
        %5835 = vmatpush1.bf16.msra.mxu0 %v4490
        %5836 = vmatprep.subr.bf16.mxu0 %v4495
        %5837 = vmatpush1.bf16.msra.mxu0 %v4494
        %5838 = vmatprep.subr.bf16.mxu0 %v4499
        %5839 = vmatpush1.bf16.msra.mxu0 %v4498
        %5840 = vmatprep.subr.bf16.mxu0 %v4503
        %5841 = vmatpush1.bf16.msra.mxu0 %v4502
        %5842 = vmatprep.subr.bf16.mxu0 %v4507
        %5843 = vmatpush1.bf16.msra.mxu0 %v4506
        %5844 = vmatprep.subr.bf16.mxu0 %v4511
        %5845 = vmatpush1.bf16.msra.mxu0 %v4510
        %5846 = vmatprep.subr.bf16.mxu0 %v4515
        %5847 = vmatpush1.bf16.msra.mxu0 %v4514
        %5848 = vmatprep.subr.bf16.mxu0 %v4519
        %5849 = vmatpush1.bf16.msra.mxu0 %v4518
        %5850 = vmatprep.subr.bf16.mxu0 %v4523
        %5851 = vmatpush1.bf16.msra.mxu0 %v4522
        %5852 = vmatprep.subr.bf16.mxu0 %v4527
        %5853 = vmatpush1.bf16.msra.mxu0 %v4526
        %5854 = vmatprep.subr.bf16.mxu0 %v4531
        %5855 = vmatpush1.bf16.msra.mxu0 %v4530
        %5856 = vmatprep.subr.bf16.mxu0 %v4535
        %5857 = vmatpush1.bf16.msra.mxu0 %v4534
        %5858 = vmatprep.subr.bf16.mxu0 %v4539
        %5859 = vmatpush1.bf16.msra.mxu0 %v4538
        %5860 = vmatprep.mubr.bf16.mxu0 %v2863
        %5861 = vmatmul.mubr.bf16.gmra.mrb[0].mxu0 %v2849
        %v5862 = vpop.f32.mrb[0].mxu0
        %v5863 = vadd.f32 %v2815, %v5862
        %v5864 = vpop.f32.mrb[0].mxu0
        %v5865 = vadd.f32 %v2819, %v5864
        %v5866 = vpop.f32.mrb[0].mxu0
        %v5867 = vpop.f32.mrb[0].mxu0
        %5868 = vdwg.mxu0
        %5869 = vmatprep.subr.bf16.mxu0 %v4543
        %5870 = vmatpush1.bf16.msra.mxu0 %v4542
        %5871 = vmatprep.subr.bf16.mxu0 %v4547
        %5872 = vmatpush1.bf16.msra.mxu0 %v4546
        %5873 = vmatprep.subr.bf16.mxu0 %v4551
        %5874 = vmatpush1.bf16.msra.mxu0 %v4550
        %5875 = vmatprep.subr.bf16.mxu0 %v4555
        %5876 = vmatpush1.bf16.msra.mxu0 %v4554
        %5877 = vmatprep.subr.bf16.mxu0 %v4559
        %5878 = vmatpush1.bf16.msra.mxu0 %v4558
        %5879 = vmatprep.subr.bf16.mxu0 %v4563
        %5880 = vmatpush1.bf16.msra.mxu0 %v4562
        %5881 = vmatprep.subr.bf16.mxu0 %v4567
        %5882 = vmatpush1.bf16.msra.mxu0 %v4566
        %5883 = vmatprep.subr.bf16.mxu0 %v4571
        %5884 = vmatpush1.bf16.msra.mxu0 %v4570
        %5885 = vmatprep.subr.bf16.mxu0 %v4575
        %5886 = vmatpush1.bf16.msra.mxu0 %v4574
        %5887 = vmatprep.subr.bf16.mxu0 %v4579
        %5888 = vmatpush1.bf16.msra.mxu0 %v4578
        %5889 = vmatprep.subr.bf16.mxu0 %v4583
        %5890 = vmatpush1.bf16.msra.mxu0 %v4582
        %5891 = vmatprep.subr.bf16.mxu0 %v4587
        %5892 = vmatpush1.bf16.msra.mxu0 %v4586
        %5893 = vmatprep.subr.bf16.mxu0 %v4591
        %5894 = vmatpush1.bf16.msra.mxu0 %v4590
        %5895 = vmatprep.subr.bf16.mxu0 %v4595
        %5896 = vmatpush1.bf16.msra.mxu0 %v4594
        %5897 = vmatprep.subr.bf16.mxu0 %v4599
        %5898 = vmatpush1.bf16.msra.mxu0 %v4598
        %5899 = vmatprep.subr.bf16.mxu0 %v4603
        %5900 = vmatpush1.bf16.msra.mxu0 %v4602
        %5901 = vmatprep.mubr.bf16.mxu0 %v2873
        %5902 = vmatmul.mubr.bf16.gmra.mrb[0].mxu0 %v2871
        %v5903 = vpop.f32.mrb[0].mxu0
        %v5904 = vadd.f32 %v5863, %v5903
        %v5905 = vpop.f32.mrb[0].mxu0
        %v5906 = vadd.f32 %v5865, %v5905
        %v5907 = vpop.f32.mrb[0].mxu0
        %v5908 = vpop.f32.mrb[0].mxu0
        %5909 = vdwg.mxu0
        %5910 = vmatprep.subr.bf16.mxu0 %v4607
        %5911 = vmatpush1.bf16.msra.mxu0 %v4606
        %5912 = vmatprep.subr.bf16.mxu0 %v4611
        %5913 = vmatpush1.bf16.msra.mxu0 %v4610
        %5914 = vmatprep.subr.bf16.mxu0 %v4615
        %5915 = vmatpush1.bf16.msra.mxu0 %v4614
        %5916 = vmatprep.subr.bf16.mxu0 %v4619
        %5917 = vmatpush1.bf16.msra.mxu0 %v4618
        %5918 = vmatprep.subr.bf16.mxu0 %v4623
        %5919 = vmatpush1.bf16.msra.mxu0 %v4622
        %5920 = vmatprep.subr.bf16.mxu0 %v4627
        %5921 = vmatpush1.bf16.msra.mxu0 %v4626
        %5922 = vmatprep.subr.bf16.mxu0 %v4631
        %5923 = vmatpush1.bf16.msra.mxu0 %v4630
        %5924 = vmatprep.subr.bf16.mxu0 %v4635
        %5925 = vmatpush1.bf16.msra.mxu0 %v4634
        %5926 = vmatprep.subr.bf16.mxu0 %v4639
        %5927 = vmatpush1.bf16.msra.mxu0 %v4638
        %5928 = vmatprep.subr.bf16.mxu0 %v4643
        %5929 = vmatpush1.bf16.msra.mxu0 %v4642
        %5930 = vmatprep.subr.bf16.mxu0 %v4647
        %5931 = vmatpush1.bf16.msra.mxu0 %v4646
        %5932 = vmatprep.subr.bf16.mxu0 %v4651
        %5933 = vmatpush1.bf16.msra.mxu0 %v4650
        %5934 = vmatprep.subr.bf16.mxu0 %v4655
        %5935 = vmatpush1.bf16.msra.mxu0 %v4654
        %5936 = vmatprep.subr.bf16.mxu0 %v4659
        %5937 = vmatpush1.bf16.msra.mxu0 %v4658
        %5938 = vmatprep.subr.bf16.mxu0 %v4663
        %5939 = vmatpush1.bf16.msra.mxu0 %v4662
        %5940 = vmatprep.subr.bf16.mxu0 %v4667
        %5941 = vmatpush1.bf16.msra.mxu0 %v4666
        %5942 = vmatprep.mubr.bf16.mxu0 %v2870
        %5943 = vmatmul.mubr.bf16.gmra.mrb[0].mxu0 %v2856
        %v5944 = vpop.f32.mrb[0].mxu0
        %v5945 = vadd.f32 %v5904, %v5944
        %v5946 = vpop.f32.mrb[0].mxu0
        %v5947 = vadd.f32 %v5906, %v5946
        %v5948 = vpop.f32.mrb[0].mxu0
        %v5949 = vpop.f32.mrb[0].mxu0
        %5950 = vdwg.mxu0
        %5951 = vmatprep.subr.bf16.mxu0 %v4671
        %5952 = vmatpush1.bf16.msra.mxu0 %v4670
        %5953 = vmatprep.subr.bf16.mxu0 %v4675
        %5954 = vmatpush1.bf16.msra.mxu0 %v4674
        %5955 = vmatprep.subr.bf16.mxu0 %v4679
        %5956 = vmatpush1.bf16.msra.mxu0 %v4678
        %5957 = vmatprep.subr.bf16.mxu0 %v4683
        %5958 = vmatpush1.bf16.msra.mxu0 %v4682
        %5959 = vmatprep.subr.bf16.mxu0 %v4687
        %5960 = vmatpush1.bf16.msra.mxu0 %v4686
        %5961 = vmatprep.subr.bf16.mxu0 %v4691
        %5962 = vmatpush1.bf16.msra.mxu0 %v4690
        %5963 = vmatprep.subr.bf16.mxu0 %v4695
        %5964 = vmatpush1.bf16.msra.mxu0 %v4694
        %5965 = vmatprep.subr.bf16.mxu0 %v4699
        %5966 = vmatpush1.bf16.msra.mxu0 %v4698
        %5967 = vmatprep.subr.bf16.mxu0 %v4703
        %5968 = vmatpush1.bf16.msra.mxu0 %v4702
        %5969 = vmatprep.subr.bf16.mxu0 %v4707
        %5970 = vmatpush1.bf16.msra.mxu0 %v4706
        %5971 = vmatprep.subr.bf16.mxu0 %v4711
        %5972 = vmatpush1.bf16.msra.mxu0 %v4710
        %5973 = vmatprep.subr.bf16.mxu0 %v4715
        %5974 = vmatpush1.bf16.msra.mxu0 %v4714
        %5975 = vmatprep.subr.bf16.mxu0 %v4719
        %5976 = vmatpush1.bf16.msra.mxu0 %v4718
        %5977 = vmatprep.subr.bf16.mxu0 %v4723
        %5978 = vmatpush1.bf16.msra.mxu0 %v4722
        %5979 = vmatprep.subr.bf16.mxu0 %v4727
        %5980 = vmatpush1.bf16.msra.mxu0 %v4726
        %5981 = vmatprep.subr.bf16.mxu0 %v4731
        %5982 = vmatpush1.bf16.msra.mxu0 %v4730
        %5983 = vmatprep.mubr.bf16.mxu0 %v2874
        %5984 = vmatmul.mubr.bf16.gmra.mrb[0].mxu0 %v2872
        %v5985 = vpop.f32.mrb[0].mxu0
        %v5986 = vadd.f32 %v5945, %v5985
        %v5987 = vpop.f32.mrb[0].mxu0
        %v5988 = vadd.f32 %v5947, %v5987
        %v5989 = vpop.f32.mrb[0].mxu0
        %v5990 = vpop.f32.mrb[0].mxu0
        %5991 = vdwg.mxu0
        %5992 = vmatprep.subr.bf16.mxu0 %v4735
        %5993 = vmatpush1.bf16.msra.mxu0 %v4734
        %5994 = vmatprep.subr.bf16.mxu0 %v4739
        %5995 = vmatpush1.bf16.msra.mxu0 %v4738
        %5996 = vmatprep.subr.bf16.mxu0 %v4743
        %5997 = vmatpush1.bf16.msra.mxu0 %v4742
        %5998 = vmatprep.subr.bf16.mxu0 %v4747
        %5999 = vmatpush1.bf16.msra.mxu0 %v4746
        %6000 = vmatprep.subr.bf16.mxu0 %v4751
        %6001 = vmatpush1.bf16.msra.mxu0 %v4750
        %6002 = vmatprep.subr.bf16.mxu0 %v4755
        %6003 = vmatpush1.bf16.msra.mxu0 %v4754
        %6004 = vmatprep.subr.bf16.mxu0 %v4759
        %6005 = vmatpush1.bf16.msra.mxu0 %v4758
        %6006 = vmatprep.subr.bf16.mxu0 %v4763
        %6007 = vmatpush1.bf16.msra.mxu0 %v4762
        %6008 = vmatprep.subr.bf16.mxu0 %v4767
        %6009 = vmatpush1.bf16.msra.mxu0 %v4766
        %6010 = vmatprep.subr.bf16.mxu0 %v4771
        %6011 = vmatpush1.bf16.msra.mxu0 %v4770
        %6012 = vmatprep.subr.bf16.mxu0 %v4775
        %6013 = vmatpush1.bf16.msra.mxu0 %v4774
        %6014 = vmatprep.subr.bf16.mxu0 %v4779
        %6015 = vmatpush1.bf16.msra.mxu0 %v4778
        %6016 = vmatprep.subr.bf16.mxu0 %v4783
        %6017 = vmatpush1.bf16.msra.mxu0 %v4782
        %6018 = vmatprep.subr.bf16.mxu0 %v4787
        %6019 = vmatpush1.bf16.msra.mxu0 %v4786
        %6020 = vmatprep.subr.bf16.mxu0 %v4791
        %6021 = vmatpush1.bf16.msra.mxu0 %v4790
        %6022 = vmatprep.subr.bf16.mxu0 %v4795
        %6023 = vmatpush1.bf16.msra.mxu0 %v4794
        %6024 = vmatprep.mubr.bf16.mxu0 %v2912
        %6025 = vmatmul.mubr.bf16.gmra.mrb[0].mxu0 %v2898
        %v6026 = vpop.f32.mrb[0].mxu0
        %v6027 = vadd.f32 %v5986, %v6026
        %v6028 = vpop.f32.mrb[0].mxu0
        %v6029 = vadd.f32 %v5988, %v6028
        %v6030 = vpop.f32.mrb[0].mxu0
        %v6031 = vpop.f32.mrb[0].mxu0
        %6032 = vdwg.mxu0
        %6033 = vmatprep.subr.bf16.mxu0 %v4799
        %6034 = vmatpush1.bf16.msra.mxu0 %v4798
        %6035 = vmatprep.subr.bf16.mxu0 %v4803
        %6036 = vmatpush1.bf16.msra.mxu0 %v4802
        %6037 = vmatprep.subr.bf16.mxu0 %v4807
        %6038 = vmatpush1.bf16.msra.mxu0 %v4806
        %6039 = vmatprep.subr.bf16.mxu0 %v4811
        %6040 = vmatpush1.bf16.msra.mxu0 %v4810
        %6041 = vmatprep.subr.bf16.mxu0 %v4815
        %6042 = vmatpush1.bf16.msra.mxu0 %v4814
        %6043 = vmatprep.subr.bf16.mxu0 %v4819
        %6044 = vmatpush1.bf16.msra.mxu0 %v4818
        %6045 = vmatprep.subr.bf16.mxu0 %v4823
        %6046 = vmatpush1.bf16.msra.mxu0 %v4822
        %6047 = vmatprep.subr.bf16.mxu0 %v4827
        %6048 = vmatpush1.bf16.msra.mxu0 %v4826
        %6049 = vmatprep.subr.bf16.mxu0 %v4831
        %6050 = vmatpush1.bf16.msra.mxu0 %v4830
        %6051 = vmatprep.subr.bf16.mxu0 %v4835
        %6052 = vmatpush1.bf16.msra.mxu0 %v4834
        %6053 = vmatprep.subr.bf16.mxu0 %v4839
        %6054 = vmatpush1.bf16.msra.mxu0 %v4838
        %6055 = vmatprep.subr.bf16.mxu0 %v4843
        %6056 = vmatpush1.bf16.msra.mxu0 %v4842
        %6057 = vmatprep.subr.bf16.mxu0 %v4847
        %6058 = vmatpush1.bf16.msra.mxu0 %v4846
        %6059 = vmatprep.subr.bf16.mxu0 %v4851
        %6060 = vmatpush1.bf16.msra.mxu0 %v4850
        %6061 = vmatprep.subr.bf16.mxu0 %v4855
        %6062 = vmatpush1.bf16.msra.mxu0 %v4854
        %6063 = vmatprep.subr.bf16.mxu0 %v4859
        %6064 = vmatpush1.bf16.msra.mxu0 %v4858
        %6065 = vmatprep.mubr.bf16.mxu0 %v2922
        %6066 = vmatmul.mubr.bf16.gmra.mrb[0].mxu0 %v2920
        %v6067 = vpop.f32.mrb[0].mxu0
        %v6068 = vadd.f32 %v6027, %v6067
        %v6069 = vpop.f32.mrb[0].mxu0
        %v6070 = vadd.f32 %v6029, %v6069
        %v6071 = vpop.f32.mrb[0].mxu0
        %v6072 = vpop.f32.mrb[0].mxu0
        %6073 = vdwg.mxu0
        %6074 = vmatprep.subr.bf16.mxu0 %v4863
        %6075 = vmatpush1.bf16.msra.mxu0 %v4862
        %6076 = vmatprep.subr.bf16.mxu0 %v4867
        %6077 = vmatpush1.bf16.msra.mxu0 %v4866
        %6078 = vmatprep.subr.bf16.mxu0 %v4871
        %6079 = vmatpush1.bf16.msra.mxu0 %v4870
        %6080 = vmatprep.subr.bf16.mxu0 %v4875
        %6081 = vmatpush1.bf16.msra.mxu0 %v4874
        %6082 = vmatprep.subr.bf16.mxu0 %v4879
        %6083 = vmatpush1.bf16.msra.mxu0 %v4878
        %6084 = vmatprep.subr.bf16.mxu0 %v4883
        %6085 = vmatpush1.bf16.msra.mxu0 %v4882
        %6086 = vmatprep.subr.bf16.mxu0 %v4887
        %6087 = vmatpush1.bf16.msra.mxu0 %v4886
        %6088 = vmatprep.subr.bf16.mxu0 %v4891
        %6089 = vmatpush1.bf16.msra.mxu0 %v4890
        %6090 = vmatprep.subr.bf16.mxu0 %v4895
        %6091 = vmatpush1.bf16.msra.mxu0 %v4894
        %6092 = vmatprep.subr.bf16.mxu0 %v4899
        %6093 = vmatpush1.bf16.msra.mxu0 %v4898
        %6094 = vmatprep.subr.bf16.mxu0 %v4903
        %6095 = vmatpush1.bf16.msra.mxu0 %v4902
        %6096 = vmatprep.subr.bf16.mxu0 %v4907
        %6097 = vmatpush1.bf16.msra.mxu0 %v4906
        %6098 = vmatprep.subr.bf16.mxu0 %v4911
        %6099 = vmatpush1.bf16.msra.mxu0 %v4910
        %6100 = vmatprep.subr.bf16.mxu0 %v4915
        %6101 = vmatpush1.bf16.msra.mxu0 %v4914
        %6102 = vmatprep.subr.bf16.mxu0 %v4919
        %6103 = vmatpush1.bf16.msra.mxu0 %v4918
        %6104 = vmatprep.subr.bf16.mxu0 %v4923
        %6105 = vmatpush1.bf16.msra.mxu0 %v4922
        %6106 = vmatprep.mubr.bf16.mxu0 %v2919
        %6107 = vmatmul.mubr.bf16.gmra.mrb[0].mxu0 %v2905
        %v6108 = vpop.f32.mrb[0].mxu0
        %v6109 = vadd.f32 %v6068, %v6108
        %v6110 = vpop.f32.mrb[0].mxu0
        %v6111 = vadd.f32 %v6070, %v6110
        %v6112 = vpop.f32.mrb[0].mxu0
        %v6113 = vpop.f32.mrb[0].mxu0
        %6114 = vdwg.mxu0
        %6115 = vmatprep.subr.bf16.mxu0 %v4927
        %6116 = vmatpush1.bf16.msra.mxu0 %v4926
        %6117 = vmatprep.subr.bf16.mxu0 %v4931
        %6118 = vmatpush1.bf16.msra.mxu0 %v4930
        %6119 = vmatprep.subr.bf16.mxu0 %v4935
        %6120 = vmatpush1.bf16.msra.mxu0 %v4934
        %6121 = vmatprep.subr.bf16.mxu0 %v4939
        %6122 = vmatpush1.bf16.msra.mxu0 %v4938
        %6123 = vmatprep.subr.bf16.mxu0 %v4943
        %6124 = vmatpush1.bf16.msra.mxu0 %v4942
        %6125 = vmatprep.subr.bf16.mxu0 %v4947
        %6126 = vmatpush1.bf16.msra.mxu0 %v4946
        %6127 = vmatprep.subr.bf16.mxu0 %v4951
        %6128 = vmatpush1.bf16.msra.mxu0 %v4950
        %6129 = vmatprep.subr.bf16.mxu0 %v4955
        %6130 = vmatpush1.bf16.msra.mxu0 %v4954
        %6131 = vmatprep.subr.bf16.mxu0 %v4959
        %6132 = vmatpush1.bf16.msra.mxu0 %v4958
        %6133 = vmatprep.subr.bf16.mxu0 %v4963
        %6134 = vmatpush1.bf16.msra.mxu0 %v4962
        %6135 = vmatprep.subr.bf16.mxu0 %v4967
        %6136 = vmatpush1.bf16.msra.mxu0 %v4966
        %6137 = vmatprep.subr.bf16.mxu0 %v4971
        %6138 = vmatpush1.bf16.msra.mxu0 %v4970
        %6139 = vmatprep.subr.bf16.mxu0 %v4975
        %6140 = vmatpush1.bf16.msra.mxu0 %v4974
        %6141 = vmatprep.subr.bf16.mxu0 %v4979
        %6142 = vmatpush1.bf16.msra.mxu0 %v4978
        %6143 = vmatprep.subr.bf16.mxu0 %v4983
        %6144 = vmatpush1.bf16.msra.mxu0 %v4982
        %6145 = vmatprep.subr.bf16.mxu0 %v4987
        %6146 = vmatpush1.bf16.msra.mxu0 %v4986
        %6147 = vmatprep.mubr.bf16.mxu0 %v2923
        %6148 = vmatmul.mubr.bf16.gmra.mrb[0].mxu0 %v2921
        %v6149 = vpop.f32.mrb[0].mxu0
        %v6150 = vadd.f32 %v6109, %v6149
        %v6151 = vpop.f32.mrb[0].mxu0
        %v6152 = vadd.f32 %v6111, %v6151
        %v6153 = vpop.f32.mrb[0].mxu0
        %v6154 = vpop.f32.mrb[0].mxu0
        %6155 = vdwg.mxu0
        %v6156 = vmax.f32 %v5822, 0.0
        %v6157 = vmax.f32 %v5824, 0.0
        %v6158 = vmax.f32 %v6150, 0.0
        %v6159 = vmax.f32 %v6152, 0.0
        %v6160 = vld [vmem:[#allocation15] sm:$0x3]
        %v6161 = vpack.c.bf16 %v6156, %v6156
        %v6162 = vpack.c.bf16 %v6157, %v6157
        %v6163 = vpack.c.bf16 %v6158, %v6158
        %v6164 = vpack.c.bf16 %v6159, %v6159
        %v6165 = vld [vmem:[%s399] sm:$0xf]
        %v6166 = vld [vmem:[%s399 + $0x4] sm:$0xf]
        %v6167 = vld [vmem:[%s399 + $0x8] sm:$0xf]
        %v6168 = vld [vmem:[%s399 + $0xc] sm:$0xf]
        %v6169 = vld [vmem:[%s399 + $0x10] sm:$0xf]
        %v6170 = vld [vmem:[%s399 + $0x14] sm:$0xf]
        %v6171 = vld [vmem:[%s399 + $0x18] sm:$0xf]
        %v6172 = vld [vmem:[%s399 + $0x1c] sm:$0xf]
        %v6173 = vld [vmem:[%s399 + $0x20] sm:$0xf]
        %v6174 = vld [vmem:[%s399 + $0x24] sm:$0xf]
        %v6175 = vld [vmem:[%s399 + $0x28] sm:$0xf]
        %v6176 = vld [vmem:[%s399 + $0x2c] sm:$0xf]
        %v6177 = vld [vmem:[%s399 + $0x30] sm:$0xf]
        %v6178 = vld [vmem:[%s399 + $0x34] sm:$0xf]
        %v6179 = vld [vmem:[%s399 + $0x38] sm:$0xf]
        %v6180 = vld [vmem:[%s399 + $0x3c] sm:$0xf]
        %v6181 = vld [vmem:[%s399 + $0x40] sm:$0xf]
        %v6182 = vld [vmem:[%s399 + $0x44] sm:$0xf]
        %v6183 = vld [vmem:[%s399 + $0x48] sm:$0xf]
        %v6184 = vld [vmem:[%s399 + $0x4c] sm:$0xf]
        %v6185 = vld [vmem:[%s399 + $0x50] sm:$0xf]
        %v6186 = vld [vmem:[%s399 + $0x54] sm:$0xf]
        %v6187 = vld [vmem:[%s399 + $0x58] sm:$0xf]
        %v6188 = vld [vmem:[%s399 + $0x5c] sm:$0xf]
        %v6189 = vld [vmem:[%s399 + $0x60] sm:$0xf]
        %v6190 = vld [vmem:[%s399 + $0x64] sm:$0xf]
        %v6191 = vld [vmem:[%s399 + $0x68] sm:$0xf]
        %v6192 = vld [vmem:[%s399 + $0x6c] sm:$0xf]
        %v6193 = vld [vmem:[%s399 + $0x70] sm:$0xf]
        %v6194 = vld [vmem:[%s399 + $0x74] sm:$0xf]
        %v6195 = vld [vmem:[%s399 + $0x78] sm:$0xf]
        %v6196 = vld [vmem:[%s399 + $0x7c] sm:$0xf]
        %v6197 = vld [vmem:[%s399 + $0x80] sm:$0xf]
        %v6198 = vld [vmem:[%s399 + $0x84] sm:$0xf]
        %v6199 = vld [vmem:[%s399 + $0x88] sm:$0xf]
        %v6200 = vld [vmem:[%s399 + $0x8c] sm:$0xf]
        %v6201 = vld [vmem:[%s399 + $0x90] sm:$0xf]
        %v6202 = vld [vmem:[%s399 + $0x94] sm:$0xf]
        %v6203 = vld [vmem:[%s399 + $0x98] sm:$0xf]
        %v6204 = vld [vmem:[%s399 + $0x9c] sm:$0xf]
        %v6205 = vld [vmem:[%s399 + $0xa0] sm:$0xf]
        %v6206 = vld [vmem:[%s399 + $0xa4] sm:$0xf]
        %v6207 = vld [vmem:[%s399 + $0xa8] sm:$0xf]
        %v6208 = vld [vmem:[%s399 + $0xac] sm:$0xf]
        %v6209 = vld [vmem:[%s399 + $0xb0] sm:$0xf]
        %v6210 = vld [vmem:[%s399 + $0xb4] sm:$0xf]
        %v6211 = vld [vmem:[%s399 + $0xb8] sm:$0xf]
        %v6212 = vld [vmem:[%s399 + $0xbc] sm:$0xf]
        %v6213 = vld [vmem:[%s399 + $0xc0] sm:$0xf]
        %v6214 = vld [vmem:[%s399 + $0xc4] sm:$0xf]
        %v6215 = vld [vmem:[%s399 + $0xc8] sm:$0xf]
        %v6216 = vld [vmem:[%s399 + $0xcc] sm:$0xf]
        %v6217 = vld [vmem:[%s399 + $0xd0] sm:$0xf]
        %v6218 = vld [vmem:[%s399 + $0xd4] sm:$0xf]
        %v6219 = vld [vmem:[%s399 + $0xd8] sm:$0xf]
        %v6220 = vld [vmem:[%s399 + $0xdc] sm:$0xf]
        %v6221 = vld [vmem:[%s399 + $0xe0] sm:$0xf]
        %v6222 = vld [vmem:[%s399 + $0xe4] sm:$0xf]
        %v6223 = vld [vmem:[%s399 + $0xe8] sm:$0xf]
        %v6224 = vld [vmem:[%s399 + $0xec] sm:$0xf]
        %v6225 = vld [vmem:[%s399 + $0xf0] sm:$0xf]
        %v6226 = vld [vmem:[%s399 + $0xf4] sm:$0xf]
        %v6227 = vld [vmem:[%s399 + $0xf8] sm:$0xf]
        %v6228 = vld [vmem:[%s399 + $0xfc] sm:$0xf]
        %v6293 = vunpack.c.l.b16 %v6165
        %v6294 = vunpack.c.l.b16 %v6166
        %v6295 = vunpack.c.l.b16 %v6167
        %v6296 = vunpack.c.l.b16 %v6168
        %v6297 = vunpack.c.l.b16 %v6169
        %v6298 = vunpack.c.l.b16 %v6170
        %v6299 = vunpack.c.l.b16 %v6171
        %v6300 = vunpack.c.l.b16 %v6172
        %v6301 = vunpack.c.l.b16 %v6173
        %v6302 = vunpack.c.l.b16 %v6174
        %v6303 = vunpack.c.l.b16 %v6175
        %v6304 = vunpack.c.l.b16 %v6176
        %v6305 = vunpack.c.l.b16 %v6177
        %v6306 = vunpack.c.l.b16 %v6178
        %v6307 = vunpack.c.l.b16 %v6179
        %v6308 = vunpack.c.l.b16 %v6180
        %v6309 = vunpack.c.l.b16 %v6181
        %v6310 = vunpack.c.l.b16 %v6182
        %v6311 = vunpack.c.l.b16 %v6183
        %v6312 = vunpack.c.l.b16 %v6184
        %v6313 = vunpack.c.l.b16 %v6185
        %v6314 = vunpack.c.l.b16 %v6186
        %v6315 = vunpack.c.l.b16 %v6187
        %v6316 = vunpack.c.l.b16 %v6188
        %v6317 = vunpack.c.l.b16 %v6189
        %v6318 = vunpack.c.l.b16 %v6190
        %v6319 = vunpack.c.l.b16 %v6191
        %v6320 = vunpack.c.l.b16 %v6192
        %v6321 = vunpack.c.l.b16 %v6193
        %v6322 = vunpack.c.l.b16 %v6194
        %v6323 = vunpack.c.l.b16 %v6195
        %v6324 = vunpack.c.l.b16 %v6196
        %v6325 = vunpack.c.l.b16 %v6197
        %v6326 = vunpack.c.l.b16 %v6198
        %v6327 = vunpack.c.l.b16 %v6199
        %v6328 = vunpack.c.l.b16 %v6200
        %v6329 = vunpack.c.l.b16 %v6201
        %v6330 = vunpack.c.l.b16 %v6202
        %v6331 = vunpack.c.l.b16 %v6203
        %v6332 = vunpack.c.l.b16 %v6204
        %v6333 = vunpack.c.l.b16 %v6205
        %v6334 = vunpack.c.l.b16 %v6206
        %v6335 = vunpack.c.l.b16 %v6207
        %v6336 = vunpack.c.l.b16 %v6208
        %v6337 = vunpack.c.l.b16 %v6209
        %v6338 = vunpack.c.l.b16 %v6210
        %v6339 = vunpack.c.l.b16 %v6211
        %v6340 = vunpack.c.l.b16 %v6212
        %v6341 = vunpack.c.l.b16 %v6213
        %v6342 = vunpack.c.l.b16 %v6214
        %v6343 = vunpack.c.l.b16 %v6215
        %v6344 = vunpack.c.l.b16 %v6216
        %v6345 = vunpack.c.l.b16 %v6217
        %v6346 = vunpack.c.l.b16 %v6218
        %v6347 = vunpack.c.l.b16 %v6219
        %v6348 = vunpack.c.l.b16 %v6220
        %v6349 = vunpack.c.l.b16 %v6221
        %v6350 = vunpack.c.l.b16 %v6222
        %v6351 = vunpack.c.l.b16 %v6223
        %v6352 = vunpack.c.l.b16 %v6224
        %v6353 = vunpack.c.l.b16 %v6225
        %v6354 = vunpack.c.l.b16 %v6226
        %v6355 = vunpack.c.l.b16 %v6227
        %v6356 = vunpack.c.l.b16 %v6228
        %v6357 = vpack.c.b16 %v6294, %v6293
        %v6358 = vpack.c.b16 %v6296, %v6295
        %v6359 = vpack.c.b16 %v6298, %v6297
        %v6360 = vpack.c.b16 %v6300, %v6299
        %v6361 = vpack.c.b16 %v6302, %v6301
        %v6362 = vpack.c.b16 %v6304, %v6303
        %v6363 = vpack.c.b16 %v6306, %v6305
        %v6364 = vpack.c.b16 %v6308, %v6307
        %v6365 = vpack.c.b16 %v6310, %v6309
        %v6366 = vpack.c.b16 %v6312, %v6311
        %v6367 = vpack.c.b16 %v6314, %v6313
        %v6368 = vpack.c.b16 %v6316, %v6315
        %v6369 = vpack.c.b16 %v6318, %v6317
        %v6370 = vpack.c.b16 %v6320, %v6319
        %v6371 = vpack.c.b16 %v6322, %v6321
        %v6372 = vpack.c.b16 %v6324, %v6323
        %v6373 = vpack.c.b16 %v6326, %v6325
        %v6374 = vpack.c.b16 %v6328, %v6327
        %v6375 = vpack.c.b16 %v6330, %v6329
        %v6376 = vpack.c.b16 %v6332, %v6331
        %v6377 = vpack.c.b16 %v6334, %v6333
        %v6378 = vpack.c.b16 %v6336, %v6335
        %v6379 = vpack.c.b16 %v6338, %v6337
        %v6380 = vpack.c.b16 %v6340, %v6339
        %v6381 = vpack.c.b16 %v6342, %v6341
        %v6382 = vpack.c.b16 %v6344, %v6343
        %v6383 = vpack.c.b16 %v6346, %v6345
        %v6384 = vpack.c.b16 %v6348, %v6347
        %v6385 = vpack.c.b16 %v6350, %v6349
        %v6386 = vpack.c.b16 %v6352, %v6351
        %v6387 = vpack.c.b16 %v6354, %v6353
        %v6388 = vpack.c.b16 %v6356, %v6355
        %6421 = vmatprep.subr.bf16.mxu0 0
        %6422 = vmatpush1.bf16.msra.mxu0 %v6357
        %6423 = vmatprep.subr.bf16.mxu0 0
        %6424 = vmatpush1.bf16.msra.mxu0 %v6358
        %6425 = vmatprep.subr.bf16.mxu0 0
        %6426 = vmatpush1.bf16.msra.mxu0 %v6359
        %6427 = vmatprep.subr.bf16.mxu0 0
        %6428 = vmatpush1.bf16.msra.mxu0 %v6360
        %6429 = vmatprep.subr.bf16.mxu0 0
        %6430 = vmatpush1.bf16.msra.mxu0 %v6361
        %6431 = vmatprep.subr.bf16.mxu0 0
        %6432 = vmatpush1.bf16.msra.mxu0 %v6362
        %6433 = vmatprep.subr.bf16.mxu0 0
        %6434 = vmatpush1.bf16.msra.mxu0 %v6363
        %6435 = vmatprep.subr.bf16.mxu0 0
        %6436 = vmatpush1.bf16.msra.mxu0 %v6364
        %6437 = vmatprep.subr.bf16.mxu0 0
        %6438 = vmatpush1.bf16.msra.mxu0 %v6365
        %6439 = vmatprep.subr.bf16.mxu0 0
        %6440 = vmatpush1.bf16.msra.mxu0 %v6366
        %6441 = vmatprep.subr.bf16.mxu0 0
        %6442 = vmatpush1.bf16.msra.mxu0 %v6367
        %6443 = vmatprep.subr.bf16.mxu0 0
        %6444 = vmatpush1.bf16.msra.mxu0 %v6368
        %6445 = vmatprep.subr.bf16.mxu0 0
        %6446 = vmatpush1.bf16.msra.mxu0 %v6369
        %6447 = vmatprep.subr.bf16.mxu0 0
        %6448 = vmatpush1.bf16.msra.mxu0 %v6370
        %6449 = vmatprep.subr.bf16.mxu0 0
        %6450 = vmatpush1.bf16.msra.mxu0 %v6371
        %6451 = vmatprep.subr.bf16.mxu0 0
        %6452 = vmatpush1.bf16.msra.mxu0 %v6372
        %6453 = vmatprep.mubr.bf16.mxu0 %v6162
        %6454 = vmatmul.mubr.bf16.gmra.mrb[0].mxu0 %v6161
        %v6455 = vpop.f32.mrb[0].mxu0
        %v6456 = vadd.f32 0.0, %v6455
        %v6457 = vpop.f32.mrb[0].mxu0
        %v6458 = vpop.f32.mrb[0].mxu0
        %v6459 = vpop.f32.mrb[0].mxu0
        %6460 = vdwg.mxu0
        %6461 = vmatprep.subr.bf16.mxu0 0
        %6462 = vmatpush1.bf16.msra.mxu0 %v6373
        %6463 = vmatprep.subr.bf16.mxu0 0
        %6464 = vmatpush1.bf16.msra.mxu0 %v6374
        %6465 = vmatprep.subr.bf16.mxu0 0
        %6466 = vmatpush1.bf16.msra.mxu0 %v6375
        %6467 = vmatprep.subr.bf16.mxu0 0
        %6468 = vmatpush1.bf16.msra.mxu0 %v6376
        %6469 = vmatprep.subr.bf16.mxu0 0
        %6470 = vmatpush1.bf16.msra.mxu0 %v6377
        %6471 = vmatprep.subr.bf16.mxu0 0
        %6472 = vmatpush1.bf16.msra.mxu0 %v6378
        %6473 = vmatprep.subr.bf16.mxu0 0
        %6474 = vmatpush1.bf16.msra.mxu0 %v6379
        %6475 = vmatprep.subr.bf16.mxu0 0
        %6476 = vmatpush1.bf16.msra.mxu0 %v6380
        %6477 = vmatprep.subr.bf16.mxu0 0
        %6478 = vmatpush1.bf16.msra.mxu0 %v6381
        %6479 = vmatprep.subr.bf16.mxu0 0
        %6480 = vmatpush1.bf16.msra.mxu0 %v6382
        %6481 = vmatprep.subr.bf16.mxu0 0
        %6482 = vmatpush1.bf16.msra.mxu0 %v6383
        %6483 = vmatprep.subr.bf16.mxu0 0
        %6484 = vmatpush1.bf16.msra.mxu0 %v6384
        %6485 = vmatprep.subr.bf16.mxu0 0
        %6486 = vmatpush1.bf16.msra.mxu0 %v6385
        %6487 = vmatprep.subr.bf16.mxu0 0
        %6488 = vmatpush1.bf16.msra.mxu0 %v6386
        %6489 = vmatprep.subr.bf16.mxu0 0
        %6490 = vmatpush1.bf16.msra.mxu0 %v6387
        %6491 = vmatprep.subr.bf16.mxu0 0
        %6492 = vmatpush1.bf16.msra.mxu0 %v6388
        %6493 = vmatprep.mubr.bf16.mxu0 %v6164
        %6494 = vmatmul.mubr.bf16.gmra.mrb[0].mxu0 %v6163
        %v6495 = vpop.f32.mrb[0].mxu0
        %v6496 = vadd.f32 %v6456, %v6495
        %v6497 = vpop.f32.mrb[0].mxu0
        %v6498 = vpop.f32.mrb[0].mxu0
        %v6499 = vpop.f32.mrb[0].mxu0
        %6500 = vdwg.mxu0
        %v6501 = vadd.f32 %v6160, %v6496
        %6502 = vst [vmem:[#allocation15] sm:$0x3] %v6501
        %p6503 = scmp.eq.s32.totalorder %s32, 1
        // Predicated region
        $region81: #{tpu_custom_call.1} parent=47 // pred_check
          %p6504 = pneg %p6503
        $region82: #{tpu_custom_call.1} parent=47 // pred_check_branch
          %6506 = sbr.rel (%p6504) target = $region84
        $region83: #{tpu_custom_call.1} parent=47 // pred_region
          %v6507 = vld [vmem:[#allocation15] sm:$0x3]
          %v6508 = vld [vmem:[#allocation14] sm:$0x1]
          %v6510 = vlaneseq
          %v6511 = vshrl.u32 %v6510, 7
          %v6512 = vsub.s32 0, %v6511
          %v6513 = vrot.slane %v6508, %v6512
          %v6515 = vadd.f32 %v6507, %v6513
          %6516 = vst [vmem:[#allocation15] sm:$0x3] %v6515
        $region84: #{tpu_custom_call.1} parent=47 // pred_fallthru
          _
        // Predicated region
        $region85: #{tpu_custom_call.1} parent=47 // pred_check
          %p6517 = pneg %p226
        $region86: #{tpu_custom_call.1} parent=47 // pred_check_branch
          %6519 = sbr.rel (%p6517) target = $region88
        $region87: #{tpu_custom_call.1} parent=47 // pred_region
          %s6521 = ssub.s32 32, 32
          %6522 = vsyncadd [#allocation5], %s6521
          %s6523 = smul.addr %s31, 32
          %s6524 = scalar_lea.hbm %s7, %s6523
          %s6526 = sshll.u32 [#allocation15], 4
          %s6527 = int_to_ptr.vmem [resolvable:$true] %s6526
          %6529 = dma.vmem_to_hbm [thread:$0]  %s6527, 32, %s6524, [#allocation5]
        $region88: #{tpu_custom_call.1} parent=47 // pred_fallthru
          _
        // Predicated region
        $region89: #{tpu_custom_call.1} parent=47 // pred_check
          %p6530 = pneg %p226
        $region90: #{tpu_custom_call.1} parent=47 // pred_check_branch
          %6532 = sbr.rel (%p6530) target = $region92
        $region91: #{tpu_custom_call.1} parent=47 // pred_region
          %6533 = dma.done [#allocation5], 32
        $region92: #{tpu_custom_call.1} parent=47 // pred_fallthru
          _
      $region48: #{tpu_custom_call.1} parent=5 // pred_fallthru
        _
      %p6534 = scmp.le.s32.totalorder 2, %s22
      // Predicated region
      $region93: #{tpu_custom_call.1} parent=5 // pred_check
        %p6535 = pneg %p6534
      $region94: #{tpu_custom_call.1} parent=5 // pred_check_branch
        %6537 = sbr.rel (%p6535) target = $region96
      $region95: #{tpu_custom_call.1} parent=5 // pred_region
        %s6538 = ssub.s32 %s22, 2
      $region96: #{tpu_custom_call.1} parent=5 // pred_fallthru
        _
    $region6: #{tpu_custom_call.1} parent=1 // loop_footer
      %s26 = sadd.s32 1, %s22
    $region7: #{tpu_custom_call.1} parent=1 // loop_footer_branch
      %21 = sbr.rel target = $region3
    $region8: #{tpu_custom_call.1} parent=1 // loop_exit
      _
    %6539 = vsyncpa [#allocation4], 1
    %s6540 = scalar_lea.sflag [#allocation4], 1
    %6541 = vsyncpa %s6540, 1
    %6542 = vsyncpa [#allocation7], 1
    %6543 = vsyncpa [#allocation10], 1
    %s6544 = scalar_lea.sflag [#allocation10], 1
    %6545 = vsyncpa %s6544, 1
    %6546 = vsyncpa [#allocation13], 1
    %s6547 = scalar_lea.sflag [#allocation13], 1
    %6548 = vsyncpa %s6547, 1
    %6549 = vsyncpa [#allocation5], 1
    %s6550 = scalar_lea.sflag [#allocation5], 1
    %6551 = vsyncpa %s6550, 1

</llo_original>
